<compile_context>
chip_gen: v7x
topology: tpu7x:2x2x1
jax: 0.10.0
libtpu: 0.0.40
codegen_flags: <defaults>
</compile_context>

<pallas_src>
import math

import jax
import jax.numpy as jnp
from jax.experimental import pallas as pl
from jax.experimental.pallas import tpu as pltpu


# ----------------------------- Pallas kernel ---------------------------------

def _make_window_attn_kernel(num_heads, window, matmul_dtype=None):
    """One grid step == TW windows presented as a (TW*W, C) row slab:
    packed QKV proj -> single (H*TW)-batched softmax attention -> out proj ->
    residual -> LayerNorm (eps=1e-5, nn.LayerNorm semantics)."""
    H, W = num_heads, window

    def kernel(x_ref, w_in_ref, w_out_ref, p_ref, o_ref):
        R, C = x_ref.shape              # R = TW * W rows, C = model dim
        TW = R // W
        Dh = C // H

        x2 = x_ref[...]                                   # (R, C) f32
        in_b = p_ref[0:1, :]                              # (1, 3C)
        out_b = p_ref[1:2, :C]                            # (1, C)
        gamma = p_ref[2:3, :C]                            # (1, C)
        beta = p_ref[3:4, :C]                             # (1, C)

        def mm(a):
            return a if matmul_dtype is None else a.astype(matmul_dtype)

        # Packed QKV projection as one MXU matmul; 1/sqrt(Dh) and the Q-bias
        # scaling were folded into w_in/in_b in the wrapper.
        qkv = jnp.dot(mm(x2), mm(w_in_ref[...]),
                      preferred_element_type=jnp.float32) + in_b     # (R, 3C)
        qkv3 = qkv.reshape(TW, W, 3 * C)   # leading-dim split: layout-free

        # Per-head slices stacked along the LEADING batch axis -> (H*TW, W, Dh)
        # (leading-axis concat moves no lanes; avoids per-head einsum loop).
        q = jnp.concatenate(
            [qkv3[:, :, h * Dh:(h + 1) * Dh] for h in range(H)], axis=0)
        k = jnp.concatenate(
            [qkv3[:, :, C + h * Dh:C + (h + 1) * Dh] for h in range(H)], axis=0)
        v = jnp.concatenate(
            [qkv3[:, :, 2 * C + h * Dh:2 * C + (h + 1) * Dh] for h in range(H)],
            axis=0)

        # One batched scores/softmax/PV over all heads x windows.
        s = jnp.einsum("bqd,bkd->bqk", mm(q), mm(k),
                       preferred_element_type=jnp.float32)            # (H*TW, W, W)
        s = s - jnp.max(s, axis=-1, keepdims=True)
        p = jnp.exp(s)
        p = p * pl.reciprocal(jnp.sum(p, axis=-1, keepdims=True), approx=True)
        ctx = jnp.einsum("bqk,bkd->bqd", mm(p), mm(v),
                         preferred_element_type=jnp.float32)          # (H*TW, W, Dh)

        # Re-merge heads along channels (single minor concat) and do ONE
        # K=C out-projection matmul (cheaper on the MXU push slot than 4
        # per-head K=Dh matmuls).
        ctx = jnp.concatenate([ctx[h * TW:(h + 1) * TW] for h in range(H)],
                              axis=-1)                                # (TW, W, C)
        ctx = ctx.reshape(R, C)
        attn = jnp.dot(mm(ctx), mm(w_out_ref[...]),
                       preferred_element_type=jnp.float32) + out_b

        # Residual + LayerNorm over C (eps=1e-5, biased variance), all f32.
        y = attn + x2
        mean = jnp.mean(y, axis=-1, keepdims=True)
        var = jnp.mean((y - mean) ** 2, axis=-1, keepdims=True)
        yn = (y - mean) * jax.lax.rsqrt(var + 1e-5)
        o_ref[...] = (yn * gamma + beta).astype(o_ref.dtype)

    return kernel


# --------------------------- parameter preparation ----------------------------

def _prepare_params(params, num_heads):
    """One-time wrapper-side weight prep: transpose to (K, N), fold the softmax
    scale into the Q columns / Q bias, merge the 4 small vectors into one slab."""
    in_w = params["in_w"]                         # (3C, C)
    out_w = params["out_w"]                       # (C, C)
    C = out_w.shape[0]
    Dh = C // num_heads
    scale = 1.0 / math.sqrt(Dh)

    scale_vec = jnp.concatenate(
        [jnp.full((C,), scale, dtype=in_w.dtype),
         jnp.ones((2 * C,), dtype=in_w.dtype)])
    w_in_t = jnp.transpose(in_w * scale_vec[:, None])      # (C, 3C), Q cols scaled
    in_b = params["in_b"].reshape(3 * C) * scale_vec
    w_out_t = jnp.transpose(out_w)                          # (C, C)

    def row(vec):
        vec = vec.reshape(-1).astype(jnp.float32)
        return jnp.pad(vec, (0, 3 * C - vec.shape[0]))

    # (4, 3C): [in_b ; out_b pad ; gamma pad ; beta pad] -> one input spec.
    p_slab = jnp.stack([in_b.astype(jnp.float32), row(params["out_b"]),
                        row(params["gamma"]), row(params["beta"])], axis=0)
    return w_in_t, w_out_t, p_slab


# ------------------------------ pallas_call wrapper ---------------------------

def _window_attention_pallas(x_rows, w_in_t, w_out_t, p_slab, num_heads, window,
                             *, block_windows=256, matmul_dtype=None):
    rows, C = x_rows.shape
    NW = rows // window

    # Right-size TW so the last block is not mostly zero padding.  (On v7x,
    # lower block_windows if needed so num_blocks >= 2 feeds both TensorCores.)
    num_blocks = max(1, -(-NW // block_windows))
    TW = -(-NW // num_blocks)
    NW_pad = num_blocks * TW
    if NW_pad != NW:
        x_rows = jnp.pad(x_rows, ((0, (NW_pad - NW) * window), (0, 0)))
    R_blk = TW * window

    kernel = _make_window_attn_kernel(num_heads, window, matmul_dtype)
    out = pl.pallas_call(
        kernel,
        out_shape=jax.ShapeDtypeStruct((NW_pad * window, C), x_rows.dtype),
        grid_spec=pltpu.PrefetchScalarGridSpec(
            num_scalar_prefetch=0,
            grid=(num_blocks,),
            in_specs=[
                pl.BlockSpec((R_blk, C), lambda i: (i, 0)),     # x row slab
                pl.BlockSpec((C, 3 * C), lambda i: (0, 0)),     # in_proj^T (scaled)
                pl.BlockSpec((C, C), lambda i: (0, 0)),         # out_proj^T
                pl.BlockSpec((4, 3 * C), lambda i: (0, 0)),     # merged biases/LN
            ],
            out_specs=pl.BlockSpec((R_blk, C), lambda i: (i, 0)),
        ),
        compiler_params=pltpu.CompilerParams(
            dimension_semantics=("parallel",),
            vmem_limit_bytes=32 * 1024 * 1024),
    )(x_rows, w_in_t, w_out_t, p_slab)

    return out[:rows] if NW_pad != NW else out


# ------------------------------ module wrapper --------------------------------

def swin_attention_1d(x, params, *, window_size=8, num_heads=4, shift_size=0,
                      block_windows=256, matmul_dtype=None):
    """x: [B, N, C] (float32). Mirrors SwinAttention1D.forward."""
    B, N, C = x.shape
    pad_len = (window_size - N % window_size) % window_size
    if pad_len > 0:
        x = jnp.pad(x, ((0, 0), (0, pad_len), (0, 0)))
    n_pad = x.shape[1]
    shifted = jnp.roll(x, -shift_size, axis=1) if shift_size > 0 else x
    x_rows = shifted.reshape(B * n_pad, C)         # contiguous (NW*W, C) slab

    w_in_t, w_out_t, p_slab = _prepare_params(params, num_heads)
    y_rows = _window_attention_pallas(x_rows, w_in_t, w_out_t, p_slab,
                                      num_heads, window_size,
                                      block_windows=block_windows,
                                      matmul_dtype=matmul_dtype)
    y = y_rows.reshape(B, n_pad, C)
    if shift_size > 0:
        y = jnp.roll(y, shift_size, axis=1)
    if pad_len > 0:
        y = y[:, :N, :]
    # TODO(synk): like the PyTorch module, no shifted-window attention mask is
    # applied when shift_size > 0 (cross-boundary tokens attend freely).
    return y


# --------------------------- pure-JAX reference -------------------------------

def _reference(x, params, *, window_size=8, num_heads=4, shift_size=0):
    B, N, C = x.shape
    pad_len = (window_size - N % window_size) % window_size
    if pad_len > 0:
        x = jnp.pad(x, ((0, 0), (0, pad_len), (0, 0)))
    n_pad = x.shape[1]
    shifted = jnp.roll(x, -shift_size, axis=1) if shift_size > 0 else x
    xw = shifted.reshape(-1, window_size, C)

    H, Dh = num_heads, C // num_heads
    qkv = jnp.einsum("bwc,oc->bwo", xw, params["in_w"]) + params["in_b"][0]
    q, k, v = qkv[..., :C], qkv[..., C:2 * C], qkv[..., 2 * C:]
    q = q.reshape(-1, window_size, H, Dh)
    k = k.reshape(-1, window_size, H, Dh)
    v = v.reshape(-1, window_size, H, Dh)
    s = jnp.einsum("bqhd,bkhd->bhqk", q, k) / math.sqrt(Dh)
    p = jax.nn.softmax(s, axis=-1)
    ctx = jnp.einsum("bhqk,bkhd->bqhd", p, v).reshape(-1, window_size, C)
    attn_out = jnp.einsum("bwc,oc->bwo", ctx, params["out_w"]) + params["out_b"][0]

    y = attn_out + xw
    mean = jnp.mean(y, axis=-1, keepdims=True)
    var = jnp.mean((y - mean) ** 2, axis=-1, keepdims=True)
    y = (y - mean) / jnp.sqrt(var + 1e-5) * params["gamma"][0] + params["beta"][0]

    y = y.reshape(B, n_pad, C)
    if shift_size > 0:
        y = jnp.roll(y, shift_size, axis=1)
    if pad_len > 0:
        y = y[:, :N, :]
    return y


# ----------------------------------- main --------------------------------------

if __name__ == "__main__":
    B, N, C = 2, 16, 32
    window_size, num_heads, shift_size = 8, 4, 0

    key = jax.random.PRNGKey(0)
    kx, k1, k2, k3, k4 = jax.random.split(key, 5)

    x = jax.random.normal(kx, (B, N, C), dtype=jnp.float32)

    # Deterministic synthetic parameters (shapes follow nn.MultiheadAttention /
    # nn.LayerNorm for dim=C, num_heads=4).
    params = {
        "in_w": jax.random.normal(k1, (3 * C, C), dtype=jnp.float32) * 0.1,
        "in_b": jax.random.normal(k2, (1, 3 * C), dtype=jnp.float32) * 0.05,
        "out_w": jax.random.normal(k3, (C, C), dtype=jnp.float32) * 0.1,
        "out_b": jax.random.normal(k4, (1, C), dtype=jnp.float32) * 0.05,
        "gamma": jnp.ones((1, C), dtype=jnp.float32),
        "beta": jnp.zeros((1, C), dtype=jnp.float32),
    }

    out = swin_attention_1d(x, params, window_size=window_size,
                            num_heads=num_heads, shift_size=shift_size)
    out = jax.block_until_ready(out)

    ref = _reference(x, params, window_size=window_size,
                     num_heads=num_heads, shift_size=shift_size)
    assert out.shape == (B, N, C)
    # approx=True softmax reciprocal -> tolerance relaxed vs exact-f32 reference
    # (set approx=False in the kernel to recover ~1e-4 agreement).
    assert jnp.allclose(out, ref, atol=5e-3, rtol=5e-3), "mismatch vs reference"

    print("KERNEL_OK")
</pallas_src>

<mosaic_0001>
module attributes {stable_mosaic.version = 11 : i64} {
  func.func @kernel(%arg0: i32, %arg1: memref<32x32xf32, #tpu.memory_space<vmem>>, %arg2: memref<32x96xf32, #tpu.memory_space<vmem>>, %arg3: memref<32x32xf32, #tpu.memory_space<vmem>>, %arg4: memref<4x96xf32, #tpu.memory_space<vmem>>, %arg5: memref<32x32xf32, #tpu.memory_space<vmem>>) attributes {dimension_semantics = [#tpu.dimension_semantics<parallel>], iteration_bounds = array<i64: 1>, scalar_prefetch = 0 : i64, scratch_operands = 0 : i64, tpu.core_type = #tpu.core_type<tc>, window_params = [{transform_indices = @transform_0, window_bounds = array<i64: 32, 32>}, {pipeline_mode = #tpu.pipeline_mode<synchronous>, transform_indices = @transform_1, window_bounds = array<i64: 32, 96>}, {pipeline_mode = #tpu.pipeline_mode<synchronous>, transform_indices = @transform_2, window_bounds = array<i64: 32, 32>}, {pipeline_mode = #tpu.pipeline_mode<synchronous>, transform_indices = @transform_3, window_bounds = array<i64: 4, 96>}, {transform_indices = @transform_4, window_bounds = array<i64: 32, 32>}]} {
    %c0 = arith.constant 0 : index
    %c0_0 = arith.constant 0 : index
    %0 = vector.load %arg1[%c0, %c0_0] : memref<32x32xf32, #tpu.memory_space<vmem>>, vector<32x32xf32>
    %c0_1 = arith.constant 0 : index
    %c0_2 = arith.constant 0 : index
    %1 = vector.load %arg4[%c0_1, %c0_2] : memref<4x96xf32, #tpu.memory_space<vmem>>, vector<1x96xf32>
    %c1 = arith.constant 1 : index
    %c0_3 = arith.constant 0 : index
    %2 = vector.load %arg4[%c1, %c0_3] : memref<4x96xf32, #tpu.memory_space<vmem>>, vector<1x32xf32>
    %c2 = arith.constant 2 : index
    %c0_4 = arith.constant 0 : index
    %3 = vector.load %arg4[%c2, %c0_4] : memref<4x96xf32, #tpu.memory_space<vmem>>, vector<1x32xf32>
    %c3 = arith.constant 3 : index
    %c0_5 = arith.constant 0 : index
    %4 = vector.load %arg4[%c3, %c0_5] : memref<4x96xf32, #tpu.memory_space<vmem>>, vector<1x32xf32>
    %c0_6 = arith.constant 0 : index
    %c0_7 = arith.constant 0 : index
    %5 = vector.load %arg2[%c0_6, %c0_7] : memref<32x96xf32, #tpu.memory_space<vmem>>, vector<32x96xf32>
    %cst = arith.constant dense<0.000000e+00> : vector<32x96xf32>
    %6 = tpu.matmul %0, %5, %cst {dimension_numbers = #tpu.dot_dimension_numbers<[1], [0], [0], [1], [0, 0, 1, 1], [], []>} : vector<32x32xf32>, vector<32x96xf32>, vector<32x96xf32> -> vector<32x96xf32>
    %7 = vector.broadcast %1 : vector<1x96xf32> to vector<32x96xf32>
    %8 = arith.addf %6, %7 : vector<32x96xf32>
    %9 = vector.shape_cast %8 : vector<32x96xf32> to vector<4x8x96xf32>
    %10 = vector.extract_strided_slice %9 {offsets = [0, 0, 0], sizes = [4, 8, 8], strides = [1, 1, 1]} : vector<4x8x96xf32> to vector<4x8x8xf32>
    %11 = vector.extract_strided_slice %9 {offsets = [0, 0, 8], sizes = [4, 8, 8], strides = [1, 1, 1]} : vector<4x8x96xf32> to vector<4x8x8xf32>
    %12 = vector.extract_strided_slice %9 {offsets = [0, 0, 16], sizes = [4, 8, 8], strides = [1, 1, 1]} : vector<4x8x96xf32> to vector<4x8x8xf32>
    %13 = vector.extract_strided_slice %9 {offsets = [0, 0, 24], sizes = [4, 8, 8], strides = [1, 1, 1]} : vector<4x8x96xf32> to vector<4x8x8xf32>
    %14 = tpu.concatenate %10, %11, %12, %13 in 0 : vector<4x8x8xf32>, vector<4x8x8xf32>, vector<4x8x8xf32>, vector<4x8x8xf32> -> vector<16x8x8xf32>
    %15 = vector.extract_strided_slice %9 {offsets = [0, 0, 32], sizes = [4, 8, 8], strides = [1, 1, 1]} : vector<4x8x96xf32> to vector<4x8x8xf32>
    %16 = vector.extract_strided_slice %9 {offsets = [0, 0, 40], sizes = [4, 8, 8], strides = [1, 1, 1]} : vector<4x8x96xf32> to vector<4x8x8xf32>
    %17 = vector.extract_strided_slice %9 {offsets = [0, 0, 48], sizes = [4, 8, 8], strides = [1, 1, 1]} : vector<4x8x96xf32> to vector<4x8x8xf32>
    %18 = vector.extract_strided_slice %9 {offsets = [0, 0, 56], sizes = [4, 8, 8], strides = [1, 1, 1]} : vector<4x8x96xf32> to vector<4x8x8xf32>
    %19 = tpu.concatenate %15, %16, %17, %18 in 0 : vector<4x8x8xf32>, vector<4x8x8xf32>, vector<4x8x8xf32>, vector<4x8x8xf32> -> vector<16x8x8xf32>
    %20 = vector.extract_strided_slice %9 {offsets = [0, 0, 64], sizes = [4, 8, 8], strides = [1, 1, 1]} : vector<4x8x96xf32> to vector<4x8x8xf32>
    %21 = vector.extract_strided_slice %9 {offsets = [0, 0, 72], sizes = [4, 8, 8], strides = [1, 1, 1]} : vector<4x8x96xf32> to vector<4x8x8xf32>
    %22 = vector.extract_strided_slice %9 {offsets = [0, 0, 80], sizes = [4, 8, 8], strides = [1, 1, 1]} : vector<4x8x96xf32> to vector<4x8x8xf32>
    %23 = vector.extract_strided_slice %9 {offsets = [0, 0, 88], sizes = [4, 8, 8], strides = [1, 1, 1]} : vector<4x8x96xf32> to vector<4x8x8xf32>
    %24 = tpu.concatenate %20, %21, %22, %23 in 0 : vector<4x8x8xf32>, vector<4x8x8xf32>, vector<4x8x8xf32>, vector<4x8x8xf32> -> vector<16x8x8xf32>
    "tpu.trace_start"() <{level = 10 : i32, message = "bqd,bkd->bqk"}> : () -> ()
    %cst_8 = arith.constant dense<0.000000e+00> : vector<16x8x8xf32>
    %25 = tpu.matmul %14, %19, %cst_8 {dimension_numbers = #tpu.dot_dimension_numbers<[2], [2], [1], [1], [0, 0, 0, 1, 1, 1], [0], [0]>} : vector<16x8x8xf32>, vector<16x8x8xf32>, vector<16x8x8xf32> -> vector<16x8x8xf32>
    "tpu.trace_stop"() : () -> ()
    %cst_9 = arith.constant dense<0xFF800000> : vector<16x8xf32>
    %26 = vector.multi_reduction <maximumf>, %25, %cst_9 [2] : vector<16x8x8xf32> to vector<16x8xf32>
    %27 = vector.shape_cast %26 : vector<16x8xf32> to vector<16x8x1xf32>
    %28 = vector.broadcast %27 : vector<16x8x1xf32> to vector<16x8x8xf32>
    %29 = arith.subf %25, %28 : vector<16x8x8xf32>
    %30 = math.exp %29 : vector<16x8x8xf32>
    %cst_10 = arith.constant dense<0.000000e+00> : vector<16x8xf32>
    %31 = vector.multi_reduction <add>, %30, %cst_10 [2] : vector<16x8x8xf32> to vector<16x8xf32>
    %32 = vector.shape_cast %31 : vector<16x8xf32> to vector<16x8x1xf32>
    %33 = tpu.reciprocal %32 {approx = true} : vector<16x8x1xf32> -> vector<16x8x1xf32>
    %34 = vector.broadcast %33 : vector<16x8x1xf32> to vector<16x8x8xf32>
    %35 = arith.mulf %30, %34 : vector<16x8x8xf32>
    "tpu.trace_start"() <{level = 10 : i32, message = "bqk,bkd->bqd"}> : () -> ()
    %cst_11 = arith.constant dense<0.000000e+00> : vector<16x8x8xf32>
    %36 = tpu.matmul %35, %24, %cst_11 {dimension_numbers = #tpu.dot_dimension_numbers<[2], [1], [1], [2], [0, 0, 0, 1, 1, 2], [0], [0]>} : vector<16x8x8xf32>, vector<16x8x8xf32>, vector<16x8x8xf32> -> vector<16x8x8xf32>
    "tpu.trace_stop"() : () -> ()
    %37 = vector.extract_strided_slice %36 {offsets = [0, 0, 0], sizes = [4, 8, 8], strides = [1, 1, 1]} : vector<16x8x8xf32> to vector<4x8x8xf32>
    %38 = vector.extract_strided_slice %36 {offsets = [4, 0, 0], sizes = [4, 8, 8], strides = [1, 1, 1]} : vector<16x8x8xf32> to vector<4x8x8xf32>
    %39 = vector.extract_strided_slice %36 {offsets = [8, 0, 0], sizes = [4, 8, 8], strides = [1, 1, 1]} : vector<16x8x8xf32> to vector<4x8x8xf32>
    %40 = vector.extract_strided_slice %36 {offsets = [12, 0, 0], sizes = [4, 8, 8], strides = [1, 1, 1]} : vector<16x8x8xf32> to vector<4x8x8xf32>
    %41 = tpu.concatenate %37, %38, %39, %40 in 2 : vector<4x8x8xf32>, vector<4x8x8xf32>, vector<4x8x8xf32>, vector<4x8x8xf32> -> vector<4x8x32xf32>
    %42 = vector.shape_cast %41 : vector<4x8x32xf32> to vector<32x32xf32>
    %c0_12 = arith.constant 0 : index
    %c0_13 = arith.constant 0 : index
    %43 = vector.load %arg3[%c0_12, %c0_13] : memref<32x32xf32, #tpu.memory_space<vmem>>, vector<32x32xf32>
    %cst_14 = arith.constant dense<0.000000e+00> : vector<32x32xf32>
    %44 = tpu.matmul %42, %43, %cst_14 {dimension_numbers = #tpu.dot_dimension_numbers<[1], [0], [0], [1], [0, 0, 1, 1], [], []>} : vector<32x32xf32>, vector<32x32xf32>, vector<32x32xf32> -> vector<32x32xf32>
    %45 = vector.broadcast %2 : vector<1x32xf32> to vector<32x32xf32>
    %46 = arith.addf %44, %45 : vector<32x32xf32>
    %47 = arith.addf %46, %0 : vector<32x32xf32>
    %cst_15 = arith.constant dense<0.000000e+00> : vector<32xf32>
    %48 = vector.multi_reduction <add>, %47, %cst_15 [1] : vector<32x32xf32> to vector<32xf32>
    %49 = vector.shape_cast %48 : vector<32xf32> to vector<32x1xf32>
    %cst_16 = arith.constant 3.200000e+01 : f32
    %50 = vector.broadcast %cst_16 : f32 to vector<32x1xf32>
    %51 = arith.divf %49, %50 : vector<32x1xf32>
    %52 = vector.broadcast %51 : vector<32x1xf32> to vector<32x32xf32>
    %53 = arith.subf %47, %52 : vector<32x32xf32>
    %54 = arith.mulf %53, %53 : vector<32x32xf32>
    %cst_17 = arith.constant dense<0.000000e+00> : vector<32xf32>
    %55 = vector.multi_reduction <add>, %54, %cst_17 [1] : vector<32x32xf32> to vector<32xf32>
    %56 = vector.shape_cast %55 : vector<32xf32> to vector<32x1xf32>
    %cst_18 = arith.constant 3.200000e+01 : f32
    %57 = vector.broadcast %cst_18 : f32 to vector<32x1xf32>
    %58 = arith.divf %56, %57 : vector<32x1xf32>
    %59 = vector.broadcast %51 : vector<32x1xf32> to vector<32x32xf32>
    %60 = arith.subf %47, %59 : vector<32x32xf32>
    %cst_19 = arith.constant 9.99999974E-6 : f32
    %61 = vector.broadcast %cst_19 : f32 to vector<32x1xf32>
    %62 = arith.addf %58, %61 : vector<32x1xf32>
    %63 = math.rsqrt %62 : vector<32x1xf32>
    %64 = vector.broadcast %63 : vector<32x1xf32> to vector<32x32xf32>
    %65 = arith.mulf %60, %64 : vector<32x32xf32>
    %66 = vector.broadcast %3 : vector<1x32xf32> to vector<32x32xf32>
    %67 = arith.mulf %65, %66 : vector<32x32xf32>
    %68 = vector.broadcast %4 : vector<1x32xf32> to vector<32x32xf32>
    %69 = arith.addf %67, %68 : vector<32x32xf32>
    %c0_20 = arith.constant 0 : index
    %c0_21 = arith.constant 0 : index
    %70 = vector.load %arg5[%c0_20, %c0_21] : memref<32x32xf32, #tpu.memory_space<vmem>>, vector<32x32xf32>
    tpu.vector_store %arg5[%c0_20, %c0_21], %69 {strides = array<i32>} : memref<32x32xf32, #tpu.memory_space<vmem>>, vector<32x32xf32>,
    return
  }
  func.func @transform_0(%arg0: i32) -> (i32, i32) {
    %c0_i32 = arith.constant 0 : i32
    %c0_i32_0 = arith.constant 0 : i32
    return %arg0, %c0_i32 : i32, i32
  }
  func.func @transform_1(%arg0: i32) -> (i32, i32) {
    %c0_i32 = arith.constant 0 : i32
    %c0_i32_0 = arith.constant 0 : i32
    %c0_i32_1 = arith.constant 0 : i32
    return %c0_i32, %c0_i32_0 : i32, i32
  }
  func.func @transform_2(%arg0: i32) -> (i32, i32) {
    %c0_i32 = arith.constant 0 : i32
    %c0_i32_0 = arith.constant 0 : i32
    %c0_i32_1 = arith.constant 0 : i32
    return %c0_i32, %c0_i32_0 : i32, i32
  }
  func.func @transform_3(%arg0: i32) -> (i32, i32) {
    %c0_i32 = arith.constant 0 : i32
    %c0_i32_0 = arith.constant 0 : i32
    %c0_i32_1 = arith.constant 0 : i32
    return %c0_i32, %c0_i32_0 : i32, i32
  }
  func.func @transform_4(%arg0: i32) -> (i32, i32) {
    %c0_i32 = arith.constant 0 : i32
    %c0_i32_0 = arith.constant 0 : i32
    return %arg0, %c0_i32 : i32, i32
  }
}

</mosaic_0001>

<llo_original>
// kernel: tpu_custom_call.1
$region0: #{tpu_custom_call.1}
  #allocation0 [shape = 'u32[]', space=smem, size = 0x4, offset = 0x4, fixed_abs, tag = 'smem constant byte address 0x4 - core index']
  #allocation1 [shape = 'u32[144,128]{1,0:T(1,128)}', space=vmem, size = 0x12000, scoped, tag = 'internal scratch']
  %s0 = inlined_call_operand.hbm [shape: f32[32,32], index: 0, kind: input, shape index: {}]
  %s1 = inlined_call_operand.hbm [shape: f32[32,96], index: 1, kind: input, shape index: {}]
  %s2 = inlined_call_operand.hbm [shape: f32[32,32], index: 2, kind: input, shape index: {}]
  %s3 = inlined_call_operand.vmem [shape: f32[4,96], index: 3, kind: input, shape index: {}]
  %s4 = inlined_call_operand.hbm [shape: f32[32,32], index: 4, kind: output, shape index: {}]
  %s5 = sld [smem:[#allocation0]]
  $region38: #{tpu_custom_call.1} parent=0
    _
  %s7 = ssub.s32 1, %s5
  %s8 = scalar_select 0, %s7, %s5
  $region1: #{tpu_custom_call.1} parent=0
    #allocation2 [shape = 'u8[16384]{0}', space=vmem, size = 0x4000, scoped, tag = 'input window, operand 0, single buffered']
    #allocation3 [shape = 's32[1]{0}', space=sflag, size = 0x4, scoped, tag = 'scoped memory for tpu_custom_call.1']
    #allocation4 [shape = 's32[1]{0}', space=sflag, size = 0x4, scoped, tag = 'scoped memory for tpu_custom_call.1']
    #allocation5 [shape = 'u8[16384]{0}', space=vmem, size = 0x4000, scoped, tag = 'input window, operand 1, single buffered']
    #allocation6 [shape = 's32[1]{0}', space=sflag, size = 0x4, scoped, tag = 'scoped memory for tpu_custom_call.1']
    #allocation7 [shape = 'u8[16384]{0}', space=vmem, size = 0x4000, scoped, tag = 'input window, operand 2, single buffered']
    #allocation8 [shape = 'u8[16384]{0}', space=vmem, size = 0x4000, scoped, tag = 'output window, operand 0, single buffered']
    %9 = vsyncpa [#allocation3], 0
    %10 = vsyncpa [#allocation6], 0
    %11 = vsyncpa [#allocation4], 0
    // Predicated region
    $region2: #{tpu_custom_call.1} parent=1 // pred_check
      _
    $region3: #{tpu_custom_call.1} parent=1 // pred_check_branch
      %13 = sbr.rel (0) target = $region5
    $region4: #{tpu_custom_call.1} parent=1 // pred_region
      %s15 = ssub.s32 512, 512
      %16 = vsyncadd [#allocation3], %s15
      %s17 = sshll.u32 [#allocation2], 4
      %s18 = int_to_ptr.vmem [resolvable:$true] %s17
      %23 = dma.hbm_to_vmem [thread:$0]  %s0, 512, %s18, [#allocation3], 128, 128, 8
    $region5: #{tpu_custom_call.1} parent=1 // pred_fallthru
      _
    // Predicated region
    $region6: #{tpu_custom_call.1} parent=1 // pred_check
      _
    $region7: #{tpu_custom_call.1} parent=1 // pred_check_branch
      %25 = sbr.rel (0) target = $region9
    $region8: #{tpu_custom_call.1} parent=1 // pred_region
      %s27 = ssub.s32 512, 512
      %28 = vsyncadd [#allocation6], %s27
      %s29 = sshll.u32 [#allocation5], 4
      %s30 = int_to_ptr.vmem [resolvable:$true] %s29
      %35 = dma.hbm_to_vmem [thread:$0]  %s1, 512, %s30, [#allocation6], 128, 128, 8
    $region9: #{tpu_custom_call.1} parent=1 // pred_fallthru
      _
    // Predicated region
    $region10: #{tpu_custom_call.1} parent=1 // pred_check
      _
    $region11: #{tpu_custom_call.1} parent=1 // pred_check_branch
      %37 = sbr.rel (0) target = $region13
    $region12: #{tpu_custom_call.1} parent=1 // pred_region
      %s39 = ssub.s32 512, 512
      %40 = vsyncadd [#allocation6], %s39
      %s41 = sshll.u32 [#allocation7], 4
      %s42 = int_to_ptr.vmem [resolvable:$true] %s41
      %47 = dma.hbm_to_vmem [thread:$0]  %s2, 512, %s42, [#allocation6], 128, 128, 8
    $region13: #{tpu_custom_call.1} parent=1 // pred_fallthru
      _
    // Predicated region
    $region14: #{tpu_custom_call.1} parent=1 // pred_check
      _
    $region15: #{tpu_custom_call.1} parent=1 // pred_check_branch
      %49 = sbr.rel (0) target = $region17
    $region16: #{tpu_custom_call.1} parent=1 // pred_region
      _
    $region17: #{tpu_custom_call.1} parent=1 // pred_fallthru
      _
    // Predicated region
    $region18: #{tpu_custom_call.1} parent=1 // pred_check
      _
    $region19: #{tpu_custom_call.1} parent=1 // pred_check_branch
      %51 = sbr.rel (0) target = $region21
    $region20: #{tpu_custom_call.1} parent=1 // pred_region
      %52 = dma.done [#allocation3], 512
    $region21: #{tpu_custom_call.1} parent=1 // pred_fallthru
      _
    // Predicated region
    $region22: #{tpu_custom_call.1} parent=1 // pred_check
      _
    $region23: #{tpu_custom_call.1} parent=1 // pred_check_branch
      %54 = sbr.rel (0) target = $region25
    $region24: #{tpu_custom_call.1} parent=1 // pred_region
      %55 = dma.done [#allocation6], 512
    $region25: #{tpu_custom_call.1} parent=1 // pred_fallthru
      _
    // Predicated region
    $region26: #{tpu_custom_call.1} parent=1 // pred_check
      _
    $region27: #{tpu_custom_call.1} parent=1 // pred_check_branch
      %57 = sbr.rel (0) target = $region29
    $region28: #{tpu_custom_call.1} parent=1 // pred_region
      %58 = dma.done [#allocation6], 512
    $region29: #{tpu_custom_call.1} parent=1 // pred_fallthru
      _
    %v59 = vld [vmem:[#allocation2] sm:$0xff]
    %v60 = vld [vmem:[#allocation2 + $0x8] sm:$0xff]
    %v61 = vld [vmem:[#allocation2 + $0x10] sm:$0xff]
    %v62 = vld [vmem:[#allocation2 + $0x18] sm:$0xff]
    %v63 = vld [vmem:[%s3] sm:$0x1]
    %v64 = vld [vmem:[%s3 + $0x1] sm:$0x1]
    %v65 = vld [vmem:[%s3 + $0x2] sm:$0x1]
    %v66 = vld [vmem:[%s3 + $0x3] sm:$0x1]
    %v67 = vld [vmem:[#allocation5] sm:$0xff]
    %v68 = vld [vmem:[#allocation5 + $0x8] sm:$0xff]
    %v69 = vld [vmem:[#allocation5 + $0x10] sm:$0xff]
    %v70 = vld [vmem:[#allocation5 + $0x18] sm:$0xff]
    %v71 = vlaneseq
    %v72 = vshrl.u32 %v71, 7
    %v73 = vsub.s32 0, %v72
    %v74 = vrot.slane %v63, %v73
    %vm75 = vcmask 261120
    %v77 = vsel %vm75, %v59, 0
    %v80 = vsel %vm75, %v60, 0
    %v83 = vsel %vm75, %v61, 0
    %v86 = vsel %vm75, %v62, 0
    %88 = vmatprep.subr.mxu0 0.0
    %89 = vmatpush1.msra.mxu0 %v67
    %90 = vmatprep.subr.mxu0 0.0
    %91 = vmatpush1.msra.mxu0 %v68
    %92 = vmatprep.subr.mxu0 0.0
    %93 = vmatpush1.msra.mxu0 %v69
    %94 = vmatprep.subr.mxu0 0.0
    %95 = vmatpush1.msra.mxu0 %v70
    %96 = vmatprep.subr.mxu0 0.0
    %97 = vmatpush1.msra.mxu0 0.0
    %98 = vmatprep.subr.mxu0 0.0
    %99 = vmatpush1.msra.mxu0 0.0
    %100 = vmatprep.subr.mxu0 0.0
    %101 = vmatpush1.msra.mxu0 0.0
    %102 = vmatprep.subr.mxu0 0.0
    %103 = vmatpush1.msra.mxu0 0.0
    %104 = vmatprep.subr.mxu0 0.0
    %105 = vmatpush1.msra.mxu0 0.0
    %106 = vmatprep.subr.mxu0 0.0
    %107 = vmatpush1.msra.mxu0 0.0
    %108 = vmatprep.subr.mxu0 0.0
    %109 = vmatpush1.msra.mxu0 0.0
    %110 = vmatprep.subr.mxu0 0.0
    %111 = vmatpush1.msra.mxu0 0.0
    %112 = vmatprep.subr.mxu0 0.0
    %113 = vmatpush1.msra.mxu0 0.0
    %114 = vmatprep.subr.mxu0 0.0
    %115 = vmatpush1.msra.mxu0 0.0
    %116 = vmatprep.subr.mxu0 0.0
    %117 = vmatpush1.msra.mxu0 0.0
    %118 = vmatprep.subr.mxu0 0.0
    %119 = vmatpush1.msra.mxu0 0.0
    %120 = vmatprep.subr.mxu0 0.0
    %121 = vmatpush1.msra.mxu0 0.0
    %122 = vmatprep.subr.mxu0 0.0
    %123 = vmatpush1.msra.mxu0 0.0
    %124 = vmatprep.subr.mxu0 0.0
    %125 = vmatpush1.msra.mxu0 0.0
    %126 = vmatprep.subr.mxu0 0.0
    %127 = vmatpush1.msra.mxu0 0.0
    %128 = vmatprep.subr.mxu0 0.0
    %129 = vmatpush1.msra.mxu0 0.0
    %130 = vmatprep.subr.mxu0 0.0
    %131 = vmatpush1.msra.mxu0 0.0
    %132 = vmatprep.subr.mxu0 0.0
    %133 = vmatpush1.msra.mxu0 0.0
    %134 = vmatprep.subr.mxu0 0.0
    %135 = vmatpush1.msra.mxu0 0.0
    %136 = vmatprep.subr.mxu0 0.0
    %137 = vmatpush1.msra.mxu0 0.0
    %138 = vmatprep.subr.mxu0 0.0
    %139 = vmatpush1.msra.mxu0 0.0
    %140 = vmatprep.subr.mxu0 0.0
    %141 = vmatpush1.msra.mxu0 0.0
    %142 = vmatprep.subr.mxu0 0.0
    %143 = vmatpush1.msra.mxu0 0.0
    %144 = vmatprep.subr.mxu0 0.0
    %145 = vmatpush1.msra.mxu0 0.0
    %146 = vmatprep.subr.mxu0 0.0
    %147 = vmatpush1.msra.mxu0 0.0
    %148 = vmatprep.subr.mxu0 0.0
    %149 = vmatpush1.msra.mxu0 0.0
    %150 = vmatprep.subr.mxu0 0.0
    %151 = vmatpush1.msra.mxu0 0.0
    %152 = vmatprep.mubr.f32.mxu0 0.0
    %153 = vmatmul.mubr.f32.gmra.mrb[0].mxu0 %v77
    %v154 = vpop.f32.mrb[0].mxu0
    %v155 = vadd.f32 %v74, %v154
    %v156 = vpop.f32.mrb[0].mxu0
    %157 = vmatprep.mubr.f32.mxu0 0.0
    %158 = vmatmul.mubr.f32.gmra.mrb[0].mxu0 %v80
    %v159 = vpop.f32.mrb[0].mxu0
    %v160 = vadd.f32 %v74, %v159
    %v161 = vpop.f32.mrb[0].mxu0
    %162 = vmatprep.mubr.f32.mxu0 0.0
    %163 = vmatmul.mubr.f32.gmra.mrb[0].mxu0 %v83
    %v164 = vpop.f32.mrb[0].mxu0
    %v165 = vadd.f32 %v74, %v164
    %v166 = vpop.f32.mrb[0].mxu0
    %167 = vmatprep.mubr.f32.mxu0 0.0
    %168 = vmatmul.mubr.f32.gmra.mrb[0].mxu0 %v86
    %v169 = vpop.f32.mrb[0].mxu0
    %v170 = vadd.f32 %v74, %v169
    %v171 = vpop.f32.mrb[0].mxu0
    %172 = vdwg.mxu0
    %177 = vrot.lane.b32.xlu0 %v155, 120
    %v178 = vpop.permute.xlu0 %177
    %179 = vrot.lane.b32.xlu0 %v160, 120
    %v180 = vpop.permute.xlu0 %179
    %181 = vrot.lane.b32.xlu0 %v165, 120
    %v182 = vpop.permute.xlu0 %181
    %183 = vrot.lane.b32.xlu0 %v170, 120
    %v184 = vpop.permute.xlu0 %183
    %185 = vrot.lane.b32.xlu0 %v155, 112
    %v186 = vpop.permute.xlu0 %185
    %187 = vrot.lane.b32.xlu0 %v160, 112
    %v188 = vpop.permute.xlu0 %187
    %189 = vrot.lane.b32.xlu0 %v165, 112
    %v190 = vpop.permute.xlu0 %189
    %191 = vrot.lane.b32.xlu0 %v170, 112
    %v192 = vpop.permute.xlu0 %191
    %193 = vrot.lane.b32.xlu0 %v155, 104
    %v194 = vpop.permute.xlu0 %193
    %195 = vrot.lane.b32.xlu0 %v160, 104
    %v196 = vpop.permute.xlu0 %195
    %197 = vrot.lane.b32.xlu0 %v165, 104
    %v198 = vpop.permute.xlu0 %197
    %199 = vrot.lane.b32.xlu0 %v170, 104
    %v200 = vpop.permute.xlu0 %199
    %201 = vrot.lane.b32.xlu0 %v155, 96
    %v202 = vpop.permute.xlu0 %201
    %vm203 = vcmask 64512
    %v204 = vsel %vm203, %v155, 0
    %v206 = vsel %vm203, %v202, 0
    %208 = vmatprep.subr.mxu0 0.0
    %209 = vmatpush1.xpose.msra.mxu0 %v206
    %210 = vmatprep.subr.mxu0 0.0
    %211 = vmatpush1.xpose.msra.mxu0 0.0
    %212 = vmatprep.subr.mxu0 0.0
    %213 = vmatpush1.xpose.msra.mxu0 0.0
    %214 = vmatprep.subr.mxu0 0.0
    %215 = vmatpush1.xpose.msra.mxu0 0.0
    %216 = vmatprep.subr.mxu0 0.0
    %217 = vmatpush1.xpose.msra.mxu0 0.0
    %218 = vmatprep.subr.mxu0 0.0
    %219 = vmatpush1.xpose.msra.mxu0 0.0
    %220 = vmatprep.subr.mxu0 0.0
    %221 = vmatpush1.xpose.msra.mxu0 0.0
    %222 = vmatprep.subr.mxu0 0.0
    %223 = vmatpush1.xpose.msra.mxu0 0.0
    %224 = vmatprep.subr.mxu0 0.0
    %225 = vmatpush1.xpose.msra.mxu0 0.0
    %226 = vmatprep.subr.mxu0 0.0
    %227 = vmatpush1.xpose.msra.mxu0 0.0
    %228 = vmatprep.subr.mxu0 0.0
    %229 = vmatpush1.xpose.msra.mxu0 0.0
    %230 = vmatprep.subr.mxu0 0.0
    %231 = vmatpush1.xpose.msra.mxu0 0.0
    %232 = vmatprep.subr.mxu0 0.0
    %233 = vmatpush1.xpose.msra.mxu0 0.0
    %234 = vmatprep.subr.mxu0 0.0
    %235 = vmatpush1.xpose.msra.mxu0 0.0
    %236 = vmatprep.subr.mxu0 0.0
    %237 = vmatpush1.xpose.msra.mxu0 0.0
    %238 = vmatprep.subr.mxu0 0.0
    %239 = vmatpush1.xpose.msra.mxu0 0.0
    %240 = vmatprep.subr.mxu0 0.0
    %241 = vmatpush1.xpose.msra.mxu0 0.0
    %242 = vmatprep.subr.mxu0 0.0
    %243 = vmatpush1.xpose.msra.mxu0 0.0
    %244 = vmatprep.subr.mxu0 0.0
    %245 = vmatpush1.xpose.msra.mxu0 0.0
    %246 = vmatprep.subr.mxu0 0.0
    %247 = vmatpush1.xpose.msra.mxu0 0.0
    %248 = vmatprep.subr.mxu0 0.0
    %249 = vmatpush1.xpose.msra.mxu0 0.0
    %250 = vmatprep.subr.mxu0 0.0
    %251 = vmatpush1.xpose.msra.mxu0 0.0
    %252 = vmatprep.subr.mxu0 0.0
    %253 = vmatpush1.xpose.msra.mxu0 0.0
    %254 = vmatprep.subr.mxu0 0.0
    %255 = vmatpush1.xpose.msra.mxu0 0.0
    %256 = vmatprep.subr.mxu0 0.0
    %257 = vmatpush1.xpose.msra.mxu0 0.0
    %258 = vmatprep.subr.mxu0 0.0
    %259 = vmatpush1.xpose.msra.mxu0 0.0
    %260 = vmatprep.subr.mxu0 0.0
    %261 = vmatpush1.xpose.msra.mxu0 0.0
    %262 = vmatprep.subr.mxu0 0.0
    %263 = vmatpush1.xpose.msra.mxu0 0.0
    %264 = vmatprep.subr.mxu0 0.0
    %265 = vmatpush1.xpose.msra.mxu0 0.0
    %266 = vmatprep.subr.mxu0 0.0
    %267 = vmatpush1.xpose.msra.mxu0 0.0
    %268 = vmatprep.subr.mxu0 0.0
    %269 = vmatpush1.xpose.msra.mxu0 0.0
    %270 = vmatprep.subr.mxu0 0.0
    %271 = vmatpush1.xpose.msra.mxu0 0.0
    %272 = vmatprep.mubr.f32.mxu0 0.0
    %273 = vmatmul.mubr.f32.gmra.mrb[0].mxu0 %v204
    %v274 = vpop.f32.mrb[0].mxu0
    %v275 = vadd.f32 0.0, %v274
    %v276 = vpop.f32.mrb[0].mxu0
    %277 = vdwg.mxu0
    %278 = vrot.lane.b32.xlu0 %v160, 96
    %v279 = vpop.permute.xlu0 %278
    %v280 = vsel %vm203, %v160, 0
    %v282 = vsel %vm203, %v279, 0
    %284 = vmatprep.subr.mxu0 0.0
    %285 = vmatpush1.xpose.msra.mxu0 %v282
    %286 = vmatprep.subr.mxu0 0.0
    %287 = vmatpush1.xpose.msra.mxu0 0.0
    %288 = vmatprep.subr.mxu0 0.0
    %289 = vmatpush1.xpose.msra.mxu0 0.0
    %290 = vmatprep.subr.mxu0 0.0
    %291 = vmatpush1.xpose.msra.mxu0 0.0
    %292 = vmatprep.subr.mxu0 0.0
    %293 = vmatpush1.xpose.msra.mxu0 0.0
    %294 = vmatprep.subr.mxu0 0.0
    %295 = vmatpush1.xpose.msra.mxu0 0.0
    %296 = vmatprep.subr.mxu0 0.0
    %297 = vmatpush1.xpose.msra.mxu0 0.0
    %298 = vmatprep.subr.mxu0 0.0
    %299 = vmatpush1.xpose.msra.mxu0 0.0
    %300 = vmatprep.subr.mxu0 0.0
    %301 = vmatpush1.xpose.msra.mxu0 0.0
    %302 = vmatprep.subr.mxu0 0.0
    %303 = vmatpush1.xpose.msra.mxu0 0.0
    %304 = vmatprep.subr.mxu0 0.0
    %305 = vmatpush1.xpose.msra.mxu0 0.0
    %306 = vmatprep.subr.mxu0 0.0
    %307 = vmatpush1.xpose.msra.mxu0 0.0
    %308 = vmatprep.subr.mxu0 0.0
    %309 = vmatpush1.xpose.msra.mxu0 0.0
    %310 = vmatprep.subr.mxu0 0.0
    %311 = vmatpush1.xpose.msra.mxu0 0.0
    %312 = vmatprep.subr.mxu0 0.0
    %313 = vmatpush1.xpose.msra.mxu0 0.0
    %314 = vmatprep.subr.mxu0 0.0
    %315 = vmatpush1.xpose.msra.mxu0 0.0
    %316 = vmatprep.subr.mxu0 0.0
    %317 = vmatpush1.xpose.msra.mxu0 0.0
    %318 = vmatprep.subr.mxu0 0.0
    %319 = vmatpush1.xpose.msra.mxu0 0.0
    %320 = vmatprep.subr.mxu0 0.0
    %321 = vmatpush1.xpose.msra.mxu0 0.0
    %322 = vmatprep.subr.mxu0 0.0
    %323 = vmatpush1.xpose.msra.mxu0 0.0
    %324 = vmatprep.subr.mxu0 0.0
    %325 = vmatpush1.xpose.msra.mxu0 0.0
    %326 = vmatprep.subr.mxu0 0.0
    %327 = vmatpush1.xpose.msra.mxu0 0.0
    %328 = vmatprep.subr.mxu0 0.0
    %329 = vmatpush1.xpose.msra.mxu0 0.0
    %330 = vmatprep.subr.mxu0 0.0
    %331 = vmatpush1.xpose.msra.mxu0 0.0
    %332 = vmatprep.subr.mxu0 0.0
    %333 = vmatpush1.xpose.msra.mxu0 0.0
    %334 = vmatprep.subr.mxu0 0.0
    %335 = vmatpush1.xpose.msra.mxu0 0.0
    %336 = vmatprep.subr.mxu0 0.0
    %337 = vmatpush1.xpose.msra.mxu0 0.0
    %338 = vmatprep.subr.mxu0 0.0
    %339 = vmatpush1.xpose.msra.mxu0 0.0
    %340 = vmatprep.subr.mxu0 0.0
    %341 = vmatpush1.xpose.msra.mxu0 0.0
    %342 = vmatprep.subr.mxu0 0.0
    %343 = vmatpush1.xpose.msra.mxu0 0.0
    %344 = vmatprep.subr.mxu0 0.0
    %345 = vmatpush1.xpose.msra.mxu0 0.0
    %346 = vmatprep.subr.mxu0 0.0
    %347 = vmatpush1.xpose.msra.mxu0 0.0
    %348 = vmatprep.mubr.f32.mxu0 0.0
    %349 = vmatmul.mubr.f32.gmra.mrb[0].mxu0 %v280
    %v350 = vpop.f32.mrb[0].mxu0
    %v351 = vadd.f32 0.0, %v350
    %v352 = vpop.f32.mrb[0].mxu0
    %353 = vdwg.mxu0
    %354 = vrot.lane.b32.xlu0 %v165, 96
    %v355 = vpop.permute.xlu0 %354
    %v356 = vsel %vm203, %v165, 0
    %v358 = vsel %vm203, %v355, 0
    %360 = vmatprep.subr.mxu0 0.0
    %361 = vmatpush1.xpose.msra.mxu0 %v358
    %362 = vmatprep.subr.mxu0 0.0
    %363 = vmatpush1.xpose.msra.mxu0 0.0
    %364 = vmatprep.subr.mxu0 0.0
    %365 = vmatpush1.xpose.msra.mxu0 0.0
    %366 = vmatprep.subr.mxu0 0.0
    %367 = vmatpush1.xpose.msra.mxu0 0.0
    %368 = vmatprep.subr.mxu0 0.0
    %369 = vmatpush1.xpose.msra.mxu0 0.0
    %370 = vmatprep.subr.mxu0 0.0
    %371 = vmatpush1.xpose.msra.mxu0 0.0
    %372 = vmatprep.subr.mxu0 0.0
    %373 = vmatpush1.xpose.msra.mxu0 0.0
    %374 = vmatprep.subr.mxu0 0.0
    %375 = vmatpush1.xpose.msra.mxu0 0.0
    %376 = vmatprep.subr.mxu0 0.0
    %377 = vmatpush1.xpose.msra.mxu0 0.0
    %378 = vmatprep.subr.mxu0 0.0
    %379 = vmatpush1.xpose.msra.mxu0 0.0
    %380 = vmatprep.subr.mxu0 0.0
    %381 = vmatpush1.xpose.msra.mxu0 0.0
    %382 = vmatprep.subr.mxu0 0.0
    %383 = vmatpush1.xpose.msra.mxu0 0.0
    %384 = vmatprep.subr.mxu0 0.0
    %385 = vmatpush1.xpose.msra.mxu0 0.0
    %386 = vmatprep.subr.mxu0 0.0
    %387 = vmatpush1.xpose.msra.mxu0 0.0
    %388 = vmatprep.subr.mxu0 0.0
    %389 = vmatpush1.xpose.msra.mxu0 0.0
    %390 = vmatprep.subr.mxu0 0.0
    %391 = vmatpush1.xpose.msra.mxu0 0.0
    %392 = vmatprep.subr.mxu0 0.0
    %393 = vmatpush1.xpose.msra.mxu0 0.0
    %394 = vmatprep.subr.mxu0 0.0
    %395 = vmatpush1.xpose.msra.mxu0 0.0
    %396 = vmatprep.subr.mxu0 0.0
    %397 = vmatpush1.xpose.msra.mxu0 0.0
    %398 = vmatprep.subr.mxu0 0.0
    %399 = vmatpush1.xpose.msra.mxu0 0.0
    %400 = vmatprep.subr.mxu0 0.0
    %401 = vmatpush1.xpose.msra.mxu0 0.0
    %402 = vmatprep.subr.mxu0 0.0
    %403 = vmatpush1.xpose.msra.mxu0 0.0
    %404 = vmatprep.subr.mxu0 0.0
    %405 = vmatpush1.xpose.msra.mxu0 0.0
    %406 = vmatprep.subr.mxu0 0.0
    %407 = vmatpush1.xpose.msra.mxu0 0.0
    %408 = vmatprep.subr.mxu0 0.0
    %409 = vmatpush1.xpose.msra.mxu0 0.0
    %410 = vmatprep.subr.mxu0 0.0
    %411 = vmatpush1.xpose.msra.mxu0 0.0
    %412 = vmatprep.subr.mxu0 0.0
    %413 = vmatpush1.xpose.msra.mxu0 0.0
    %414 = vmatprep.subr.mxu0 0.0
    %415 = vmatpush1.xpose.msra.mxu0 0.0
    %416 = vmatprep.subr.mxu0 0.0
    %417 = vmatpush1.xpose.msra.mxu0 0.0
    %418 = vmatprep.subr.mxu0 0.0
    %419 = vmatpush1.xpose.msra.mxu0 0.0
    %420 = vmatprep.subr.mxu0 0.0
    %421 = vmatpush1.xpose.msra.mxu0 0.0
    %422 = vmatprep.subr.mxu0 0.0
    %423 = vmatpush1.xpose.msra.mxu0 0.0
    %424 = vmatprep.mubr.f32.mxu0 0.0
    %425 = vmatmul.mubr.f32.gmra.mrb[0].mxu0 %v356
    %v426 = vpop.f32.mrb[0].mxu0
    %v427 = vadd.f32 0.0, %v426
    %v428 = vpop.f32.mrb[0].mxu0
    %429 = vdwg.mxu0
    %430 = vrot.lane.b32.xlu0 %v170, 96
    %v431 = vpop.permute.xlu0 %430
    %v432 = vsel %vm203, %v170, 0
    %v434 = vsel %vm203, %v431, 0
    %436 = vmatprep.subr.mxu0 0.0
    %437 = vmatpush1.xpose.msra.mxu0 %v434
    %438 = vmatprep.subr.mxu0 0.0
    %439 = vmatpush1.xpose.msra.mxu0 0.0
    %440 = vmatprep.subr.mxu0 0.0
    %441 = vmatpush1.xpose.msra.mxu0 0.0
    %442 = vmatprep.subr.mxu0 0.0
    %443 = vmatpush1.xpose.msra.mxu0 0.0
    %444 = vmatprep.subr.mxu0 0.0
    %445 = vmatpush1.xpose.msra.mxu0 0.0
    %446 = vmatprep.subr.mxu0 0.0
    %447 = vmatpush1.xpose.msra.mxu0 0.0
    %448 = vmatprep.subr.mxu0 0.0
    %449 = vmatpush1.xpose.msra.mxu0 0.0
    %450 = vmatprep.subr.mxu0 0.0
    %451 = vmatpush1.xpose.msra.mxu0 0.0
    %452 = vmatprep.subr.mxu0 0.0
    %453 = vmatpush1.xpose.msra.mxu0 0.0
    %454 = vmatprep.subr.mxu0 0.0
    %455 = vmatpush1.xpose.msra.mxu0 0.0
    %456 = vmatprep.subr.mxu0 0.0
    %457 = vmatpush1.xpose.msra.mxu0 0.0
    %458 = vmatprep.subr.mxu0 0.0
    %459 = vmatpush1.xpose.msra.mxu0 0.0
    %460 = vmatprep.subr.mxu0 0.0
    %461 = vmatpush1.xpose.msra.mxu0 0.0
    %462 = vmatprep.subr.mxu0 0.0
    %463 = vmatpush1.xpose.msra.mxu0 0.0
    %464 = vmatprep.subr.mxu0 0.0
    %465 = vmatpush1.xpose.msra.mxu0 0.0
    %466 = vmatprep.subr.mxu0 0.0
    %467 = vmatpush1.xpose.msra.mxu0 0.0
    %468 = vmatprep.subr.mxu0 0.0
    %469 = vmatpush1.xpose.msra.mxu0 0.0
    %470 = vmatprep.subr.mxu0 0.0
    %471 = vmatpush1.xpose.msra.mxu0 0.0
    %472 = vmatprep.subr.mxu0 0.0
    %473 = vmatpush1.xpose.msra.mxu0 0.0
    %474 = vmatprep.subr.mxu0 0.0
    %475 = vmatpush1.xpose.msra.mxu0 0.0
    %476 = vmatprep.subr.mxu0 0.0
    %477 = vmatpush1.xpose.msra.mxu0 0.0
    %478 = vmatprep.subr.mxu0 0.0
    %479 = vmatpush1.xpose.msra.mxu0 0.0
    %480 = vmatprep.subr.mxu0 0.0
    %481 = vmatpush1.xpose.msra.mxu0 0.0
    %482 = vmatprep.subr.mxu0 0.0
    %483 = vmatpush1.xpose.msra.mxu0 0.0
    %484 = vmatprep.subr.mxu0 0.0
    %485 = vmatpush1.xpose.msra.mxu0 0.0
    %486 = vmatprep.subr.mxu0 0.0
    %487 = vmatpush1.xpose.msra.mxu0 0.0
    %488 = vmatprep.subr.mxu0 0.0
    %489 = vmatpush1.xpose.msra.mxu0 0.0
    %490 = vmatprep.subr.mxu0 0.0
    %491 = vmatpush1.xpose.msra.mxu0 0.0
    %492 = vmatprep.subr.mxu0 0.0
    %493 = vmatpush1.xpose.msra.mxu0 0.0
    %494 = vmatprep.subr.mxu0 0.0
    %495 = vmatpush1.xpose.msra.mxu0 0.0
    %496 = vmatprep.subr.mxu0 0.0
    %497 = vmatpush1.xpose.msra.mxu0 0.0
    %498 = vmatprep.subr.mxu0 0.0
    %499 = vmatpush1.xpose.msra.mxu0 0.0
    %500 = vmatprep.mubr.f32.mxu0 0.0
    %501 = vmatmul.mubr.f32.gmra.mrb[0].mxu0 %v432
    %v502 = vpop.f32.mrb[0].mxu0
    %v503 = vadd.f32 0.0, %v502
    %v504 = vpop.f32.mrb[0].mxu0
    %505 = vdwg.mxu0
    %506 = vrot.lane.b32.xlu0 %v178, 96
    %v507 = vpop.permute.xlu0 %506
    %v508 = vsel %vm203, %v178, 0
    %v510 = vsel %vm203, %v507, 0
    %512 = vmatprep.subr.mxu0 0.0
    %513 = vmatpush1.xpose.msra.mxu0 %v510
    %514 = vmatprep.subr.mxu0 0.0
    %515 = vmatpush1.xpose.msra.mxu0 0.0
    %516 = vmatprep.subr.mxu0 0.0
    %517 = vmatpush1.xpose.msra.mxu0 0.0
    %518 = vmatprep.subr.mxu0 0.0
    %519 = vmatpush1.xpose.msra.mxu0 0.0
    %520 = vmatprep.subr.mxu0 0.0
    %521 = vmatpush1.xpose.msra.mxu0 0.0
    %522 = vmatprep.subr.mxu0 0.0
    %523 = vmatpush1.xpose.msra.mxu0 0.0
    %524 = vmatprep.subr.mxu0 0.0
    %525 = vmatpush1.xpose.msra.mxu0 0.0
    %526 = vmatprep.subr.mxu0 0.0
    %527 = vmatpush1.xpose.msra.mxu0 0.0
    %528 = vmatprep.subr.mxu0 0.0
    %529 = vmatpush1.xpose.msra.mxu0 0.0
    %530 = vmatprep.subr.mxu0 0.0
    %531 = vmatpush1.xpose.msra.mxu0 0.0
    %532 = vmatprep.subr.mxu0 0.0
    %533 = vmatpush1.xpose.msra.mxu0 0.0
    %534 = vmatprep.subr.mxu0 0.0
    %535 = vmatpush1.xpose.msra.mxu0 0.0
    %536 = vmatprep.subr.mxu0 0.0
    %537 = vmatpush1.xpose.msra.mxu0 0.0
    %538 = vmatprep.subr.mxu0 0.0
    %539 = vmatpush1.xpose.msra.mxu0 0.0
    %540 = vmatprep.subr.mxu0 0.0
    %541 = vmatpush1.xpose.msra.mxu0 0.0
    %542 = vmatprep.subr.mxu0 0.0
    %543 = vmatpush1.xpose.msra.mxu0 0.0
    %544 = vmatprep.subr.mxu0 0.0
    %545 = vmatpush1.xpose.msra.mxu0 0.0
    %546 = vmatprep.subr.mxu0 0.0
    %547 = vmatpush1.xpose.msra.mxu0 0.0
    %548 = vmatprep.subr.mxu0 0.0
    %549 = vmatpush1.xpose.msra.mxu0 0.0
    %550 = vmatprep.subr.mxu0 0.0
    %551 = vmatpush1.xpose.msra.mxu0 0.0
    %552 = vmatprep.subr.mxu0 0.0
    %553 = vmatpush1.xpose.msra.mxu0 0.0
    %554 = vmatprep.subr.mxu0 0.0
    %555 = vmatpush1.xpose.msra.mxu0 0.0
    %556 = vmatprep.subr.mxu0 0.0
    %557 = vmatpush1.xpose.msra.mxu0 0.0
    %558 = vmatprep.subr.mxu0 0.0
    %559 = vmatpush1.xpose.msra.mxu0 0.0
    %560 = vmatprep.subr.mxu0 0.0
    %561 = vmatpush1.xpose.msra.mxu0 0.0
    %562 = vmatprep.subr.mxu0 0.0
    %563 = vmatpush1.xpose.msra.mxu0 0.0
    %564 = vmatprep.subr.mxu0 0.0
    %565 = vmatpush1.xpose.msra.mxu0 0.0
    %566 = vmatprep.subr.mxu0 0.0
    %567 = vmatpush1.xpose.msra.mxu0 0.0
    %568 = vmatprep.subr.mxu0 0.0
    %569 = vmatpush1.xpose.msra.mxu0 0.0
    %570 = vmatprep.subr.mxu0 0.0
    %571 = vmatpush1.xpose.msra.mxu0 0.0
    %572 = vmatprep.subr.mxu0 0.0
    %573 = vmatpush1.xpose.msra.mxu0 0.0
    %574 = vmatprep.subr.mxu0 0.0
    %575 = vmatpush1.xpose.msra.mxu0 0.0
    %576 = vmatprep.mubr.f32.mxu0 0.0
    %577 = vmatmul.mubr.f32.gmra.mrb[0].mxu0 %v508
    %v578 = vpop.f32.mrb[0].mxu0
    %v579 = vadd.f32 0.0, %v578
    %v580 = vpop.f32.mrb[0].mxu0
    %581 = vdwg.mxu0
    %582 = vrot.lane.b32.xlu0 %v180, 96
    %v583 = vpop.permute.xlu0 %582
    %v584 = vsel %vm203, %v180, 0
    %v586 = vsel %vm203, %v583, 0
    %588 = vmatprep.subr.mxu0 0.0
    %589 = vmatpush1.xpose.msra.mxu0 %v586
    %590 = vmatprep.subr.mxu0 0.0
    %591 = vmatpush1.xpose.msra.mxu0 0.0
    %592 = vmatprep.subr.mxu0 0.0
    %593 = vmatpush1.xpose.msra.mxu0 0.0
    %594 = vmatprep.subr.mxu0 0.0
    %595 = vmatpush1.xpose.msra.mxu0 0.0
    %596 = vmatprep.subr.mxu0 0.0
    %597 = vmatpush1.xpose.msra.mxu0 0.0
    %598 = vmatprep.subr.mxu0 0.0
    %599 = vmatpush1.xpose.msra.mxu0 0.0
    %600 = vmatprep.subr.mxu0 0.0
    %601 = vmatpush1.xpose.msra.mxu0 0.0
    %602 = vmatprep.subr.mxu0 0.0
    %603 = vmatpush1.xpose.msra.mxu0 0.0
    %604 = vmatprep.subr.mxu0 0.0
    %605 = vmatpush1.xpose.msra.mxu0 0.0
    %606 = vmatprep.subr.mxu0 0.0
    %607 = vmatpush1.xpose.msra.mxu0 0.0
    %608 = vmatprep.subr.mxu0 0.0
    %609 = vmatpush1.xpose.msra.mxu0 0.0
    %610 = vmatprep.subr.mxu0 0.0
    %611 = vmatpush1.xpose.msra.mxu0 0.0
    %612 = vmatprep.subr.mxu0 0.0
    %613 = vmatpush1.xpose.msra.mxu0 0.0
    %614 = vmatprep.subr.mxu0 0.0
    %615 = vmatpush1.xpose.msra.mxu0 0.0
    %616 = vmatprep.subr.mxu0 0.0
    %617 = vmatpush1.xpose.msra.mxu0 0.0
    %618 = vmatprep.subr.mxu0 0.0
    %619 = vmatpush1.xpose.msra.mxu0 0.0
    %620 = vmatprep.subr.mxu0 0.0
    %621 = vmatpush1.xpose.msra.mxu0 0.0
    %622 = vmatprep.subr.mxu0 0.0
    %623 = vmatpush1.xpose.msra.mxu0 0.0
    %624 = vmatprep.subr.mxu0 0.0
    %625 = vmatpush1.xpose.msra.mxu0 0.0
    %626 = vmatprep.subr.mxu0 0.0
    %627 = vmatpush1.xpose.msra.mxu0 0.0
    %628 = vmatprep.subr.mxu0 0.0
    %629 = vmatpush1.xpose.msra.mxu0 0.0
    %630 = vmatprep.subr.mxu0 0.0
    %631 = vmatpush1.xpose.msra.mxu0 0.0
    %632 = vmatprep.subr.mxu0 0.0
    %633 = vmatpush1.xpose.msra.mxu0 0.0
    %634 = vmatprep.subr.mxu0 0.0
    %635 = vmatpush1.xpose.msra.mxu0 0.0
    %636 = vmatprep.subr.mxu0 0.0
    %637 = vmatpush1.xpose.msra.mxu0 0.0
    %638 = vmatprep.subr.mxu0 0.0
    %639 = vmatpush1.xpose.msra.mxu0 0.0
    %640 = vmatprep.subr.mxu0 0.0
    %641 = vmatpush1.xpose.msra.mxu0 0.0
    %642 = vmatprep.subr.mxu0 0.0
    %643 = vmatpush1.xpose.msra.mxu0 0.0
    %644 = vmatprep.subr.mxu0 0.0
    %645 = vmatpush1.xpose.msra.mxu0 0.0
    %646 = vmatprep.subr.mxu0 0.0
    %647 = vmatpush1.xpose.msra.mxu0 0.0
    %648 = vmatprep.subr.mxu0 0.0
    %649 = vmatpush1.xpose.msra.mxu0 0.0
    %650 = vmatprep.subr.mxu0 0.0
    %651 = vmatpush1.xpose.msra.mxu0 0.0
    %652 = vmatprep.mubr.f32.mxu0 0.0
    %653 = vmatmul.mubr.f32.gmra.mrb[0].mxu0 %v584
    %v654 = vpop.f32.mrb[0].mxu0
    %v655 = vadd.f32 0.0, %v654
    %v656 = vpop.f32.mrb[0].mxu0
    %657 = vdwg.mxu0
    %658 = vrot.lane.b32.xlu0 %v182, 96
    %v659 = vpop.permute.xlu0 %658
    %v660 = vsel %vm203, %v182, 0
    %v662 = vsel %vm203, %v659, 0
    %664 = vmatprep.subr.mxu0 0.0
    %665 = vmatpush1.xpose.msra.mxu0 %v662
    %666 = vmatprep.subr.mxu0 0.0
    %667 = vmatpush1.xpose.msra.mxu0 0.0
    %668 = vmatprep.subr.mxu0 0.0
    %669 = vmatpush1.xpose.msra.mxu0 0.0
    %670 = vmatprep.subr.mxu0 0.0
    %671 = vmatpush1.xpose.msra.mxu0 0.0
    %672 = vmatprep.subr.mxu0 0.0
    %673 = vmatpush1.xpose.msra.mxu0 0.0
    %674 = vmatprep.subr.mxu0 0.0
    %675 = vmatpush1.xpose.msra.mxu0 0.0
    %676 = vmatprep.subr.mxu0 0.0
    %677 = vmatpush1.xpose.msra.mxu0 0.0
    %678 = vmatprep.subr.mxu0 0.0
    %679 = vmatpush1.xpose.msra.mxu0 0.0
    %680 = vmatprep.subr.mxu0 0.0
    %681 = vmatpush1.xpose.msra.mxu0 0.0
    %682 = vmatprep.subr.mxu0 0.0
    %683 = vmatpush1.xpose.msra.mxu0 0.0
    %684 = vmatprep.subr.mxu0 0.0
    %685 = vmatpush1.xpose.msra.mxu0 0.0
    %686 = vmatprep.subr.mxu0 0.0
    %687 = vmatpush1.xpose.msra.mxu0 0.0
    %688 = vmatprep.subr.mxu0 0.0
    %689 = vmatpush1.xpose.msra.mxu0 0.0
    %690 = vmatprep.subr.mxu0 0.0
    %691 = vmatpush1.xpose.msra.mxu0 0.0
    %692 = vmatprep.subr.mxu0 0.0
    %693 = vmatpush1.xpose.msra.mxu0 0.0
    %694 = vmatprep.subr.mxu0 0.0
    %695 = vmatpush1.xpose.msra.mxu0 0.0
    %696 = vmatprep.subr.mxu0 0.0
    %697 = vmatpush1.xpose.msra.mxu0 0.0
    %698 = vmatprep.subr.mxu0 0.0
    %699 = vmatpush1.xpose.msra.mxu0 0.0
    %700 = vmatprep.subr.mxu0 0.0
    %701 = vmatpush1.xpose.msra.mxu0 0.0
    %702 = vmatprep.subr.mxu0 0.0
    %703 = vmatpush1.xpose.msra.mxu0 0.0
    %704 = vmatprep.subr.mxu0 0.0
    %705 = vmatpush1.xpose.msra.mxu0 0.0
    %706 = vmatprep.subr.mxu0 0.0
    %707 = vmatpush1.xpose.msra.mxu0 0.0
    %708 = vmatprep.subr.mxu0 0.0
    %709 = vmatpush1.xpose.msra.mxu0 0.0
    %710 = vmatprep.subr.mxu0 0.0
    %711 = vmatpush1.xpose.msra.mxu0 0.0
    %712 = vmatprep.subr.mxu0 0.0
    %713 = vmatpush1.xpose.msra.mxu0 0.0
    %714 = vmatprep.subr.mxu0 0.0
    %715 = vmatpush1.xpose.msra.mxu0 0.0
    %716 = vmatprep.subr.mxu0 0.0
    %717 = vmatpush1.xpose.msra.mxu0 0.0
    %718 = vmatprep.subr.mxu0 0.0
    %719 = vmatpush1.xpose.msra.mxu0 0.0
    %720 = vmatprep.subr.mxu0 0.0
    %721 = vmatpush1.xpose.msra.mxu0 0.0
    %722 = vmatprep.subr.mxu0 0.0
    %723 = vmatpush1.xpose.msra.mxu0 0.0
    %724 = vmatprep.subr.mxu0 0.0
    %725 = vmatpush1.xpose.msra.mxu0 0.0
    %726 = vmatprep.subr.mxu0 0.0
    %727 = vmatpush1.xpose.msra.mxu0 0.0
    %728 = vmatprep.mubr.f32.mxu0 0.0
    %729 = vmatmul.mubr.f32.gmra.mrb[0].mxu0 %v660
    %v730 = vpop.f32.mrb[0].mxu0
    %v731 = vadd.f32 0.0, %v730
    %v732 = vpop.f32.mrb[0].mxu0
    %733 = vdwg.mxu0
    %734 = vrot.lane.b32.xlu0 %v184, 96
    %v735 = vpop.permute.xlu0 %734
    %v736 = vsel %vm203, %v184, 0
    %v738 = vsel %vm203, %v735, 0
    %740 = vmatprep.subr.mxu0 0.0
    %741 = vmatpush1.xpose.msra.mxu0 %v738
    %742 = vmatprep.subr.mxu0 0.0
    %743 = vmatpush1.xpose.msra.mxu0 0.0
    %744 = vmatprep.subr.mxu0 0.0
    %745 = vmatpush1.xpose.msra.mxu0 0.0
    %746 = vmatprep.subr.mxu0 0.0
    %747 = vmatpush1.xpose.msra.mxu0 0.0
    %748 = vmatprep.subr.mxu0 0.0
    %749 = vmatpush1.xpose.msra.mxu0 0.0
    %750 = vmatprep.subr.mxu0 0.0
    %751 = vmatpush1.xpose.msra.mxu0 0.0
    %752 = vmatprep.subr.mxu0 0.0
    %753 = vmatpush1.xpose.msra.mxu0 0.0
    %754 = vmatprep.subr.mxu0 0.0
    %755 = vmatpush1.xpose.msra.mxu0 0.0
    %756 = vmatprep.subr.mxu0 0.0
    %757 = vmatpush1.xpose.msra.mxu0 0.0
    %758 = vmatprep.subr.mxu0 0.0
    %759 = vmatpush1.xpose.msra.mxu0 0.0
    %760 = vmatprep.subr.mxu0 0.0
    %761 = vmatpush1.xpose.msra.mxu0 0.0
    %762 = vmatprep.subr.mxu0 0.0
    %763 = vmatpush1.xpose.msra.mxu0 0.0
    %764 = vmatprep.subr.mxu0 0.0
    %765 = vmatpush1.xpose.msra.mxu0 0.0
    %766 = vmatprep.subr.mxu0 0.0
    %767 = vmatpush1.xpose.msra.mxu0 0.0
    %768 = vmatprep.subr.mxu0 0.0
    %769 = vmatpush1.xpose.msra.mxu0 0.0
    %770 = vmatprep.subr.mxu0 0.0
    %771 = vmatpush1.xpose.msra.mxu0 0.0
    %772 = vmatprep.subr.mxu0 0.0
    %773 = vmatpush1.xpose.msra.mxu0 0.0
    %774 = vmatprep.subr.mxu0 0.0
    %775 = vmatpush1.xpose.msra.mxu0 0.0
    %776 = vmatprep.subr.mxu0 0.0
    %777 = vmatpush1.xpose.msra.mxu0 0.0
    %778 = vmatprep.subr.mxu0 0.0
    %779 = vmatpush1.xpose.msra.mxu0 0.0
    %780 = vmatprep.subr.mxu0 0.0
    %781 = vmatpush1.xpose.msra.mxu0 0.0
    %782 = vmatprep.subr.mxu0 0.0
    %783 = vmatpush1.xpose.msra.mxu0 0.0
    %784 = vmatprep.subr.mxu0 0.0
    %785 = vmatpush1.xpose.msra.mxu0 0.0
    %786 = vmatprep.subr.mxu0 0.0
    %787 = vmatpush1.xpose.msra.mxu0 0.0
    %788 = vmatprep.subr.mxu0 0.0
    %789 = vmatpush1.xpose.msra.mxu0 0.0
    %790 = vmatprep.subr.mxu0 0.0
    %791 = vmatpush1.xpose.msra.mxu0 0.0
    %792 = vmatprep.subr.mxu0 0.0
    %793 = vmatpush1.xpose.msra.mxu0 0.0
    %794 = vmatprep.subr.mxu0 0.0
    %795 = vmatpush1.xpose.msra.mxu0 0.0
    %796 = vmatprep.subr.mxu0 0.0
    %797 = vmatpush1.xpose.msra.mxu0 0.0
    %798 = vmatprep.subr.mxu0 0.0
    %799 = vmatpush1.xpose.msra.mxu0 0.0
    %800 = vmatprep.subr.mxu0 0.0
    %801 = vmatpush1.xpose.msra.mxu0 0.0
    %802 = vmatprep.subr.mxu0 0.0
    %803 = vmatpush1.xpose.msra.mxu0 0.0
    %804 = vmatprep.mubr.f32.mxu0 0.0
    %805 = vmatmul.mubr.f32.gmra.mrb[0].mxu0 %v736
    %v806 = vpop.f32.mrb[0].mxu0
    %v807 = vadd.f32 0.0, %v806
    %v808 = vpop.f32.mrb[0].mxu0
    %809 = vdwg.mxu0
    %810 = vrot.lane.b32.xlu0 %v186, 96
    %v811 = vpop.permute.xlu0 %810
    %v812 = vsel %vm203, %v186, 0
    %v814 = vsel %vm203, %v811, 0
    %816 = vmatprep.subr.mxu0 0.0
    %817 = vmatpush1.xpose.msra.mxu0 %v814
    %818 = vmatprep.subr.mxu0 0.0
    %819 = vmatpush1.xpose.msra.mxu0 0.0
    %820 = vmatprep.subr.mxu0 0.0
    %821 = vmatpush1.xpose.msra.mxu0 0.0
    %822 = vmatprep.subr.mxu0 0.0
    %823 = vmatpush1.xpose.msra.mxu0 0.0
    %824 = vmatprep.subr.mxu0 0.0
    %825 = vmatpush1.xpose.msra.mxu0 0.0
    %826 = vmatprep.subr.mxu0 0.0
    %827 = vmatpush1.xpose.msra.mxu0 0.0
    %828 = vmatprep.subr.mxu0 0.0
    %829 = vmatpush1.xpose.msra.mxu0 0.0
    %830 = vmatprep.subr.mxu0 0.0
    %831 = vmatpush1.xpose.msra.mxu0 0.0
    %832 = vmatprep.subr.mxu0 0.0
    %833 = vmatpush1.xpose.msra.mxu0 0.0
    %834 = vmatprep.subr.mxu0 0.0
    %835 = vmatpush1.xpose.msra.mxu0 0.0
    %836 = vmatprep.subr.mxu0 0.0
    %837 = vmatpush1.xpose.msra.mxu0 0.0
    %838 = vmatprep.subr.mxu0 0.0
    %839 = vmatpush1.xpose.msra.mxu0 0.0
    %840 = vmatprep.subr.mxu0 0.0
    %841 = vmatpush1.xpose.msra.mxu0 0.0
    %842 = vmatprep.subr.mxu0 0.0
    %843 = vmatpush1.xpose.msra.mxu0 0.0
    %844 = vmatprep.subr.mxu0 0.0
    %845 = vmatpush1.xpose.msra.mxu0 0.0
    %846 = vmatprep.subr.mxu0 0.0
    %847 = vmatpush1.xpose.msra.mxu0 0.0
    %848 = vmatprep.subr.mxu0 0.0
    %849 = vmatpush1.xpose.msra.mxu0 0.0
    %850 = vmatprep.subr.mxu0 0.0
    %851 = vmatpush1.xpose.msra.mxu0 0.0
    %852 = vmatprep.subr.mxu0 0.0
    %853 = vmatpush1.xpose.msra.mxu0 0.0
    %854 = vmatprep.subr.mxu0 0.0
    %855 = vmatpush1.xpose.msra.mxu0 0.0
    %856 = vmatprep.subr.mxu0 0.0
    %857 = vmatpush1.xpose.msra.mxu0 0.0
    %858 = vmatprep.subr.mxu0 0.0
    %859 = vmatpush1.xpose.msra.mxu0 0.0
    %860 = vmatprep.subr.mxu0 0.0
    %861 = vmatpush1.xpose.msra.mxu0 0.0
    %862 = vmatprep.subr.mxu0 0.0
    %863 = vmatpush1.xpose.msra.mxu0 0.0
    %864 = vmatprep.subr.mxu0 0.0
    %865 = vmatpush1.xpose.msra.mxu0 0.0
    %866 = vmatprep.subr.mxu0 0.0
    %867 = vmatpush1.xpose.msra.mxu0 0.0
    %868 = vmatprep.subr.mxu0 0.0
    %869 = vmatpush1.xpose.msra.mxu0 0.0
    %870 = vmatprep.subr.mxu0 0.0
    %871 = vmatpush1.xpose.msra.mxu0 0.0
    %872 = vmatprep.subr.mxu0 0.0
    %873 = vmatpush1.xpose.msra.mxu0 0.0
    %874 = vmatprep.subr.mxu0 0.0
    %875 = vmatpush1.xpose.msra.mxu0 0.0
    %876 = vmatprep.subr.mxu0 0.0
    %877 = vmatpush1.xpose.msra.mxu0 0.0
    %878 = vmatprep.subr.mxu0 0.0
    %879 = vmatpush1.xpose.msra.mxu0 0.0
    %880 = vmatprep.mubr.f32.mxu0 0.0
    %881 = vmatmul.mubr.f32.gmra.mrb[0].mxu0 %v812
    %v882 = vpop.f32.mrb[0].mxu0
    %v883 = vadd.f32 0.0, %v882
    %v884 = vpop.f32.mrb[0].mxu0
    %885 = vdwg.mxu0
    %886 = vrot.lane.b32.xlu0 %v188, 96
    %v887 = vpop.permute.xlu0 %886
    %v888 = vsel %vm203, %v188, 0
    %v890 = vsel %vm203, %v887, 0
    %892 = vmatprep.subr.mxu0 0.0
    %893 = vmatpush1.xpose.msra.mxu0 %v890
    %894 = vmatprep.subr.mxu0 0.0
    %895 = vmatpush1.xpose.msra.mxu0 0.0
    %896 = vmatprep.subr.mxu0 0.0
    %897 = vmatpush1.xpose.msra.mxu0 0.0
    %898 = vmatprep.subr.mxu0 0.0
    %899 = vmatpush1.xpose.msra.mxu0 0.0
    %900 = vmatprep.subr.mxu0 0.0
    %901 = vmatpush1.xpose.msra.mxu0 0.0
    %902 = vmatprep.subr.mxu0 0.0
    %903 = vmatpush1.xpose.msra.mxu0 0.0
    %904 = vmatprep.subr.mxu0 0.0
    %905 = vmatpush1.xpose.msra.mxu0 0.0
    %906 = vmatprep.subr.mxu0 0.0
    %907 = vmatpush1.xpose.msra.mxu0 0.0
    %908 = vmatprep.subr.mxu0 0.0
    %909 = vmatpush1.xpose.msra.mxu0 0.0
    %910 = vmatprep.subr.mxu0 0.0
    %911 = vmatpush1.xpose.msra.mxu0 0.0
    %912 = vmatprep.subr.mxu0 0.0
    %913 = vmatpush1.xpose.msra.mxu0 0.0
    %914 = vmatprep.subr.mxu0 0.0
    %915 = vmatpush1.xpose.msra.mxu0 0.0
    %916 = vmatprep.subr.mxu0 0.0
    %917 = vmatpush1.xpose.msra.mxu0 0.0
    %918 = vmatprep.subr.mxu0 0.0
    %919 = vmatpush1.xpose.msra.mxu0 0.0
    %920 = vmatprep.subr.mxu0 0.0
    %921 = vmatpush1.xpose.msra.mxu0 0.0
    %922 = vmatprep.subr.mxu0 0.0
    %923 = vmatpush1.xpose.msra.mxu0 0.0
    %924 = vmatprep.subr.mxu0 0.0
    %925 = vmatpush1.xpose.msra.mxu0 0.0
    %926 = vmatprep.subr.mxu0 0.0
    %927 = vmatpush1.xpose.msra.mxu0 0.0
    %928 = vmatprep.subr.mxu0 0.0
    %929 = vmatpush1.xpose.msra.mxu0 0.0
    %930 = vmatprep.subr.mxu0 0.0
    %931 = vmatpush1.xpose.msra.mxu0 0.0
    %932 = vmatprep.subr.mxu0 0.0
    %933 = vmatpush1.xpose.msra.mxu0 0.0
    %934 = vmatprep.subr.mxu0 0.0
    %935 = vmatpush1.xpose.msra.mxu0 0.0
    %936 = vmatprep.subr.mxu0 0.0
    %937 = vmatpush1.xpose.msra.mxu0 0.0
    %938 = vmatprep.subr.mxu0 0.0
    %939 = vmatpush1.xpose.msra.mxu0 0.0
    %940 = vmatprep.subr.mxu0 0.0
    %941 = vmatpush1.xpose.msra.mxu0 0.0
    %942 = vmatprep.subr.mxu0 0.0
    %943 = vmatpush1.xpose.msra.mxu0 0.0
    %944 = vmatprep.subr.mxu0 0.0
    %945 = vmatpush1.xpose.msra.mxu0 0.0
    %946 = vmatprep.subr.mxu0 0.0
    %947 = vmatpush1.xpose.msra.mxu0 0.0
    %948 = vmatprep.subr.mxu0 0.0
    %949 = vmatpush1.xpose.msra.mxu0 0.0
    %950 = vmatprep.subr.mxu0 0.0
    %951 = vmatpush1.xpose.msra.mxu0 0.0
    %952 = vmatprep.subr.mxu0 0.0
    %953 = vmatpush1.xpose.msra.mxu0 0.0
    %954 = vmatprep.subr.mxu0 0.0
    %955 = vmatpush1.xpose.msra.mxu0 0.0
    %956 = vmatprep.mubr.f32.mxu0 0.0
    %957 = vmatmul.mubr.f32.gmra.mrb[0].mxu0 %v888
    %v958 = vpop.f32.mrb[0].mxu0
    %v959 = vadd.f32 0.0, %v958
    %v960 = vpop.f32.mrb[0].mxu0
    %961 = vdwg.mxu0
    %962 = vrot.lane.b32.xlu0 %v190, 96
    %v963 = vpop.permute.xlu0 %962
    %v964 = vsel %vm203, %v190, 0
    %v966 = vsel %vm203, %v963, 0
    %968 = vmatprep.subr.mxu0 0.0
    %969 = vmatpush1.xpose.msra.mxu0 %v966
    %970 = vmatprep.subr.mxu0 0.0
    %971 = vmatpush1.xpose.msra.mxu0 0.0
    %972 = vmatprep.subr.mxu0 0.0
    %973 = vmatpush1.xpose.msra.mxu0 0.0
    %974 = vmatprep.subr.mxu0 0.0
    %975 = vmatpush1.xpose.msra.mxu0 0.0
    %976 = vmatprep.subr.mxu0 0.0
    %977 = vmatpush1.xpose.msra.mxu0 0.0
    %978 = vmatprep.subr.mxu0 0.0
    %979 = vmatpush1.xpose.msra.mxu0 0.0
    %980 = vmatprep.subr.mxu0 0.0
    %981 = vmatpush1.xpose.msra.mxu0 0.0
    %982 = vmatprep.subr.mxu0 0.0
    %983 = vmatpush1.xpose.msra.mxu0 0.0
    %984 = vmatprep.subr.mxu0 0.0
    %985 = vmatpush1.xpose.msra.mxu0 0.0
    %986 = vmatprep.subr.mxu0 0.0
    %987 = vmatpush1.xpose.msra.mxu0 0.0
    %988 = vmatprep.subr.mxu0 0.0
    %989 = vmatpush1.xpose.msra.mxu0 0.0
    %990 = vmatprep.subr.mxu0 0.0
    %991 = vmatpush1.xpose.msra.mxu0 0.0
    %992 = vmatprep.subr.mxu0 0.0
    %993 = vmatpush1.xpose.msra.mxu0 0.0
    %994 = vmatprep.subr.mxu0 0.0
    %995 = vmatpush1.xpose.msra.mxu0 0.0
    %996 = vmatprep.subr.mxu0 0.0
    %997 = vmatpush1.xpose.msra.mxu0 0.0
    %998 = vmatprep.subr.mxu0 0.0
    %999 = vmatpush1.xpose.msra.mxu0 0.0
    %1000 = vmatprep.subr.mxu0 0.0
    %1001 = vmatpush1.xpose.msra.mxu0 0.0
    %1002 = vmatprep.subr.mxu0 0.0
    %1003 = vmatpush1.xpose.msra.mxu0 0.0
    %1004 = vmatprep.subr.mxu0 0.0
    %1005 = vmatpush1.xpose.msra.mxu0 0.0
    %1006 = vmatprep.subr.mxu0 0.0
    %1007 = vmatpush1.xpose.msra.mxu0 0.0
    %1008 = vmatprep.subr.mxu0 0.0
    %1009 = vmatpush1.xpose.msra.mxu0 0.0
    %1010 = vmatprep.subr.mxu0 0.0
    %1011 = vmatpush1.xpose.msra.mxu0 0.0
    %1012 = vmatprep.subr.mxu0 0.0
    %1013 = vmatpush1.xpose.msra.mxu0 0.0
    %1014 = vmatprep.subr.mxu0 0.0
    %1015 = vmatpush1.xpose.msra.mxu0 0.0
    %1016 = vmatprep.subr.mxu0 0.0
    %1017 = vmatpush1.xpose.msra.mxu0 0.0
    %1018 = vmatprep.subr.mxu0 0.0
    %1019 = vmatpush1.xpose.msra.mxu0 0.0
    %1020 = vmatprep.subr.mxu0 0.0
    %1021 = vmatpush1.xpose.msra.mxu0 0.0
    %1022 = vmatprep.subr.mxu0 0.0
    %1023 = vmatpush1.xpose.msra.mxu0 0.0
    %1024 = vmatprep.subr.mxu0 0.0
    %1025 = vmatpush1.xpose.msra.mxu0 0.0
    %1026 = vmatprep.subr.mxu0 0.0
    %1027 = vmatpush1.xpose.msra.mxu0 0.0
    %1028 = vmatprep.subr.mxu0 0.0
    %1029 = vmatpush1.xpose.msra.mxu0 0.0
    %1030 = vmatprep.subr.mxu0 0.0
    %1031 = vmatpush1.xpose.msra.mxu0 0.0
    %1032 = vmatprep.mubr.f32.mxu0 0.0
    %1033 = vmatmul.mubr.f32.gmra.mrb[0].mxu0 %v964
    %v1034 = vpop.f32.mrb[0].mxu0
    %v1035 = vadd.f32 0.0, %v1034
    %v1036 = vpop.f32.mrb[0].mxu0
    %1037 = vdwg.mxu0
    %1038 = vrot.lane.b32.xlu0 %v192, 96
    %v1039 = vpop.permute.xlu0 %1038
    %v1040 = vsel %vm203, %v192, 0
    %v1042 = vsel %vm203, %v1039, 0
    %1044 = vmatprep.subr.mxu0 0.0
    %1045 = vmatpush1.xpose.msra.mxu0 %v1042
    %1046 = vmatprep.subr.mxu0 0.0
    %1047 = vmatpush1.xpose.msra.mxu0 0.0
    %1048 = vmatprep.subr.mxu0 0.0
    %1049 = vmatpush1.xpose.msra.mxu0 0.0
    %1050 = vmatprep.subr.mxu0 0.0
    %1051 = vmatpush1.xpose.msra.mxu0 0.0
    %1052 = vmatprep.subr.mxu0 0.0
    %1053 = vmatpush1.xpose.msra.mxu0 0.0
    %1054 = vmatprep.subr.mxu0 0.0
    %1055 = vmatpush1.xpose.msra.mxu0 0.0
    %1056 = vmatprep.subr.mxu0 0.0
    %1057 = vmatpush1.xpose.msra.mxu0 0.0
    %1058 = vmatprep.subr.mxu0 0.0
    %1059 = vmatpush1.xpose.msra.mxu0 0.0
    %1060 = vmatprep.subr.mxu0 0.0
    %1061 = vmatpush1.xpose.msra.mxu0 0.0
    %1062 = vmatprep.subr.mxu0 0.0
    %1063 = vmatpush1.xpose.msra.mxu0 0.0
    %1064 = vmatprep.subr.mxu0 0.0
    %1065 = vmatpush1.xpose.msra.mxu0 0.0
    %1066 = vmatprep.subr.mxu0 0.0
    %1067 = vmatpush1.xpose.msra.mxu0 0.0
    %1068 = vmatprep.subr.mxu0 0.0
    %1069 = vmatpush1.xpose.msra.mxu0 0.0
    %1070 = vmatprep.subr.mxu0 0.0
    %1071 = vmatpush1.xpose.msra.mxu0 0.0
    %1072 = vmatprep.subr.mxu0 0.0
    %1073 = vmatpush1.xpose.msra.mxu0 0.0
    %1074 = vmatprep.subr.mxu0 0.0
    %1075 = vmatpush1.xpose.msra.mxu0 0.0
    %1076 = vmatprep.subr.mxu0 0.0
    %1077 = vmatpush1.xpose.msra.mxu0 0.0
    %1078 = vmatprep.subr.mxu0 0.0
    %1079 = vmatpush1.xpose.msra.mxu0 0.0
    %1080 = vmatprep.subr.mxu0 0.0
    %1081 = vmatpush1.xpose.msra.mxu0 0.0
    %1082 = vmatprep.subr.mxu0 0.0
    %1083 = vmatpush1.xpose.msra.mxu0 0.0
    %1084 = vmatprep.subr.mxu0 0.0
    %1085 = vmatpush1.xpose.msra.mxu0 0.0
    %1086 = vmatprep.subr.mxu0 0.0
    %1087 = vmatpush1.xpose.msra.mxu0 0.0
    %1088 = vmatprep.subr.mxu0 0.0
    %1089 = vmatpush1.xpose.msra.mxu0 0.0
    %1090 = vmatprep.subr.mxu0 0.0
    %1091 = vmatpush1.xpose.msra.mxu0 0.0
    %1092 = vmatprep.subr.mxu0 0.0
    %1093 = vmatpush1.xpose.msra.mxu0 0.0
    %1094 = vmatprep.subr.mxu0 0.0
    %1095 = vmatpush1.xpose.msra.mxu0 0.0
    %1096 = vmatprep.subr.mxu0 0.0
    %1097 = vmatpush1.xpose.msra.mxu0 0.0
    %1098 = vmatprep.subr.mxu0 0.0
    %1099 = vmatpush1.xpose.msra.mxu0 0.0
    %1100 = vmatprep.subr.mxu0 0.0
    %1101 = vmatpush1.xpose.msra.mxu0 0.0
    %1102 = vmatprep.subr.mxu0 0.0
    %1103 = vmatpush1.xpose.msra.mxu0 0.0
    %1104 = vmatprep.subr.mxu0 0.0
    %1105 = vmatpush1.xpose.msra.mxu0 0.0
    %1106 = vmatprep.subr.mxu0 0.0
    %1107 = vmatpush1.xpose.msra.mxu0 0.0
    %1108 = vmatprep.mubr.f32.mxu0 0.0
    %1109 = vmatmul.mubr.f32.gmra.mrb[0].mxu0 %v1040
    %v1110 = vpop.f32.mrb[0].mxu0
    %v1111 = vadd.f32 0.0, %v1110
    %v1112 = vpop.f32.mrb[0].mxu0
    %1113 = vdwg.mxu0
    %1114 = vrot.lane.b32.xlu0 %v194, 96
    %v1115 = vpop.permute.xlu0 %1114
    %v1116 = vsel %vm203, %v194, 0
    %v1118 = vsel %vm203, %v1115, 0
    %1120 = vmatprep.subr.mxu0 0.0
    %1121 = vmatpush1.xpose.msra.mxu0 %v1118
    %1122 = vmatprep.subr.mxu0 0.0
    %1123 = vmatpush1.xpose.msra.mxu0 0.0
    %1124 = vmatprep.subr.mxu0 0.0
    %1125 = vmatpush1.xpose.msra.mxu0 0.0
    %1126 = vmatprep.subr.mxu0 0.0
    %1127 = vmatpush1.xpose.msra.mxu0 0.0
    %1128 = vmatprep.subr.mxu0 0.0
    %1129 = vmatpush1.xpose.msra.mxu0 0.0
    %1130 = vmatprep.subr.mxu0 0.0
    %1131 = vmatpush1.xpose.msra.mxu0 0.0
    %1132 = vmatprep.subr.mxu0 0.0
    %1133 = vmatpush1.xpose.msra.mxu0 0.0
    %1134 = vmatprep.subr.mxu0 0.0
    %1135 = vmatpush1.xpose.msra.mxu0 0.0
    %1136 = vmatprep.subr.mxu0 0.0
    %1137 = vmatpush1.xpose.msra.mxu0 0.0
    %1138 = vmatprep.subr.mxu0 0.0
    %1139 = vmatpush1.xpose.msra.mxu0 0.0
    %1140 = vmatprep.subr.mxu0 0.0
    %1141 = vmatpush1.xpose.msra.mxu0 0.0
    %1142 = vmatprep.subr.mxu0 0.0
    %1143 = vmatpush1.xpose.msra.mxu0 0.0
    %1144 = vmatprep.subr.mxu0 0.0
    %1145 = vmatpush1.xpose.msra.mxu0 0.0
    %1146 = vmatprep.subr.mxu0 0.0
    %1147 = vmatpush1.xpose.msra.mxu0 0.0
    %1148 = vmatprep.subr.mxu0 0.0
    %1149 = vmatpush1.xpose.msra.mxu0 0.0
    %1150 = vmatprep.subr.mxu0 0.0
    %1151 = vmatpush1.xpose.msra.mxu0 0.0
    %1152 = vmatprep.subr.mxu0 0.0
    %1153 = vmatpush1.xpose.msra.mxu0 0.0
    %1154 = vmatprep.subr.mxu0 0.0
    %1155 = vmatpush1.xpose.msra.mxu0 0.0
    %1156 = vmatprep.subr.mxu0 0.0
    %1157 = vmatpush1.xpose.msra.mxu0 0.0
    %1158 = vmatprep.subr.mxu0 0.0
    %1159 = vmatpush1.xpose.msra.mxu0 0.0
    %1160 = vmatprep.subr.mxu0 0.0
    %1161 = vmatpush1.xpose.msra.mxu0 0.0
    %1162 = vmatprep.subr.mxu0 0.0
    %1163 = vmatpush1.xpose.msra.mxu0 0.0
    %1164 = vmatprep.subr.mxu0 0.0
    %1165 = vmatpush1.xpose.msra.mxu0 0.0
    %1166 = vmatprep.subr.mxu0 0.0
    %1167 = vmatpush1.xpose.msra.mxu0 0.0
    %1168 = vmatprep.subr.mxu0 0.0
    %1169 = vmatpush1.xpose.msra.mxu0 0.0
    %1170 = vmatprep.subr.mxu0 0.0
    %1171 = vmatpush1.xpose.msra.mxu0 0.0
    %1172 = vmatprep.subr.mxu0 0.0
    %1173 = vmatpush1.xpose.msra.mxu0 0.0
    %1174 = vmatprep.subr.mxu0 0.0
    %1175 = vmatpush1.xpose.msra.mxu0 0.0
    %1176 = vmatprep.subr.mxu0 0.0
    %1177 = vmatpush1.xpose.msra.mxu0 0.0
    %1178 = vmatprep.subr.mxu0 0.0
    %1179 = vmatpush1.xpose.msra.mxu0 0.0
    %1180 = vmatprep.subr.mxu0 0.0
    %1181 = vmatpush1.xpose.msra.mxu0 0.0
    %1182 = vmatprep.subr.mxu0 0.0
    %1183 = vmatpush1.xpose.msra.mxu0 0.0
    %1184 = vmatprep.mubr.f32.mxu0 0.0
    %1185 = vmatmul.mubr.f32.gmra.mrb[0].mxu0 %v1116
    %v1186 = vpop.f32.mrb[0].mxu0
    %v1187 = vadd.f32 0.0, %v1186
    %v1188 = vpop.f32.mrb[0].mxu0
    %1189 = vdwg.mxu0
    %1190 = vrot.lane.b32.xlu0 %v196, 96
    %v1191 = vpop.permute.xlu0 %1190
    %v1192 = vsel %vm203, %v196, 0
    %v1194 = vsel %vm203, %v1191, 0
    %1196 = vmatprep.subr.mxu0 0.0
    %1197 = vmatpush1.xpose.msra.mxu0 %v1194
    %1198 = vmatprep.subr.mxu0 0.0
    %1199 = vmatpush1.xpose.msra.mxu0 0.0
    %1200 = vmatprep.subr.mxu0 0.0
    %1201 = vmatpush1.xpose.msra.mxu0 0.0
    %1202 = vmatprep.subr.mxu0 0.0
    %1203 = vmatpush1.xpose.msra.mxu0 0.0
    %1204 = vmatprep.subr.mxu0 0.0
    %1205 = vmatpush1.xpose.msra.mxu0 0.0
    %1206 = vmatprep.subr.mxu0 0.0
    %1207 = vmatpush1.xpose.msra.mxu0 0.0
    %1208 = vmatprep.subr.mxu0 0.0
    %1209 = vmatpush1.xpose.msra.mxu0 0.0
    %1210 = vmatprep.subr.mxu0 0.0
    %1211 = vmatpush1.xpose.msra.mxu0 0.0
    %1212 = vmatprep.subr.mxu0 0.0
    %1213 = vmatpush1.xpose.msra.mxu0 0.0
    %1214 = vmatprep.subr.mxu0 0.0
    %1215 = vmatpush1.xpose.msra.mxu0 0.0
    %1216 = vmatprep.subr.mxu0 0.0
    %1217 = vmatpush1.xpose.msra.mxu0 0.0
    %1218 = vmatprep.subr.mxu0 0.0
    %1219 = vmatpush1.xpose.msra.mxu0 0.0
    %1220 = vmatprep.subr.mxu0 0.0
    %1221 = vmatpush1.xpose.msra.mxu0 0.0
    %1222 = vmatprep.subr.mxu0 0.0
    %1223 = vmatpush1.xpose.msra.mxu0 0.0
    %1224 = vmatprep.subr.mxu0 0.0
    %1225 = vmatpush1.xpose.msra.mxu0 0.0
    %1226 = vmatprep.subr.mxu0 0.0
    %1227 = vmatpush1.xpose.msra.mxu0 0.0
    %1228 = vmatprep.subr.mxu0 0.0
    %1229 = vmatpush1.xpose.msra.mxu0 0.0
    %1230 = vmatprep.subr.mxu0 0.0
    %1231 = vmatpush1.xpose.msra.mxu0 0.0
    %1232 = vmatprep.subr.mxu0 0.0
    %1233 = vmatpush1.xpose.msra.mxu0 0.0
    %1234 = vmatprep.subr.mxu0 0.0
    %1235 = vmatpush1.xpose.msra.mxu0 0.0
    %1236 = vmatprep.subr.mxu0 0.0
    %1237 = vmatpush1.xpose.msra.mxu0 0.0
    %1238 = vmatprep.subr.mxu0 0.0
    %1239 = vmatpush1.xpose.msra.mxu0 0.0
    %1240 = vmatprep.subr.mxu0 0.0
    %1241 = vmatpush1.xpose.msra.mxu0 0.0
    %1242 = vmatprep.subr.mxu0 0.0
    %1243 = vmatpush1.xpose.msra.mxu0 0.0
    %1244 = vmatprep.subr.mxu0 0.0
    %1245 = vmatpush1.xpose.msra.mxu0 0.0
    %1246 = vmatprep.subr.mxu0 0.0
    %1247 = vmatpush1.xpose.msra.mxu0 0.0
    %1248 = vmatprep.subr.mxu0 0.0
    %1249 = vmatpush1.xpose.msra.mxu0 0.0
    %1250 = vmatprep.subr.mxu0 0.0
    %1251 = vmatpush1.xpose.msra.mxu0 0.0
    %1252 = vmatprep.subr.mxu0 0.0
    %1253 = vmatpush1.xpose.msra.mxu0 0.0
    %1254 = vmatprep.subr.mxu0 0.0
    %1255 = vmatpush1.xpose.msra.mxu0 0.0
    %1256 = vmatprep.subr.mxu0 0.0
    %1257 = vmatpush1.xpose.msra.mxu0 0.0
    %1258 = vmatprep.subr.mxu0 0.0
    %1259 = vmatpush1.xpose.msra.mxu0 0.0
    %1260 = vmatprep.mubr.f32.mxu0 0.0
    %1261 = vmatmul.mubr.f32.gmra.mrb[0].mxu0 %v1192
    %v1262 = vpop.f32.mrb[0].mxu0
    %v1263 = vadd.f32 0.0, %v1262
    %v1264 = vpop.f32.mrb[0].mxu0
    %1265 = vdwg.mxu0
    %1266 = vrot.lane.b32.xlu0 %v198, 96
    %v1267 = vpop.permute.xlu0 %1266
    %v1268 = vsel %vm203, %v198, 0
    %v1270 = vsel %vm203, %v1267, 0
    %1272 = vmatprep.subr.mxu0 0.0
    %1273 = vmatpush1.xpose.msra.mxu0 %v1270
    %1274 = vmatprep.subr.mxu0 0.0
    %1275 = vmatpush1.xpose.msra.mxu0 0.0
    %1276 = vmatprep.subr.mxu0 0.0
    %1277 = vmatpush1.xpose.msra.mxu0 0.0
    %1278 = vmatprep.subr.mxu0 0.0
    %1279 = vmatpush1.xpose.msra.mxu0 0.0
    %1280 = vmatprep.subr.mxu0 0.0
    %1281 = vmatpush1.xpose.msra.mxu0 0.0
    %1282 = vmatprep.subr.mxu0 0.0
    %1283 = vmatpush1.xpose.msra.mxu0 0.0
    %1284 = vmatprep.subr.mxu0 0.0
    %1285 = vmatpush1.xpose.msra.mxu0 0.0
    %1286 = vmatprep.subr.mxu0 0.0
    %1287 = vmatpush1.xpose.msra.mxu0 0.0
    %1288 = vmatprep.subr.mxu0 0.0
    %1289 = vmatpush1.xpose.msra.mxu0 0.0
    %1290 = vmatprep.subr.mxu0 0.0
    %1291 = vmatpush1.xpose.msra.mxu0 0.0
    %1292 = vmatprep.subr.mxu0 0.0
    %1293 = vmatpush1.xpose.msra.mxu0 0.0
    %1294 = vmatprep.subr.mxu0 0.0
    %1295 = vmatpush1.xpose.msra.mxu0 0.0
    %1296 = vmatprep.subr.mxu0 0.0
    %1297 = vmatpush1.xpose.msra.mxu0 0.0
    %1298 = vmatprep.subr.mxu0 0.0
    %1299 = vmatpush1.xpose.msra.mxu0 0.0
    %1300 = vmatprep.subr.mxu0 0.0
    %1301 = vmatpush1.xpose.msra.mxu0 0.0
    %1302 = vmatprep.subr.mxu0 0.0
    %1303 = vmatpush1.xpose.msra.mxu0 0.0
    %1304 = vmatprep.subr.mxu0 0.0
    %1305 = vmatpush1.xpose.msra.mxu0 0.0
    %1306 = vmatprep.subr.mxu0 0.0
    %1307 = vmatpush1.xpose.msra.mxu0 0.0
    %1308 = vmatprep.subr.mxu0 0.0
    %1309 = vmatpush1.xpose.msra.mxu0 0.0
    %1310 = vmatprep.subr.mxu0 0.0
    %1311 = vmatpush1.xpose.msra.mxu0 0.0
    %1312 = vmatprep.subr.mxu0 0.0
    %1313 = vmatpush1.xpose.msra.mxu0 0.0
    %1314 = vmatprep.subr.mxu0 0.0
    %1315 = vmatpush1.xpose.msra.mxu0 0.0
    %1316 = vmatprep.subr.mxu0 0.0
    %1317 = vmatpush1.xpose.msra.mxu0 0.0
    %1318 = vmatprep.subr.mxu0 0.0
    %1319 = vmatpush1.xpose.msra.mxu0 0.0
    %1320 = vmatprep.subr.mxu0 0.0
    %1321 = vmatpush1.xpose.msra.mxu0 0.0
    %1322 = vmatprep.subr.mxu0 0.0
    %1323 = vmatpush1.xpose.msra.mxu0 0.0
    %1324 = vmatprep.subr.mxu0 0.0
    %1325 = vmatpush1.xpose.msra.mxu0 0.0
    %1326 = vmatprep.subr.mxu0 0.0
    %1327 = vmatpush1.xpose.msra.mxu0 0.0
    %1328 = vmatprep.subr.mxu0 0.0
    %1329 = vmatpush1.xpose.msra.mxu0 0.0
    %1330 = vmatprep.subr.mxu0 0.0
    %1331 = vmatpush1.xpose.msra.mxu0 0.0
    %1332 = vmatprep.subr.mxu0 0.0
    %1333 = vmatpush1.xpose.msra.mxu0 0.0
    %1334 = vmatprep.subr.mxu0 0.0
    %1335 = vmatpush1.xpose.msra.mxu0 0.0
    %1336 = vmatprep.mubr.f32.mxu0 0.0
    %1337 = vmatmul.mubr.f32.gmra.mrb[0].mxu0 %v1268
    %v1338 = vpop.f32.mrb[0].mxu0
    %v1339 = vadd.f32 0.0, %v1338
    %v1340 = vpop.f32.mrb[0].mxu0
    %1341 = vdwg.mxu0
    %1342 = vrot.lane.b32.xlu0 %v200, 96
    %v1343 = vpop.permute.xlu0 %1342
    %v1344 = vsel %vm203, %v200, 0
    %v1346 = vsel %vm203, %v1343, 0
    %1348 = vmatprep.subr.mxu0 0.0
    %1349 = vmatpush1.xpose.msra.mxu0 %v1346
    %1350 = vmatprep.subr.mxu0 0.0
    %1351 = vmatpush1.xpose.msra.mxu0 0.0
    %1352 = vmatprep.subr.mxu0 0.0
    %1353 = vmatpush1.xpose.msra.mxu0 0.0
    %1354 = vmatprep.subr.mxu0 0.0
    %1355 = vmatpush1.xpose.msra.mxu0 0.0
    %1356 = vmatprep.subr.mxu0 0.0
    %1357 = vmatpush1.xpose.msra.mxu0 0.0
    %1358 = vmatprep.subr.mxu0 0.0
    %1359 = vmatpush1.xpose.msra.mxu0 0.0
    %1360 = vmatprep.subr.mxu0 0.0
    %1361 = vmatpush1.xpose.msra.mxu0 0.0
    %1362 = vmatprep.subr.mxu0 0.0
    %1363 = vmatpush1.xpose.msra.mxu0 0.0
    %1364 = vmatprep.subr.mxu0 0.0
    %1365 = vmatpush1.xpose.msra.mxu0 0.0
    %1366 = vmatprep.subr.mxu0 0.0
    %1367 = vmatpush1.xpose.msra.mxu0 0.0
    %1368 = vmatprep.subr.mxu0 0.0
    %1369 = vmatpush1.xpose.msra.mxu0 0.0
    %1370 = vmatprep.subr.mxu0 0.0
    %1371 = vmatpush1.xpose.msra.mxu0 0.0
    %1372 = vmatprep.subr.mxu0 0.0
    %1373 = vmatpush1.xpose.msra.mxu0 0.0
    %1374 = vmatprep.subr.mxu0 0.0
    %1375 = vmatpush1.xpose.msra.mxu0 0.0
    %1376 = vmatprep.subr.mxu0 0.0
    %1377 = vmatpush1.xpose.msra.mxu0 0.0
    %1378 = vmatprep.subr.mxu0 0.0
    %1379 = vmatpush1.xpose.msra.mxu0 0.0
    %1380 = vmatprep.subr.mxu0 0.0
    %1381 = vmatpush1.xpose.msra.mxu0 0.0
    %1382 = vmatprep.subr.mxu0 0.0
    %1383 = vmatpush1.xpose.msra.mxu0 0.0
    %1384 = vmatprep.subr.mxu0 0.0
    %1385 = vmatpush1.xpose.msra.mxu0 0.0
    %1386 = vmatprep.subr.mxu0 0.0
    %1387 = vmatpush1.xpose.msra.mxu0 0.0
    %1388 = vmatprep.subr.mxu0 0.0
    %1389 = vmatpush1.xpose.msra.mxu0 0.0
    %1390 = vmatprep.subr.mxu0 0.0
    %1391 = vmatpush1.xpose.msra.mxu0 0.0
    %1392 = vmatprep.subr.mxu0 0.0
    %1393 = vmatpush1.xpose.msra.mxu0 0.0
    %1394 = vmatprep.subr.mxu0 0.0
    %1395 = vmatpush1.xpose.msra.mxu0 0.0
    %1396 = vmatprep.subr.mxu0 0.0
    %1397 = vmatpush1.xpose.msra.mxu0 0.0
    %1398 = vmatprep.subr.mxu0 0.0
    %1399 = vmatpush1.xpose.msra.mxu0 0.0
    %1400 = vmatprep.subr.mxu0 0.0
    %1401 = vmatpush1.xpose.msra.mxu0 0.0
    %1402 = vmatprep.subr.mxu0 0.0
    %1403 = vmatpush1.xpose.msra.mxu0 0.0
    %1404 = vmatprep.subr.mxu0 0.0
    %1405 = vmatpush1.xpose.msra.mxu0 0.0
    %1406 = vmatprep.subr.mxu0 0.0
    %1407 = vmatpush1.xpose.msra.mxu0 0.0
    %1408 = vmatprep.subr.mxu0 0.0
    %1409 = vmatpush1.xpose.msra.mxu0 0.0
    %1410 = vmatprep.subr.mxu0 0.0
    %1411 = vmatpush1.xpose.msra.mxu0 0.0
    %1412 = vmatprep.mubr.f32.mxu0 0.0
    %1413 = vmatmul.mubr.f32.gmra.mrb[0].mxu0 %v1344
    %v1414 = vpop.f32.mrb[0].mxu0
    %v1415 = vadd.f32 0.0, %v1414
    %v1416 = vpop.f32.mrb[0].mxu0
    %1417 = vdwg.mxu0
    %v1418 = vsel %vm203, %v275, -inf
    %1419 = vmax.xlane.f32.xlu0 %v1418
    %v1420 = vpop.xlane.xlu0 %1419
    %v1421 = vsel %vm203, %v351, -inf
    %1422 = vmax.xlane.f32.xlu0 %v1421
    %v1423 = vpop.xlane.xlu0 %1422
    %v1424 = vsel %vm203, %v427, -inf
    %1425 = vmax.xlane.f32.xlu0 %v1424
    %v1426 = vpop.xlane.xlu0 %1425
    %v1427 = vsel %vm203, %v503, -inf
    %1428 = vmax.xlane.f32.xlu0 %v1427
    %v1429 = vpop.xlane.xlu0 %1428
    %v1430 = vsel %vm203, %v579, -inf
    %1431 = vmax.xlane.f32.xlu0 %v1430
    %v1432 = vpop.xlane.xlu0 %1431
    %v1433 = vsel %vm203, %v655, -inf
    %1434 = vmax.xlane.f32.xlu0 %v1433
    %v1435 = vpop.xlane.xlu0 %1434
    %v1436 = vsel %vm203, %v731, -inf
    %1437 = vmax.xlane.f32.xlu0 %v1436
    %v1438 = vpop.xlane.xlu0 %1437
    %v1439 = vsel %vm203, %v807, -inf
    %1440 = vmax.xlane.f32.xlu0 %v1439
    %v1441 = vpop.xlane.xlu0 %1440
    %v1442 = vsel %vm203, %v883, -inf
    %1443 = vmax.xlane.f32.xlu0 %v1442
    %v1444 = vpop.xlane.xlu0 %1443
    %v1445 = vsel %vm203, %v959, -inf
    %1446 = vmax.xlane.f32.xlu0 %v1445
    %v1447 = vpop.xlane.xlu0 %1446
    %v1448 = vsel %vm203, %v1035, -inf
    %1449 = vmax.xlane.f32.xlu0 %v1448
    %v1450 = vpop.xlane.xlu0 %1449
    %v1451 = vsel %vm203, %v1111, -inf
    %1452 = vmax.xlane.f32.xlu0 %v1451
    %v1453 = vpop.xlane.xlu0 %1452
    %v1454 = vsel %vm203, %v1187, -inf
    %1455 = vmax.xlane.f32.xlu0 %v1454
    %v1456 = vpop.xlane.xlu0 %1455
    %v1457 = vsel %vm203, %v1263, -inf
    %1458 = vmax.xlane.f32.xlu0 %v1457
    %v1459 = vpop.xlane.xlu0 %1458
    %v1460 = vsel %vm203, %v1339, -inf
    %1461 = vmax.xlane.f32.xlu0 %v1460
    %v1462 = vpop.xlane.xlu0 %1461
    %v1463 = vsel %vm203, %v1415, -inf
    %1464 = vmax.xlane.f32.xlu0 %v1463
    %v1465 = vpop.xlane.xlu0 %1464
    %v1466 = vsub.f32 %v275, %v1420
    %v1467 = vsub.f32 %v351, %v1423
    %v1468 = vsub.f32 %v427, %v1426
    %v1469 = vsub.f32 %v503, %v1429
    %v1470 = vsub.f32 %v579, %v1432
    %v1471 = vsub.f32 %v655, %v1435
    %v1472 = vsub.f32 %v731, %v1438
    %v1473 = vsub.f32 %v807, %v1441
    %v1474 = vsub.f32 %v883, %v1444
    %v1475 = vsub.f32 %v959, %v1447
    %v1476 = vsub.f32 %v1035, %v1450
    %v1477 = vsub.f32 %v1111, %v1453
    %v1478 = vsub.f32 %v1187, %v1456
    %v1479 = vsub.f32 %v1263, %v1459
    %v1480 = vsub.f32 %v1339, %v1462
    %v1481 = vsub.f32 %v1415, %v1465
    %v1482 = vmul.f32 %v1466, 1.442695
    %v1483 = vpow.pop %v1482
    %v1484 = vmul.f32 %v1467, 1.442695
    %v1485 = vpow.pop %v1484
    %v1486 = vmul.f32 %v1468, 1.442695
    %v1487 = vpow.pop %v1486
    %v1488 = vmul.f32 %v1469, 1.442695
    %v1489 = vpow.pop %v1488
    %v1490 = vmul.f32 %v1470, 1.442695
    %v1491 = vpow.pop %v1490
    %v1492 = vmul.f32 %v1471, 1.442695
    %v1493 = vpow.pop %v1492
    %v1494 = vmul.f32 %v1472, 1.442695
    %v1495 = vpow.pop %v1494
    %v1496 = vmul.f32 %v1473, 1.442695
    %v1497 = vpow.pop %v1496
    %v1498 = vmul.f32 %v1474, 1.442695
    %v1499 = vpow.pop %v1498
    %v1500 = vmul.f32 %v1475, 1.442695
    %v1501 = vpow.pop %v1500
    %v1502 = vmul.f32 %v1476, 1.442695
    %v1503 = vpow.pop %v1502
    %v1504 = vmul.f32 %v1477, 1.442695
    %v1505 = vpow.pop %v1504
    %v1506 = vmul.f32 %v1478, 1.442695
    %v1507 = vpow.pop %v1506
    %v1508 = vmul.f32 %v1479, 1.442695
    %v1509 = vpow.pop %v1508
    %v1510 = vmul.f32 %v1480, 1.442695
    %v1511 = vpow.pop %v1510
    %v1512 = vmul.f32 %v1481, 1.442695
    %v1513 = vpow.pop %v1512
    %v1514 = vsel %vm203, %v1483, 0.0
    %1515 = vadd.xlane.f32.xlu0 %v1514
    %v1516 = vpop.xlane.xlu0 %1515
    %v1517 = vsel %vm203, %v1485, 0.0
    %1518 = vadd.xlane.f32.xlu0 %v1517
    %v1519 = vpop.xlane.xlu0 %1518
    %v1520 = vsel %vm203, %v1487, 0.0
    %1521 = vadd.xlane.f32.xlu0 %v1520
    %v1522 = vpop.xlane.xlu0 %1521
    %v1523 = vsel %vm203, %v1489, 0.0
    %1524 = vadd.xlane.f32.xlu0 %v1523
    %v1525 = vpop.xlane.xlu0 %1524
    %v1526 = vsel %vm203, %v1491, 0.0
    %1527 = vadd.xlane.f32.xlu0 %v1526
    %v1528 = vpop.xlane.xlu0 %1527
    %v1529 = vsel %vm203, %v1493, 0.0
    %1530 = vadd.xlane.f32.xlu0 %v1529
    %v1531 = vpop.xlane.xlu0 %1530
    %v1532 = vsel %vm203, %v1495, 0.0
    %1533 = vadd.xlane.f32.xlu0 %v1532
    %v1534 = vpop.xlane.xlu0 %1533
    %v1535 = vsel %vm203, %v1497, 0.0
    %1536 = vadd.xlane.f32.xlu0 %v1535
    %v1537 = vpop.xlane.xlu0 %1536
    %v1538 = vsel %vm203, %v1499, 0.0
    %1539 = vadd.xlane.f32.xlu0 %v1538
    %v1540 = vpop.xlane.xlu0 %1539
    %v1541 = vsel %vm203, %v1501, 0.0
    %1542 = vadd.xlane.f32.xlu0 %v1541
    %v1543 = vpop.xlane.xlu0 %1542
    %v1544 = vsel %vm203, %v1503, 0.0
    %1545 = vadd.xlane.f32.xlu0 %v1544
    %v1546 = vpop.xlane.xlu0 %1545
    %v1547 = vsel %vm203, %v1505, 0.0
    %1548 = vadd.xlane.f32.xlu0 %v1547
    %v1549 = vpop.xlane.xlu0 %1548
    %v1550 = vsel %vm203, %v1507, 0.0
    %1551 = vadd.xlane.f32.xlu0 %v1550
    %v1552 = vpop.xlane.xlu0 %1551
    %v1553 = vsel %vm203, %v1509, 0.0
    %1554 = vadd.xlane.f32.xlu0 %v1553
    %v1555 = vpop.xlane.xlu0 %1554
    %v1556 = vsel %vm203, %v1511, 0.0
    %1557 = vadd.xlane.f32.xlu0 %v1556
    %v1558 = vpop.xlane.xlu0 %1557
    %v1559 = vsel %vm203, %v1513, 0.0
    %1560 = vadd.xlane.f32.xlu0 %v1559
    %v1561 = vpop.xlane.xlu0 %1560
    %v1562 = vrcp.pop %v1516
    %v1563 = vrcp.pop %v1519
    %v1564 = vrcp.pop %v1522
    %v1565 = vrcp.pop %v1525
    %v1566 = vrcp.pop %v1528
    %v1567 = vrcp.pop %v1531
    %v1568 = vrcp.pop %v1534
    %v1569 = vrcp.pop %v1537
    %v1570 = vrcp.pop %v1540
    %v1571 = vrcp.pop %v1543
    %v1572 = vrcp.pop %v1546
    %v1573 = vrcp.pop %v1549
    %v1574 = vrcp.pop %v1552
    %v1575 = vrcp.pop %v1555
    %v1576 = vrcp.pop %v1558
    %v1577 = vrcp.pop %v1561
    %v1578 = vmul.f32 %v1483, %v1562
    %v1579 = vmul.f32 %v1485, %v1563
    %v1580 = vmul.f32 %v1487, %v1564
    %v1581 = vmul.f32 %v1489, %v1565
    %v1582 = vmul.f32 %v1491, %v1566
    %v1583 = vmul.f32 %v1493, %v1567
    %v1584 = vmul.f32 %v1495, %v1568
    %v1585 = vmul.f32 %v1497, %v1569
    %v1586 = vmul.f32 %v1499, %v1570
    %v1587 = vmul.f32 %v1501, %v1571
    %v1588 = vmul.f32 %v1503, %v1572
    %v1589 = vmul.f32 %v1505, %v1573
    %v1590 = vmul.f32 %v1507, %v1574
    %v1591 = vmul.f32 %v1509, %v1575
    %v1592 = vmul.f32 %v1511, %v1576
    %v1593 = vmul.f32 %v1513, %v1577
    %1594 = vrot.lane.b32.xlu0 %v155, 64
    %v1595 = vpop.permute.xlu0 %1594
    %v1598 = vsel %vm203, %v1578, 0
    %1600 = vmatprep.subr.mxu0 0.0
    %1601 = vmatpush1.msra.mxu0 %v1595
    %1602 = vmatprep.subr.mxu0 0.0
    %1603 = vmatpush1.msra.mxu0 0.0
    %1604 = vmatprep.subr.mxu0 0.0
    %1605 = vmatpush1.msra.mxu0 0.0
    %1606 = vmatprep.subr.mxu0 0.0
    %1607 = vmatpush1.msra.mxu0 0.0
    %1608 = vmatprep.subr.mxu0 0.0
    %1609 = vmatpush1.msra.mxu0 0.0
    %1610 = vmatprep.subr.mxu0 0.0
    %1611 = vmatpush1.msra.mxu0 0.0
    %1612 = vmatprep.subr.mxu0 0.0
    %1613 = vmatpush1.msra.mxu0 0.0
    %1614 = vmatprep.subr.mxu0 0.0
    %1615 = vmatpush1.msra.mxu0 0.0
    %1616 = vmatprep.subr.mxu0 0.0
    %1617 = vmatpush1.msra.mxu0 0.0
    %1618 = vmatprep.subr.mxu0 0.0
    %1619 = vmatpush1.msra.mxu0 0.0
    %1620 = vmatprep.subr.mxu0 0.0
    %1621 = vmatpush1.msra.mxu0 0.0
    %1622 = vmatprep.subr.mxu0 0.0
    %1623 = vmatpush1.msra.mxu0 0.0
    %1624 = vmatprep.subr.mxu0 0.0
    %1625 = vmatpush1.msra.mxu0 0.0
    %1626 = vmatprep.subr.mxu0 0.0
    %1627 = vmatpush1.msra.mxu0 0.0
    %1628 = vmatprep.subr.mxu0 0.0
    %1629 = vmatpush1.msra.mxu0 0.0
    %1630 = vmatprep.subr.mxu0 0.0
    %1631 = vmatpush1.msra.mxu0 0.0
    %1632 = vmatprep.subr.mxu0 0.0
    %1633 = vmatpush1.msra.mxu0 0.0
    %1634 = vmatprep.subr.mxu0 0.0
    %1635 = vmatpush1.msra.mxu0 0.0
    %1636 = vmatprep.subr.mxu0 0.0
    %1637 = vmatpush1.msra.mxu0 0.0
    %1638 = vmatprep.subr.mxu0 0.0
    %1639 = vmatpush1.msra.mxu0 0.0
    %1640 = vmatprep.subr.mxu0 0.0
    %1641 = vmatpush1.msra.mxu0 0.0
    %1642 = vmatprep.subr.mxu0 0.0
    %1643 = vmatpush1.msra.mxu0 0.0
    %1644 = vmatprep.subr.mxu0 0.0
    %1645 = vmatpush1.msra.mxu0 0.0
    %1646 = vmatprep.subr.mxu0 0.0
    %1647 = vmatpush1.msra.mxu0 0.0
    %1648 = vmatprep.subr.mxu0 0.0
    %1649 = vmatpush1.msra.mxu0 0.0
    %1650 = vmatprep.subr.mxu0 0.0
    %1651 = vmatpush1.msra.mxu0 0.0
    %1652 = vmatprep.subr.mxu0 0.0
    %1653 = vmatpush1.msra.mxu0 0.0
    %1654 = vmatprep.subr.mxu0 0.0
    %1655 = vmatpush1.msra.mxu0 0.0
    %1656 = vmatprep.subr.mxu0 0.0
    %1657 = vmatpush1.msra.mxu0 0.0
    %1658 = vmatprep.subr.mxu0 0.0
    %1659 = vmatpush1.msra.mxu0 0.0
    %1660 = vmatprep.subr.mxu0 0.0
    %1661 = vmatpush1.msra.mxu0 0.0
    %1662 = vmatprep.subr.mxu0 0.0
    %1663 = vmatpush1.msra.mxu0 0.0
    %1664 = vmatprep.mubr.f32.mxu0 0.0
    %1665 = vmatmul.mubr.f32.gmra.mrb[0].mxu0 %v1598
    %v1666 = vpop.f32.mrb[0].mxu0
    %v1667 = vadd.f32 0.0, %v1666
    %v1668 = vpop.f32.mrb[0].mxu0
    %1669 = vdwg.mxu0
    %1670 = vrot.lane.b32.xlu0 %v160, 64
    %v1671 = vpop.permute.xlu0 %1670
    %v1674 = vsel %vm203, %v1579, 0
    %1676 = vmatprep.subr.mxu0 0.0
    %1677 = vmatpush1.msra.mxu0 %v1671
    %1678 = vmatprep.subr.mxu0 0.0
    %1679 = vmatpush1.msra.mxu0 0.0
    %1680 = vmatprep.subr.mxu0 0.0
    %1681 = vmatpush1.msra.mxu0 0.0
    %1682 = vmatprep.subr.mxu0 0.0
    %1683 = vmatpush1.msra.mxu0 0.0
    %1684 = vmatprep.subr.mxu0 0.0
    %1685 = vmatpush1.msra.mxu0 0.0
    %1686 = vmatprep.subr.mxu0 0.0
    %1687 = vmatpush1.msra.mxu0 0.0
    %1688 = vmatprep.subr.mxu0 0.0
    %1689 = vmatpush1.msra.mxu0 0.0
    %1690 = vmatprep.subr.mxu0 0.0
    %1691 = vmatpush1.msra.mxu0 0.0
    %1692 = vmatprep.subr.mxu0 0.0
    %1693 = vmatpush1.msra.mxu0 0.0
    %1694 = vmatprep.subr.mxu0 0.0
    %1695 = vmatpush1.msra.mxu0 0.0
    %1696 = vmatprep.subr.mxu0 0.0
    %1697 = vmatpush1.msra.mxu0 0.0
    %1698 = vmatprep.subr.mxu0 0.0
    %1699 = vmatpush1.msra.mxu0 0.0
    %1700 = vmatprep.subr.mxu0 0.0
    %1701 = vmatpush1.msra.mxu0 0.0
    %1702 = vmatprep.subr.mxu0 0.0
    %1703 = vmatpush1.msra.mxu0 0.0
    %1704 = vmatprep.subr.mxu0 0.0
    %1705 = vmatpush1.msra.mxu0 0.0
    %1706 = vmatprep.subr.mxu0 0.0
    %1707 = vmatpush1.msra.mxu0 0.0
    %1708 = vmatprep.subr.mxu0 0.0
    %1709 = vmatpush1.msra.mxu0 0.0
    %1710 = vmatprep.subr.mxu0 0.0
    %1711 = vmatpush1.msra.mxu0 0.0
    %1712 = vmatprep.subr.mxu0 0.0
    %1713 = vmatpush1.msra.mxu0 0.0
    %1714 = vmatprep.subr.mxu0 0.0
    %1715 = vmatpush1.msra.mxu0 0.0
    %1716 = vmatprep.subr.mxu0 0.0
    %1717 = vmatpush1.msra.mxu0 0.0
    %1718 = vmatprep.subr.mxu0 0.0
    %1719 = vmatpush1.msra.mxu0 0.0
    %1720 = vmatprep.subr.mxu0 0.0
    %1721 = vmatpush1.msra.mxu0 0.0
    %1722 = vmatprep.subr.mxu0 0.0
    %1723 = vmatpush1.msra.mxu0 0.0
    %1724 = vmatprep.subr.mxu0 0.0
    %1725 = vmatpush1.msra.mxu0 0.0
    %1726 = vmatprep.subr.mxu0 0.0
    %1727 = vmatpush1.msra.mxu0 0.0
    %1728 = vmatprep.subr.mxu0 0.0
    %1729 = vmatpush1.msra.mxu0 0.0
    %1730 = vmatprep.subr.mxu0 0.0
    %1731 = vmatpush1.msra.mxu0 0.0
    %1732 = vmatprep.subr.mxu0 0.0
    %1733 = vmatpush1.msra.mxu0 0.0
    %1734 = vmatprep.subr.mxu0 0.0
    %1735 = vmatpush1.msra.mxu0 0.0
    %1736 = vmatprep.subr.mxu0 0.0
    %1737 = vmatpush1.msra.mxu0 0.0
    %1738 = vmatprep.subr.mxu0 0.0
    %1739 = vmatpush1.msra.mxu0 0.0
    %1740 = vmatprep.mubr.f32.mxu0 0.0
    %1741 = vmatmul.mubr.f32.gmra.mrb[0].mxu0 %v1674
    %v1742 = vpop.f32.mrb[0].mxu0
    %v1743 = vadd.f32 0.0, %v1742
    %v1744 = vpop.f32.mrb[0].mxu0
    %1745 = vdwg.mxu0
    %1746 = vrot.lane.b32.xlu0 %v165, 64
    %v1747 = vpop.permute.xlu0 %1746
    %v1750 = vsel %vm203, %v1580, 0
    %1752 = vmatprep.subr.mxu0 0.0
    %1753 = vmatpush1.msra.mxu0 %v1747
    %1754 = vmatprep.subr.mxu0 0.0
    %1755 = vmatpush1.msra.mxu0 0.0
    %1756 = vmatprep.subr.mxu0 0.0
    %1757 = vmatpush1.msra.mxu0 0.0
    %1758 = vmatprep.subr.mxu0 0.0
    %1759 = vmatpush1.msra.mxu0 0.0
    %1760 = vmatprep.subr.mxu0 0.0
    %1761 = vmatpush1.msra.mxu0 0.0
    %1762 = vmatprep.subr.mxu0 0.0
    %1763 = vmatpush1.msra.mxu0 0.0
    %1764 = vmatprep.subr.mxu0 0.0
    %1765 = vmatpush1.msra.mxu0 0.0
    %1766 = vmatprep.subr.mxu0 0.0
    %1767 = vmatpush1.msra.mxu0 0.0
    %1768 = vmatprep.subr.mxu0 0.0
    %1769 = vmatpush1.msra.mxu0 0.0
    %1770 = vmatprep.subr.mxu0 0.0
    %1771 = vmatpush1.msra.mxu0 0.0
    %1772 = vmatprep.subr.mxu0 0.0
    %1773 = vmatpush1.msra.mxu0 0.0
    %1774 = vmatprep.subr.mxu0 0.0
    %1775 = vmatpush1.msra.mxu0 0.0
    %1776 = vmatprep.subr.mxu0 0.0
    %1777 = vmatpush1.msra.mxu0 0.0
    %1778 = vmatprep.subr.mxu0 0.0
    %1779 = vmatpush1.msra.mxu0 0.0
    %1780 = vmatprep.subr.mxu0 0.0
    %1781 = vmatpush1.msra.mxu0 0.0
    %1782 = vmatprep.subr.mxu0 0.0
    %1783 = vmatpush1.msra.mxu0 0.0
    %1784 = vmatprep.subr.mxu0 0.0
    %1785 = vmatpush1.msra.mxu0 0.0
    %1786 = vmatprep.subr.mxu0 0.0
    %1787 = vmatpush1.msra.mxu0 0.0
    %1788 = vmatprep.subr.mxu0 0.0
    %1789 = vmatpush1.msra.mxu0 0.0
    %1790 = vmatprep.subr.mxu0 0.0
    %1791 = vmatpush1.msra.mxu0 0.0
    %1792 = vmatprep.subr.mxu0 0.0
    %1793 = vmatpush1.msra.mxu0 0.0
    %1794 = vmatprep.subr.mxu0 0.0
    %1795 = vmatpush1.msra.mxu0 0.0
    %1796 = vmatprep.subr.mxu0 0.0
    %1797 = vmatpush1.msra.mxu0 0.0
    %1798 = vmatprep.subr.mxu0 0.0
    %1799 = vmatpush1.msra.mxu0 0.0
    %1800 = vmatprep.subr.mxu0 0.0
    %1801 = vmatpush1.msra.mxu0 0.0
    %1802 = vmatprep.subr.mxu0 0.0
    %1803 = vmatpush1.msra.mxu0 0.0
    %1804 = vmatprep.subr.mxu0 0.0
    %1805 = vmatpush1.msra.mxu0 0.0
    %1806 = vmatprep.subr.mxu0 0.0
    %1807 = vmatpush1.msra.mxu0 0.0
    %1808 = vmatprep.subr.mxu0 0.0
    %1809 = vmatpush1.msra.mxu0 0.0
    %1810 = vmatprep.subr.mxu0 0.0
    %1811 = vmatpush1.msra.mxu0 0.0
    %1812 = vmatprep.subr.mxu0 0.0
    %1813 = vmatpush1.msra.mxu0 0.0
    %1814 = vmatprep.subr.mxu0 0.0
    %1815 = vmatpush1.msra.mxu0 0.0
    %1816 = vmatprep.mubr.f32.mxu0 0.0
    %1817 = vmatmul.mubr.f32.gmra.mrb[0].mxu0 %v1750
    %v1818 = vpop.f32.mrb[0].mxu0
    %v1819 = vadd.f32 0.0, %v1818
    %v1820 = vpop.f32.mrb[0].mxu0
    %1821 = vdwg.mxu0
    %1822 = vrot.lane.b32.xlu0 %v170, 64
    %v1823 = vpop.permute.xlu0 %1822
    %v1826 = vsel %vm203, %v1581, 0
    %1828 = vmatprep.subr.mxu0 0.0
    %1829 = vmatpush1.msra.mxu0 %v1823
    %1830 = vmatprep.subr.mxu0 0.0
    %1831 = vmatpush1.msra.mxu0 0.0
    %1832 = vmatprep.subr.mxu0 0.0
    %1833 = vmatpush1.msra.mxu0 0.0
    %1834 = vmatprep.subr.mxu0 0.0
    %1835 = vmatpush1.msra.mxu0 0.0
    %1836 = vmatprep.subr.mxu0 0.0
    %1837 = vmatpush1.msra.mxu0 0.0
    %1838 = vmatprep.subr.mxu0 0.0
    %1839 = vmatpush1.msra.mxu0 0.0
    %1840 = vmatprep.subr.mxu0 0.0
    %1841 = vmatpush1.msra.mxu0 0.0
    %1842 = vmatprep.subr.mxu0 0.0
    %1843 = vmatpush1.msra.mxu0 0.0
    %1844 = vmatprep.subr.mxu0 0.0
    %1845 = vmatpush1.msra.mxu0 0.0
    %1846 = vmatprep.subr.mxu0 0.0
    %1847 = vmatpush1.msra.mxu0 0.0
    %1848 = vmatprep.subr.mxu0 0.0
    %1849 = vmatpush1.msra.mxu0 0.0
    %1850 = vmatprep.subr.mxu0 0.0
    %1851 = vmatpush1.msra.mxu0 0.0
    %1852 = vmatprep.subr.mxu0 0.0
    %1853 = vmatpush1.msra.mxu0 0.0
    %1854 = vmatprep.subr.mxu0 0.0
    %1855 = vmatpush1.msra.mxu0 0.0
    %1856 = vmatprep.subr.mxu0 0.0
    %1857 = vmatpush1.msra.mxu0 0.0
    %1858 = vmatprep.subr.mxu0 0.0
    %1859 = vmatpush1.msra.mxu0 0.0
    %1860 = vmatprep.subr.mxu0 0.0
    %1861 = vmatpush1.msra.mxu0 0.0
    %1862 = vmatprep.subr.mxu0 0.0
    %1863 = vmatpush1.msra.mxu0 0.0
    %1864 = vmatprep.subr.mxu0 0.0
    %1865 = vmatpush1.msra.mxu0 0.0
    %1866 = vmatprep.subr.mxu0 0.0
    %1867 = vmatpush1.msra.mxu0 0.0
    %1868 = vmatprep.subr.mxu0 0.0
    %1869 = vmatpush1.msra.mxu0 0.0
    %1870 = vmatprep.subr.mxu0 0.0
    %1871 = vmatpush1.msra.mxu0 0.0
    %1872 = vmatprep.subr.mxu0 0.0
    %1873 = vmatpush1.msra.mxu0 0.0
    %1874 = vmatprep.subr.mxu0 0.0
    %1875 = vmatpush1.msra.mxu0 0.0
    %1876 = vmatprep.subr.mxu0 0.0
    %1877 = vmatpush1.msra.mxu0 0.0
    %1878 = vmatprep.subr.mxu0 0.0
    %1879 = vmatpush1.msra.mxu0 0.0
    %1880 = vmatprep.subr.mxu0 0.0
    %1881 = vmatpush1.msra.mxu0 0.0
    %1882 = vmatprep.subr.mxu0 0.0
    %1883 = vmatpush1.msra.mxu0 0.0
    %1884 = vmatprep.subr.mxu0 0.0
    %1885 = vmatpush1.msra.mxu0 0.0
    %1886 = vmatprep.subr.mxu0 0.0
    %1887 = vmatpush1.msra.mxu0 0.0
    %1888 = vmatprep.subr.mxu0 0.0
    %1889 = vmatpush1.msra.mxu0 0.0
    %1890 = vmatprep.subr.mxu0 0.0
    %1891 = vmatpush1.msra.mxu0 0.0
    %1892 = vmatprep.mubr.f32.mxu0 0.0
    %1893 = vmatmul.mubr.f32.gmra.mrb[0].mxu0 %v1826
    %v1894 = vpop.f32.mrb[0].mxu0
    %v1895 = vadd.f32 0.0, %v1894
    %v1896 = vpop.f32.mrb[0].mxu0
    %1897 = vdwg.mxu0
    %1898 = vrot.lane.b32.xlu0 %v178, 64
    %v1899 = vpop.permute.xlu0 %1898
    %v1902 = vsel %vm203, %v1582, 0
    %1904 = vmatprep.subr.mxu0 0.0
    %1905 = vmatpush1.msra.mxu0 %v1899
    %1906 = vmatprep.subr.mxu0 0.0
    %1907 = vmatpush1.msra.mxu0 0.0
    %1908 = vmatprep.subr.mxu0 0.0
    %1909 = vmatpush1.msra.mxu0 0.0
    %1910 = vmatprep.subr.mxu0 0.0
    %1911 = vmatpush1.msra.mxu0 0.0
    %1912 = vmatprep.subr.mxu0 0.0
    %1913 = vmatpush1.msra.mxu0 0.0
    %1914 = vmatprep.subr.mxu0 0.0
    %1915 = vmatpush1.msra.mxu0 0.0
    %1916 = vmatprep.subr.mxu0 0.0
    %1917 = vmatpush1.msra.mxu0 0.0
    %1918 = vmatprep.subr.mxu0 0.0
    %1919 = vmatpush1.msra.mxu0 0.0
    %1920 = vmatprep.subr.mxu0 0.0
    %1921 = vmatpush1.msra.mxu0 0.0
    %1922 = vmatprep.subr.mxu0 0.0
    %1923 = vmatpush1.msra.mxu0 0.0
    %1924 = vmatprep.subr.mxu0 0.0
    %1925 = vmatpush1.msra.mxu0 0.0
    %1926 = vmatprep.subr.mxu0 0.0
    %1927 = vmatpush1.msra.mxu0 0.0
    %1928 = vmatprep.subr.mxu0 0.0
    %1929 = vmatpush1.msra.mxu0 0.0
    %1930 = vmatprep.subr.mxu0 0.0
    %1931 = vmatpush1.msra.mxu0 0.0
    %1932 = vmatprep.subr.mxu0 0.0
    %1933 = vmatpush1.msra.mxu0 0.0
    %1934 = vmatprep.subr.mxu0 0.0
    %1935 = vmatpush1.msra.mxu0 0.0
    %1936 = vmatprep.subr.mxu0 0.0
    %1937 = vmatpush1.msra.mxu0 0.0
    %1938 = vmatprep.subr.mxu0 0.0
    %1939 = vmatpush1.msra.mxu0 0.0
    %1940 = vmatprep.subr.mxu0 0.0
    %1941 = vmatpush1.msra.mxu0 0.0
    %1942 = vmatprep.subr.mxu0 0.0
    %1943 = vmatpush1.msra.mxu0 0.0
    %1944 = vmatprep.subr.mxu0 0.0
    %1945 = vmatpush1.msra.mxu0 0.0
    %1946 = vmatprep.subr.mxu0 0.0
    %1947 = vmatpush1.msra.mxu0 0.0
    %1948 = vmatprep.subr.mxu0 0.0
    %1949 = vmatpush1.msra.mxu0 0.0
    %1950 = vmatprep.subr.mxu0 0.0
    %1951 = vmatpush1.msra.mxu0 0.0
    %1952 = vmatprep.subr.mxu0 0.0
    %1953 = vmatpush1.msra.mxu0 0.0
    %1954 = vmatprep.subr.mxu0 0.0
    %1955 = vmatpush1.msra.mxu0 0.0
    %1956 = vmatprep.subr.mxu0 0.0
    %1957 = vmatpush1.msra.mxu0 0.0
    %1958 = vmatprep.subr.mxu0 0.0
    %1959 = vmatpush1.msra.mxu0 0.0
    %1960 = vmatprep.subr.mxu0 0.0
    %1961 = vmatpush1.msra.mxu0 0.0
    %1962 = vmatprep.subr.mxu0 0.0
    %1963 = vmatpush1.msra.mxu0 0.0
    %1964 = vmatprep.subr.mxu0 0.0
    %1965 = vmatpush1.msra.mxu0 0.0
    %1966 = vmatprep.subr.mxu0 0.0
    %1967 = vmatpush1.msra.mxu0 0.0
    %1968 = vmatprep.mubr.f32.mxu0 0.0
    %1969 = vmatmul.mubr.f32.gmra.mrb[0].mxu0 %v1902
    %v1970 = vpop.f32.mrb[0].mxu0
    %v1971 = vadd.f32 0.0, %v1970
    %v1972 = vpop.f32.mrb[0].mxu0
    %1973 = vdwg.mxu0
    %1974 = vrot.lane.b32.xlu0 %v180, 64
    %v1975 = vpop.permute.xlu0 %1974
    %v1978 = vsel %vm203, %v1583, 0
    %1980 = vmatprep.subr.mxu0 0.0
    %1981 = vmatpush1.msra.mxu0 %v1975
    %1982 = vmatprep.subr.mxu0 0.0
    %1983 = vmatpush1.msra.mxu0 0.0
    %1984 = vmatprep.subr.mxu0 0.0
    %1985 = vmatpush1.msra.mxu0 0.0
    %1986 = vmatprep.subr.mxu0 0.0
    %1987 = vmatpush1.msra.mxu0 0.0
    %1988 = vmatprep.subr.mxu0 0.0
    %1989 = vmatpush1.msra.mxu0 0.0
    %1990 = vmatprep.subr.mxu0 0.0
    %1991 = vmatpush1.msra.mxu0 0.0
    %1992 = vmatprep.subr.mxu0 0.0
    %1993 = vmatpush1.msra.mxu0 0.0
    %1994 = vmatprep.subr.mxu0 0.0
    %1995 = vmatpush1.msra.mxu0 0.0
    %1996 = vmatprep.subr.mxu0 0.0
    %1997 = vmatpush1.msra.mxu0 0.0
    %1998 = vmatprep.subr.mxu0 0.0
    %1999 = vmatpush1.msra.mxu0 0.0
    %2000 = vmatprep.subr.mxu0 0.0
    %2001 = vmatpush1.msra.mxu0 0.0
    %2002 = vmatprep.subr.mxu0 0.0
    %2003 = vmatpush1.msra.mxu0 0.0
    %2004 = vmatprep.subr.mxu0 0.0
    %2005 = vmatpush1.msra.mxu0 0.0
    %2006 = vmatprep.subr.mxu0 0.0
    %2007 = vmatpush1.msra.mxu0 0.0
    %2008 = vmatprep.subr.mxu0 0.0
    %2009 = vmatpush1.msra.mxu0 0.0
    %2010 = vmatprep.subr.mxu0 0.0
    %2011 = vmatpush1.msra.mxu0 0.0
    %2012 = vmatprep.subr.mxu0 0.0
    %2013 = vmatpush1.msra.mxu0 0.0
    %2014 = vmatprep.subr.mxu0 0.0
    %2015 = vmatpush1.msra.mxu0 0.0
    %2016 = vmatprep.subr.mxu0 0.0
    %2017 = vmatpush1.msra.mxu0 0.0
    %2018 = vmatprep.subr.mxu0 0.0
    %2019 = vmatpush1.msra.mxu0 0.0
    %2020 = vmatprep.subr.mxu0 0.0
    %2021 = vmatpush1.msra.mxu0 0.0
    %2022 = vmatprep.subr.mxu0 0.0
    %2023 = vmatpush1.msra.mxu0 0.0
    %2024 = vmatprep.subr.mxu0 0.0
    %2025 = vmatpush1.msra.mxu0 0.0
    %2026 = vmatprep.subr.mxu0 0.0
    %2027 = vmatpush1.msra.mxu0 0.0
    %2028 = vmatprep.subr.mxu0 0.0
    %2029 = vmatpush1.msra.mxu0 0.0
    %2030 = vmatprep.subr.mxu0 0.0
    %2031 = vmatpush1.msra.mxu0 0.0
    %2032 = vmatprep.subr.mxu0 0.0
    %2033 = vmatpush1.msra.mxu0 0.0
    %2034 = vmatprep.subr.mxu0 0.0
    %2035 = vmatpush1.msra.mxu0 0.0
    %2036 = vmatprep.subr.mxu0 0.0
    %2037 = vmatpush1.msra.mxu0 0.0
    %2038 = vmatprep.subr.mxu0 0.0
    %2039 = vmatpush1.msra.mxu0 0.0
    %2040 = vmatprep.subr.mxu0 0.0
    %2041 = vmatpush1.msra.mxu0 0.0
    %2042 = vmatprep.subr.mxu0 0.0
    %2043 = vmatpush1.msra.mxu0 0.0
    %2044 = vmatprep.mubr.f32.mxu0 0.0
    %2045 = vmatmul.mubr.f32.gmra.mrb[0].mxu0 %v1978
    %v2046 = vpop.f32.mrb[0].mxu0
    %v2047 = vadd.f32 0.0, %v2046
    %v2048 = vpop.f32.mrb[0].mxu0
    %2049 = vdwg.mxu0
    %2050 = vrot.lane.b32.xlu0 %v182, 64
    %v2051 = vpop.permute.xlu0 %2050
    %v2054 = vsel %vm203, %v1584, 0
    %2056 = vmatprep.subr.mxu0 0.0
    %2057 = vmatpush1.msra.mxu0 %v2051
    %2058 = vmatprep.subr.mxu0 0.0
    %2059 = vmatpush1.msra.mxu0 0.0
    %2060 = vmatprep.subr.mxu0 0.0
    %2061 = vmatpush1.msra.mxu0 0.0
    %2062 = vmatprep.subr.mxu0 0.0
    %2063 = vmatpush1.msra.mxu0 0.0
    %2064 = vmatprep.subr.mxu0 0.0
    %2065 = vmatpush1.msra.mxu0 0.0
    %2066 = vmatprep.subr.mxu0 0.0
    %2067 = vmatpush1.msra.mxu0 0.0
    %2068 = vmatprep.subr.mxu0 0.0
    %2069 = vmatpush1.msra.mxu0 0.0
    %2070 = vmatprep.subr.mxu0 0.0
    %2071 = vmatpush1.msra.mxu0 0.0
    %2072 = vmatprep.subr.mxu0 0.0
    %2073 = vmatpush1.msra.mxu0 0.0
    %2074 = vmatprep.subr.mxu0 0.0
    %2075 = vmatpush1.msra.mxu0 0.0
    %2076 = vmatprep.subr.mxu0 0.0
    %2077 = vmatpush1.msra.mxu0 0.0
    %2078 = vmatprep.subr.mxu0 0.0
    %2079 = vmatpush1.msra.mxu0 0.0
    %2080 = vmatprep.subr.mxu0 0.0
    %2081 = vmatpush1.msra.mxu0 0.0
    %2082 = vmatprep.subr.mxu0 0.0
    %2083 = vmatpush1.msra.mxu0 0.0
    %2084 = vmatprep.subr.mxu0 0.0
    %2085 = vmatpush1.msra.mxu0 0.0
    %2086 = vmatprep.subr.mxu0 0.0
    %2087 = vmatpush1.msra.mxu0 0.0
    %2088 = vmatprep.subr.mxu0 0.0
    %2089 = vmatpush1.msra.mxu0 0.0
    %2090 = vmatprep.subr.mxu0 0.0
    %2091 = vmatpush1.msra.mxu0 0.0
    %2092 = vmatprep.subr.mxu0 0.0
    %2093 = vmatpush1.msra.mxu0 0.0
    %2094 = vmatprep.subr.mxu0 0.0
    %2095 = vmatpush1.msra.mxu0 0.0
    %2096 = vmatprep.subr.mxu0 0.0
    %2097 = vmatpush1.msra.mxu0 0.0
    %2098 = vmatprep.subr.mxu0 0.0
    %2099 = vmatpush1.msra.mxu0 0.0
    %2100 = vmatprep.subr.mxu0 0.0
    %2101 = vmatpush1.msra.mxu0 0.0
    %2102 = vmatprep.subr.mxu0 0.0
    %2103 = vmatpush1.msra.mxu0 0.0
    %2104 = vmatprep.subr.mxu0 0.0
    %2105 = vmatpush1.msra.mxu0 0.0
    %2106 = vmatprep.subr.mxu0 0.0
    %2107 = vmatpush1.msra.mxu0 0.0
    %2108 = vmatprep.subr.mxu0 0.0
    %2109 = vmatpush1.msra.mxu0 0.0
    %2110 = vmatprep.subr.mxu0 0.0
    %2111 = vmatpush1.msra.mxu0 0.0
    %2112 = vmatprep.subr.mxu0 0.0
    %2113 = vmatpush1.msra.mxu0 0.0
    %2114 = vmatprep.subr.mxu0 0.0
    %2115 = vmatpush1.msra.mxu0 0.0
    %2116 = vmatprep.subr.mxu0 0.0
    %2117 = vmatpush1.msra.mxu0 0.0
    %2118 = vmatprep.subr.mxu0 0.0
    %2119 = vmatpush1.msra.mxu0 0.0
    %2120 = vmatprep.mubr.f32.mxu0 0.0
    %2121 = vmatmul.mubr.f32.gmra.mrb[0].mxu0 %v2054
    %v2122 = vpop.f32.mrb[0].mxu0
    %v2123 = vadd.f32 0.0, %v2122
    %v2124 = vpop.f32.mrb[0].mxu0
    %2125 = vdwg.mxu0
    %2126 = vrot.lane.b32.xlu0 %v184, 64
    %v2127 = vpop.permute.xlu0 %2126
    %v2130 = vsel %vm203, %v1585, 0
    %2132 = vmatprep.subr.mxu0 0.0
    %2133 = vmatpush1.msra.mxu0 %v2127
    %2134 = vmatprep.subr.mxu0 0.0
    %2135 = vmatpush1.msra.mxu0 0.0
    %2136 = vmatprep.subr.mxu0 0.0
    %2137 = vmatpush1.msra.mxu0 0.0
    %2138 = vmatprep.subr.mxu0 0.0
    %2139 = vmatpush1.msra.mxu0 0.0
    %2140 = vmatprep.subr.mxu0 0.0
    %2141 = vmatpush1.msra.mxu0 0.0
    %2142 = vmatprep.subr.mxu0 0.0
    %2143 = vmatpush1.msra.mxu0 0.0
    %2144 = vmatprep.subr.mxu0 0.0
    %2145 = vmatpush1.msra.mxu0 0.0
    %2146 = vmatprep.subr.mxu0 0.0
    %2147 = vmatpush1.msra.mxu0 0.0
    %2148 = vmatprep.subr.mxu0 0.0
    %2149 = vmatpush1.msra.mxu0 0.0
    %2150 = vmatprep.subr.mxu0 0.0
    %2151 = vmatpush1.msra.mxu0 0.0
    %2152 = vmatprep.subr.mxu0 0.0
    %2153 = vmatpush1.msra.mxu0 0.0
    %2154 = vmatprep.subr.mxu0 0.0
    %2155 = vmatpush1.msra.mxu0 0.0
    %2156 = vmatprep.subr.mxu0 0.0
    %2157 = vmatpush1.msra.mxu0 0.0
    %2158 = vmatprep.subr.mxu0 0.0
    %2159 = vmatpush1.msra.mxu0 0.0
    %2160 = vmatprep.subr.mxu0 0.0
    %2161 = vmatpush1.msra.mxu0 0.0
    %2162 = vmatprep.subr.mxu0 0.0
    %2163 = vmatpush1.msra.mxu0 0.0
    %2164 = vmatprep.subr.mxu0 0.0
    %2165 = vmatpush1.msra.mxu0 0.0
    %2166 = vmatprep.subr.mxu0 0.0
    %2167 = vmatpush1.msra.mxu0 0.0
    %2168 = vmatprep.subr.mxu0 0.0
    %2169 = vmatpush1.msra.mxu0 0.0
    %2170 = vmatprep.subr.mxu0 0.0
    %2171 = vmatpush1.msra.mxu0 0.0
    %2172 = vmatprep.subr.mxu0 0.0
    %2173 = vmatpush1.msra.mxu0 0.0
    %2174 = vmatprep.subr.mxu0 0.0
    %2175 = vmatpush1.msra.mxu0 0.0
    %2176 = vmatprep.subr.mxu0 0.0
    %2177 = vmatpush1.msra.mxu0 0.0
    %2178 = vmatprep.subr.mxu0 0.0
    %2179 = vmatpush1.msra.mxu0 0.0
    %2180 = vmatprep.subr.mxu0 0.0
    %2181 = vmatpush1.msra.mxu0 0.0
    %2182 = vmatprep.subr.mxu0 0.0
    %2183 = vmatpush1.msra.mxu0 0.0
    %2184 = vmatprep.subr.mxu0 0.0
    %2185 = vmatpush1.msra.mxu0 0.0
    %2186 = vmatprep.subr.mxu0 0.0
    %2187 = vmatpush1.msra.mxu0 0.0
    %2188 = vmatprep.subr.mxu0 0.0
    %2189 = vmatpush1.msra.mxu0 0.0
    %2190 = vmatprep.subr.mxu0 0.0
    %2191 = vmatpush1.msra.mxu0 0.0
    %2192 = vmatprep.subr.mxu0 0.0
    %2193 = vmatpush1.msra.mxu0 0.0
    %2194 = vmatprep.subr.mxu0 0.0
    %2195 = vmatpush1.msra.mxu0 0.0
    %2196 = vmatprep.mubr.f32.mxu0 0.0
    %2197 = vmatmul.mubr.f32.gmra.mrb[0].mxu0 %v2130
    %v2198 = vpop.f32.mrb[0].mxu0
    %v2199 = vadd.f32 0.0, %v2198
    %v2200 = vpop.f32.mrb[0].mxu0
    %2201 = vdwg.mxu0
    %2202 = vrot.lane.b32.xlu0 %v186, 64
    %v2203 = vpop.permute.xlu0 %2202
    %v2206 = vsel %vm203, %v1586, 0
    %2208 = vmatprep.subr.mxu0 0.0
    %2209 = vmatpush1.msra.mxu0 %v2203
    %2210 = vmatprep.subr.mxu0 0.0
    %2211 = vmatpush1.msra.mxu0 0.0
    %2212 = vmatprep.subr.mxu0 0.0
    %2213 = vmatpush1.msra.mxu0 0.0
    %2214 = vmatprep.subr.mxu0 0.0
    %2215 = vmatpush1.msra.mxu0 0.0
    %2216 = vmatprep.subr.mxu0 0.0
    %2217 = vmatpush1.msra.mxu0 0.0
    %2218 = vmatprep.subr.mxu0 0.0
    %2219 = vmatpush1.msra.mxu0 0.0
    %2220 = vmatprep.subr.mxu0 0.0
    %2221 = vmatpush1.msra.mxu0 0.0
    %2222 = vmatprep.subr.mxu0 0.0
    %2223 = vmatpush1.msra.mxu0 0.0
    %2224 = vmatprep.subr.mxu0 0.0
    %2225 = vmatpush1.msra.mxu0 0.0
    %2226 = vmatprep.subr.mxu0 0.0
    %2227 = vmatpush1.msra.mxu0 0.0
    %2228 = vmatprep.subr.mxu0 0.0
    %2229 = vmatpush1.msra.mxu0 0.0
    %2230 = vmatprep.subr.mxu0 0.0
    %2231 = vmatpush1.msra.mxu0 0.0
    %2232 = vmatprep.subr.mxu0 0.0
    %2233 = vmatpush1.msra.mxu0 0.0
    %2234 = vmatprep.subr.mxu0 0.0
    %2235 = vmatpush1.msra.mxu0 0.0
    %2236 = vmatprep.subr.mxu0 0.0
    %2237 = vmatpush1.msra.mxu0 0.0
    %2238 = vmatprep.subr.mxu0 0.0
    %2239 = vmatpush1.msra.mxu0 0.0
    %2240 = vmatprep.subr.mxu0 0.0
    %2241 = vmatpush1.msra.mxu0 0.0
    %2242 = vmatprep.subr.mxu0 0.0
    %2243 = vmatpush1.msra.mxu0 0.0
    %2244 = vmatprep.subr.mxu0 0.0
    %2245 = vmatpush1.msra.mxu0 0.0
    %2246 = vmatprep.subr.mxu0 0.0
    %2247 = vmatpush1.msra.mxu0 0.0
    %2248 = vmatprep.subr.mxu0 0.0
    %2249 = vmatpush1.msra.mxu0 0.0
    %2250 = vmatprep.subr.mxu0 0.0
    %2251 = vmatpush1.msra.mxu0 0.0
    %2252 = vmatprep.subr.mxu0 0.0
    %2253 = vmatpush1.msra.mxu0 0.0
    %2254 = vmatprep.subr.mxu0 0.0
    %2255 = vmatpush1.msra.mxu0 0.0
    %2256 = vmatprep.subr.mxu0 0.0
    %2257 = vmatpush1.msra.mxu0 0.0
    %2258 = vmatprep.subr.mxu0 0.0
    %2259 = vmatpush1.msra.mxu0 0.0
    %2260 = vmatprep.subr.mxu0 0.0
    %2261 = vmatpush1.msra.mxu0 0.0
    %2262 = vmatprep.subr.mxu0 0.0
    %2263 = vmatpush1.msra.mxu0 0.0
    %2264 = vmatprep.subr.mxu0 0.0
    %2265 = vmatpush1.msra.mxu0 0.0
    %2266 = vmatprep.subr.mxu0 0.0
    %2267 = vmatpush1.msra.mxu0 0.0
    %2268 = vmatprep.subr.mxu0 0.0
    %2269 = vmatpush1.msra.mxu0 0.0
    %2270 = vmatprep.subr.mxu0 0.0
    %2271 = vmatpush1.msra.mxu0 0.0
    %2272 = vmatprep.mubr.f32.mxu0 0.0
    %2273 = vmatmul.mubr.f32.gmra.mrb[0].mxu0 %v2206
    %v2274 = vpop.f32.mrb[0].mxu0
    %v2275 = vadd.f32 0.0, %v2274
    %v2276 = vpop.f32.mrb[0].mxu0
    %2277 = vdwg.mxu0
    %2278 = vrot.lane.b32.xlu0 %v188, 64
    %v2279 = vpop.permute.xlu0 %2278
    %v2282 = vsel %vm203, %v1587, 0
    %2284 = vmatprep.subr.mxu0 0.0
    %2285 = vmatpush1.msra.mxu0 %v2279
    %2286 = vmatprep.subr.mxu0 0.0
    %2287 = vmatpush1.msra.mxu0 0.0
    %2288 = vmatprep.subr.mxu0 0.0
    %2289 = vmatpush1.msra.mxu0 0.0
    %2290 = vmatprep.subr.mxu0 0.0
    %2291 = vmatpush1.msra.mxu0 0.0
    %2292 = vmatprep.subr.mxu0 0.0
    %2293 = vmatpush1.msra.mxu0 0.0
    %2294 = vmatprep.subr.mxu0 0.0
    %2295 = vmatpush1.msra.mxu0 0.0
    %2296 = vmatprep.subr.mxu0 0.0
    %2297 = vmatpush1.msra.mxu0 0.0
    %2298 = vmatprep.subr.mxu0 0.0
    %2299 = vmatpush1.msra.mxu0 0.0
    %2300 = vmatprep.subr.mxu0 0.0
    %2301 = vmatpush1.msra.mxu0 0.0
    %2302 = vmatprep.subr.mxu0 0.0
    %2303 = vmatpush1.msra.mxu0 0.0
    %2304 = vmatprep.subr.mxu0 0.0
    %2305 = vmatpush1.msra.mxu0 0.0
    %2306 = vmatprep.subr.mxu0 0.0
    %2307 = vmatpush1.msra.mxu0 0.0
    %2308 = vmatprep.subr.mxu0 0.0
    %2309 = vmatpush1.msra.mxu0 0.0
    %2310 = vmatprep.subr.mxu0 0.0
    %2311 = vmatpush1.msra.mxu0 0.0
    %2312 = vmatprep.subr.mxu0 0.0
    %2313 = vmatpush1.msra.mxu0 0.0
    %2314 = vmatprep.subr.mxu0 0.0
    %2315 = vmatpush1.msra.mxu0 0.0
    %2316 = vmatprep.subr.mxu0 0.0
    %2317 = vmatpush1.msra.mxu0 0.0
    %2318 = vmatprep.subr.mxu0 0.0
    %2319 = vmatpush1.msra.mxu0 0.0
    %2320 = vmatprep.subr.mxu0 0.0
    %2321 = vmatpush1.msra.mxu0 0.0
    %2322 = vmatprep.subr.mxu0 0.0
    %2323 = vmatpush1.msra.mxu0 0.0
    %2324 = vmatprep.subr.mxu0 0.0
    %2325 = vmatpush1.msra.mxu0 0.0
    %2326 = vmatprep.subr.mxu0 0.0
    %2327 = vmatpush1.msra.mxu0 0.0
    %2328 = vmatprep.subr.mxu0 0.0
    %2329 = vmatpush1.msra.mxu0 0.0
    %2330 = vmatprep.subr.mxu0 0.0
    %2331 = vmatpush1.msra.mxu0 0.0
    %2332 = vmatprep.subr.mxu0 0.0
    %2333 = vmatpush1.msra.mxu0 0.0
    %2334 = vmatprep.subr.mxu0 0.0
    %2335 = vmatpush1.msra.mxu0 0.0
    %2336 = vmatprep.subr.mxu0 0.0
    %2337 = vmatpush1.msra.mxu0 0.0
    %2338 = vmatprep.subr.mxu0 0.0
    %2339 = vmatpush1.msra.mxu0 0.0
    %2340 = vmatprep.subr.mxu0 0.0
    %2341 = vmatpush1.msra.mxu0 0.0
    %2342 = vmatprep.subr.mxu0 0.0
    %2343 = vmatpush1.msra.mxu0 0.0
    %2344 = vmatprep.subr.mxu0 0.0
    %2345 = vmatpush1.msra.mxu0 0.0
    %2346 = vmatprep.subr.mxu0 0.0
    %2347 = vmatpush1.msra.mxu0 0.0
    %2348 = vmatprep.mubr.f32.mxu0 0.0
    %2349 = vmatmul.mubr.f32.gmra.mrb[0].mxu0 %v2282
    %v2350 = vpop.f32.mrb[0].mxu0
    %v2351 = vadd.f32 0.0, %v2350
    %v2352 = vpop.f32.mrb[0].mxu0
    %2353 = vdwg.mxu0
    %2354 = vrot.lane.b32.xlu0 %v190, 64
    %v2355 = vpop.permute.xlu0 %2354
    %v2358 = vsel %vm203, %v1588, 0
    %2360 = vmatprep.subr.mxu0 0.0
    %2361 = vmatpush1.msra.mxu0 %v2355
    %2362 = vmatprep.subr.mxu0 0.0
    %2363 = vmatpush1.msra.mxu0 0.0
    %2364 = vmatprep.subr.mxu0 0.0
    %2365 = vmatpush1.msra.mxu0 0.0
    %2366 = vmatprep.subr.mxu0 0.0
    %2367 = vmatpush1.msra.mxu0 0.0
    %2368 = vmatprep.subr.mxu0 0.0
    %2369 = vmatpush1.msra.mxu0 0.0
    %2370 = vmatprep.subr.mxu0 0.0
    %2371 = vmatpush1.msra.mxu0 0.0
    %2372 = vmatprep.subr.mxu0 0.0
    %2373 = vmatpush1.msra.mxu0 0.0
    %2374 = vmatprep.subr.mxu0 0.0
    %2375 = vmatpush1.msra.mxu0 0.0
    %2376 = vmatprep.subr.mxu0 0.0
    %2377 = vmatpush1.msra.mxu0 0.0
    %2378 = vmatprep.subr.mxu0 0.0
    %2379 = vmatpush1.msra.mxu0 0.0
    %2380 = vmatprep.subr.mxu0 0.0
    %2381 = vmatpush1.msra.mxu0 0.0
    %2382 = vmatprep.subr.mxu0 0.0
    %2383 = vmatpush1.msra.mxu0 0.0
    %2384 = vmatprep.subr.mxu0 0.0
    %2385 = vmatpush1.msra.mxu0 0.0
    %2386 = vmatprep.subr.mxu0 0.0
    %2387 = vmatpush1.msra.mxu0 0.0
    %2388 = vmatprep.subr.mxu0 0.0
    %2389 = vmatpush1.msra.mxu0 0.0
    %2390 = vmatprep.subr.mxu0 0.0
    %2391 = vmatpush1.msra.mxu0 0.0
    %2392 = vmatprep.subr.mxu0 0.0
    %2393 = vmatpush1.msra.mxu0 0.0
    %2394 = vmatprep.subr.mxu0 0.0
    %2395 = vmatpush1.msra.mxu0 0.0
    %2396 = vmatprep.subr.mxu0 0.0
    %2397 = vmatpush1.msra.mxu0 0.0
    %2398 = vmatprep.subr.mxu0 0.0
    %2399 = vmatpush1.msra.mxu0 0.0
    %2400 = vmatprep.subr.mxu0 0.0
    %2401 = vmatpush1.msra.mxu0 0.0
    %2402 = vmatprep.subr.mxu0 0.0
    %2403 = vmatpush1.msra.mxu0 0.0
    %2404 = vmatprep.subr.mxu0 0.0
    %2405 = vmatpush1.msra.mxu0 0.0
    %2406 = vmatprep.subr.mxu0 0.0
    %2407 = vmatpush1.msra.mxu0 0.0
    %2408 = vmatprep.subr.mxu0 0.0
    %2409 = vmatpush1.msra.mxu0 0.0
    %2410 = vmatprep.subr.mxu0 0.0
    %2411 = vmatpush1.msra.mxu0 0.0
    %2412 = vmatprep.subr.mxu0 0.0
    %2413 = vmatpush1.msra.mxu0 0.0
    %2414 = vmatprep.subr.mxu0 0.0
    %2415 = vmatpush1.msra.mxu0 0.0
    %2416 = vmatprep.subr.mxu0 0.0
    %2417 = vmatpush1.msra.mxu0 0.0
    %2418 = vmatprep.subr.mxu0 0.0
    %2419 = vmatpush1.msra.mxu0 0.0
    %2420 = vmatprep.subr.mxu0 0.0
    %2421 = vmatpush1.msra.mxu0 0.0
    %2422 = vmatprep.subr.mxu0 0.0
    %2423 = vmatpush1.msra.mxu0 0.0
    %2424 = vmatprep.mubr.f32.mxu0 0.0
    %2425 = vmatmul.mubr.f32.gmra.mrb[0].mxu0 %v2358
    %v2426 = vpop.f32.mrb[0].mxu0
    %v2427 = vadd.f32 0.0, %v2426
    %v2428 = vpop.f32.mrb[0].mxu0
    %2429 = vdwg.mxu0
    %2430 = vrot.lane.b32.xlu0 %v192, 64
    %v2431 = vpop.permute.xlu0 %2430
    %v2434 = vsel %vm203, %v1589, 0
    %2436 = vmatprep.subr.mxu0 0.0
    %2437 = vmatpush1.msra.mxu0 %v2431
    %2438 = vmatprep.subr.mxu0 0.0
    %2439 = vmatpush1.msra.mxu0 0.0
    %2440 = vmatprep.subr.mxu0 0.0
    %2441 = vmatpush1.msra.mxu0 0.0
    %2442 = vmatprep.subr.mxu0 0.0
    %2443 = vmatpush1.msra.mxu0 0.0
    %2444 = vmatprep.subr.mxu0 0.0
    %2445 = vmatpush1.msra.mxu0 0.0
    %2446 = vmatprep.subr.mxu0 0.0
    %2447 = vmatpush1.msra.mxu0 0.0
    %2448 = vmatprep.subr.mxu0 0.0
    %2449 = vmatpush1.msra.mxu0 0.0
    %2450 = vmatprep.subr.mxu0 0.0
    %2451 = vmatpush1.msra.mxu0 0.0
    %2452 = vmatprep.subr.mxu0 0.0
    %2453 = vmatpush1.msra.mxu0 0.0
    %2454 = vmatprep.subr.mxu0 0.0
    %2455 = vmatpush1.msra.mxu0 0.0
    %2456 = vmatprep.subr.mxu0 0.0
    %2457 = vmatpush1.msra.mxu0 0.0
    %2458 = vmatprep.subr.mxu0 0.0
    %2459 = vmatpush1.msra.mxu0 0.0
    %2460 = vmatprep.subr.mxu0 0.0
    %2461 = vmatpush1.msra.mxu0 0.0
    %2462 = vmatprep.subr.mxu0 0.0
    %2463 = vmatpush1.msra.mxu0 0.0
    %2464 = vmatprep.subr.mxu0 0.0
    %2465 = vmatpush1.msra.mxu0 0.0
    %2466 = vmatprep.subr.mxu0 0.0
    %2467 = vmatpush1.msra.mxu0 0.0
    %2468 = vmatprep.subr.mxu0 0.0
    %2469 = vmatpush1.msra.mxu0 0.0
    %2470 = vmatprep.subr.mxu0 0.0
    %2471 = vmatpush1.msra.mxu0 0.0
    %2472 = vmatprep.subr.mxu0 0.0
    %2473 = vmatpush1.msra.mxu0 0.0
    %2474 = vmatprep.subr.mxu0 0.0
    %2475 = vmatpush1.msra.mxu0 0.0
    %2476 = vmatprep.subr.mxu0 0.0
    %2477 = vmatpush1.msra.mxu0 0.0
    %2478 = vmatprep.subr.mxu0 0.0
    %2479 = vmatpush1.msra.mxu0 0.0
    %2480 = vmatprep.subr.mxu0 0.0
    %2481 = vmatpush1.msra.mxu0 0.0
    %2482 = vmatprep.subr.mxu0 0.0
    %2483 = vmatpush1.msra.mxu0 0.0
    %2484 = vmatprep.subr.mxu0 0.0
    %2485 = vmatpush1.msra.mxu0 0.0
    %2486 = vmatprep.subr.mxu0 0.0
    %2487 = vmatpush1.msra.mxu0 0.0
    %2488 = vmatprep.subr.mxu0 0.0
    %2489 = vmatpush1.msra.mxu0 0.0
    %2490 = vmatprep.subr.mxu0 0.0
    %2491 = vmatpush1.msra.mxu0 0.0
    %2492 = vmatprep.subr.mxu0 0.0
    %2493 = vmatpush1.msra.mxu0 0.0
    %2494 = vmatprep.subr.mxu0 0.0
    %2495 = vmatpush1.msra.mxu0 0.0
    %2496 = vmatprep.subr.mxu0 0.0
    %2497 = vmatpush1.msra.mxu0 0.0
    %2498 = vmatprep.subr.mxu0 0.0
    %2499 = vmatpush1.msra.mxu0 0.0
    %2500 = vmatprep.mubr.f32.mxu0 0.0
    %2501 = vmatmul.mubr.f32.gmra.mrb[0].mxu0 %v2434
    %v2502 = vpop.f32.mrb[0].mxu0
    %v2503 = vadd.f32 0.0, %v2502
    %v2504 = vpop.f32.mrb[0].mxu0
    %2505 = vdwg.mxu0
    %2506 = vrot.lane.b32.xlu0 %v194, 64
    %v2507 = vpop.permute.xlu0 %2506
    %v2510 = vsel %vm203, %v1590, 0
    %2512 = vmatprep.subr.mxu0 0.0
    %2513 = vmatpush1.msra.mxu0 %v2507
    %2514 = vmatprep.subr.mxu0 0.0
    %2515 = vmatpush1.msra.mxu0 0.0
    %2516 = vmatprep.subr.mxu0 0.0
    %2517 = vmatpush1.msra.mxu0 0.0
    %2518 = vmatprep.subr.mxu0 0.0
    %2519 = vmatpush1.msra.mxu0 0.0
    %2520 = vmatprep.subr.mxu0 0.0
    %2521 = vmatpush1.msra.mxu0 0.0
    %2522 = vmatprep.subr.mxu0 0.0
    %2523 = vmatpush1.msra.mxu0 0.0
    %2524 = vmatprep.subr.mxu0 0.0
    %2525 = vmatpush1.msra.mxu0 0.0
    %2526 = vmatprep.subr.mxu0 0.0
    %2527 = vmatpush1.msra.mxu0 0.0
    %2528 = vmatprep.subr.mxu0 0.0
    %2529 = vmatpush1.msra.mxu0 0.0
    %2530 = vmatprep.subr.mxu0 0.0
    %2531 = vmatpush1.msra.mxu0 0.0
    %2532 = vmatprep.subr.mxu0 0.0
    %2533 = vmatpush1.msra.mxu0 0.0
    %2534 = vmatprep.subr.mxu0 0.0
    %2535 = vmatpush1.msra.mxu0 0.0
    %2536 = vmatprep.subr.mxu0 0.0
    %2537 = vmatpush1.msra.mxu0 0.0
    %2538 = vmatprep.subr.mxu0 0.0
    %2539 = vmatpush1.msra.mxu0 0.0
    %2540 = vmatprep.subr.mxu0 0.0
    %2541 = vmatpush1.msra.mxu0 0.0
    %2542 = vmatprep.subr.mxu0 0.0
    %2543 = vmatpush1.msra.mxu0 0.0
    %2544 = vmatprep.subr.mxu0 0.0
    %2545 = vmatpush1.msra.mxu0 0.0
    %2546 = vmatprep.subr.mxu0 0.0
    %2547 = vmatpush1.msra.mxu0 0.0
    %2548 = vmatprep.subr.mxu0 0.0
    %2549 = vmatpush1.msra.mxu0 0.0
    %2550 = vmatprep.subr.mxu0 0.0
    %2551 = vmatpush1.msra.mxu0 0.0
    %2552 = vmatprep.subr.mxu0 0.0
    %2553 = vmatpush1.msra.mxu0 0.0
    %2554 = vmatprep.subr.mxu0 0.0
    %2555 = vmatpush1.msra.mxu0 0.0
    %2556 = vmatprep.subr.mxu0 0.0
    %2557 = vmatpush1.msra.mxu0 0.0
    %2558 = vmatprep.subr.mxu0 0.0
    %2559 = vmatpush1.msra.mxu0 0.0
    %2560 = vmatprep.subr.mxu0 0.0
    %2561 = vmatpush1.msra.mxu0 0.0
    %2562 = vmatprep.subr.mxu0 0.0
    %2563 = vmatpush1.msra.mxu0 0.0
    %2564 = vmatprep.subr.mxu0 0.0
    %2565 = vmatpush1.msra.mxu0 0.0
    %2566 = vmatprep.subr.mxu0 0.0
    %2567 = vmatpush1.msra.mxu0 0.0
    %2568 = vmatprep.subr.mxu0 0.0
    %2569 = vmatpush1.msra.mxu0 0.0
    %2570 = vmatprep.subr.mxu0 0.0
    %2571 = vmatpush1.msra.mxu0 0.0
    %2572 = vmatprep.subr.mxu0 0.0
    %2573 = vmatpush1.msra.mxu0 0.0
    %2574 = vmatprep.subr.mxu0 0.0
    %2575 = vmatpush1.msra.mxu0 0.0
    %2576 = vmatprep.mubr.f32.mxu0 0.0
    %2577 = vmatmul.mubr.f32.gmra.mrb[0].mxu0 %v2510
    %v2578 = vpop.f32.mrb[0].mxu0
    %v2579 = vadd.f32 0.0, %v2578
    %v2580 = vpop.f32.mrb[0].mxu0
    %2581 = vdwg.mxu0
    %2582 = vrot.lane.b32.xlu0 %v196, 64
    %v2583 = vpop.permute.xlu0 %2582
    %v2586 = vsel %vm203, %v1591, 0
    %2588 = vmatprep.subr.mxu0 0.0
    %2589 = vmatpush1.msra.mxu0 %v2583
    %2590 = vmatprep.subr.mxu0 0.0
    %2591 = vmatpush1.msra.mxu0 0.0
    %2592 = vmatprep.subr.mxu0 0.0
    %2593 = vmatpush1.msra.mxu0 0.0
    %2594 = vmatprep.subr.mxu0 0.0
    %2595 = vmatpush1.msra.mxu0 0.0
    %2596 = vmatprep.subr.mxu0 0.0
    %2597 = vmatpush1.msra.mxu0 0.0
    %2598 = vmatprep.subr.mxu0 0.0
    %2599 = vmatpush1.msra.mxu0 0.0
    %2600 = vmatprep.subr.mxu0 0.0
    %2601 = vmatpush1.msra.mxu0 0.0
    %2602 = vmatprep.subr.mxu0 0.0
    %2603 = vmatpush1.msra.mxu0 0.0
    %2604 = vmatprep.subr.mxu0 0.0
    %2605 = vmatpush1.msra.mxu0 0.0
    %2606 = vmatprep.subr.mxu0 0.0
    %2607 = vmatpush1.msra.mxu0 0.0
    %2608 = vmatprep.subr.mxu0 0.0
    %2609 = vmatpush1.msra.mxu0 0.0
    %2610 = vmatprep.subr.mxu0 0.0
    %2611 = vmatpush1.msra.mxu0 0.0
    %2612 = vmatprep.subr.mxu0 0.0
    %2613 = vmatpush1.msra.mxu0 0.0
    %2614 = vmatprep.subr.mxu0 0.0
    %2615 = vmatpush1.msra.mxu0 0.0
    %2616 = vmatprep.subr.mxu0 0.0
    %2617 = vmatpush1.msra.mxu0 0.0
    %2618 = vmatprep.subr.mxu0 0.0
    %2619 = vmatpush1.msra.mxu0 0.0
    %2620 = vmatprep.subr.mxu0 0.0
    %2621 = vmatpush1.msra.mxu0 0.0
    %2622 = vmatprep.subr.mxu0 0.0
    %2623 = vmatpush1.msra.mxu0 0.0
    %2624 = vmatprep.subr.mxu0 0.0
    %2625 = vmatpush1.msra.mxu0 0.0
    %2626 = vmatprep.subr.mxu0 0.0
    %2627 = vmatpush1.msra.mxu0 0.0
    %2628 = vmatprep.subr.mxu0 0.0
    %2629 = vmatpush1.msra.mxu0 0.0
    %2630 = vmatprep.subr.mxu0 0.0
    %2631 = vmatpush1.msra.mxu0 0.0
    %2632 = vmatprep.subr.mxu0 0.0
    %2633 = vmatpush1.msra.mxu0 0.0
    %2634 = vmatprep.subr.mxu0 0.0
    %2635 = vmatpush1.msra.mxu0 0.0
    %2636 = vmatprep.subr.mxu0 0.0
    %2637 = vmatpush1.msra.mxu0 0.0
    %2638 = vmatprep.subr.mxu0 0.0
    %2639 = vmatpush1.msra.mxu0 0.0
    %2640 = vmatprep.subr.mxu0 0.0
    %2641 = vmatpush1.msra.mxu0 0.0
    %2642 = vmatprep.subr.mxu0 0.0
    %2643 = vmatpush1.msra.mxu0 0.0
    %2644 = vmatprep.subr.mxu0 0.0
    %2645 = vmatpush1.msra.mxu0 0.0
    %2646 = vmatprep.subr.mxu0 0.0
    %2647 = vmatpush1.msra.mxu0 0.0
    %2648 = vmatprep.subr.mxu0 0.0
    %2649 = vmatpush1.msra.mxu0 0.0
    %2650 = vmatprep.subr.mxu0 0.0
    %2651 = vmatpush1.msra.mxu0 0.0
    %2652 = vmatprep.mubr.f32.mxu0 0.0
    %2653 = vmatmul.mubr.f32.gmra.mrb[0].mxu0 %v2586
    %v2654 = vpop.f32.mrb[0].mxu0
    %v2655 = vadd.f32 0.0, %v2654
    %v2656 = vpop.f32.mrb[0].mxu0
    %2657 = vdwg.mxu0
    %2658 = vrot.lane.b32.xlu0 %v198, 64
    %v2659 = vpop.permute.xlu0 %2658
    %v2662 = vsel %vm203, %v1592, 0
    %2664 = vmatprep.subr.mxu0 0.0
    %2665 = vmatpush1.msra.mxu0 %v2659
    %2666 = vmatprep.subr.mxu0 0.0
    %2667 = vmatpush1.msra.mxu0 0.0
    %2668 = vmatprep.subr.mxu0 0.0
    %2669 = vmatpush1.msra.mxu0 0.0
    %2670 = vmatprep.subr.mxu0 0.0
    %2671 = vmatpush1.msra.mxu0 0.0
    %2672 = vmatprep.subr.mxu0 0.0
    %2673 = vmatpush1.msra.mxu0 0.0
    %2674 = vmatprep.subr.mxu0 0.0
    %2675 = vmatpush1.msra.mxu0 0.0
    %2676 = vmatprep.subr.mxu0 0.0
    %2677 = vmatpush1.msra.mxu0 0.0
    %2678 = vmatprep.subr.mxu0 0.0
    %2679 = vmatpush1.msra.mxu0 0.0
    %2680 = vmatprep.subr.mxu0 0.0
    %2681 = vmatpush1.msra.mxu0 0.0
    %2682 = vmatprep.subr.mxu0 0.0
    %2683 = vmatpush1.msra.mxu0 0.0
    %2684 = vmatprep.subr.mxu0 0.0
    %2685 = vmatpush1.msra.mxu0 0.0
    %2686 = vmatprep.subr.mxu0 0.0
    %2687 = vmatpush1.msra.mxu0 0.0
    %2688 = vmatprep.subr.mxu0 0.0
    %2689 = vmatpush1.msra.mxu0 0.0
    %2690 = vmatprep.subr.mxu0 0.0
    %2691 = vmatpush1.msra.mxu0 0.0
    %2692 = vmatprep.subr.mxu0 0.0
    %2693 = vmatpush1.msra.mxu0 0.0
    %2694 = vmatprep.subr.mxu0 0.0
    %2695 = vmatpush1.msra.mxu0 0.0
    %2696 = vmatprep.subr.mxu0 0.0
    %2697 = vmatpush1.msra.mxu0 0.0
    %2698 = vmatprep.subr.mxu0 0.0
    %2699 = vmatpush1.msra.mxu0 0.0
    %2700 = vmatprep.subr.mxu0 0.0
    %2701 = vmatpush1.msra.mxu0 0.0
    %2702 = vmatprep.subr.mxu0 0.0
    %2703 = vmatpush1.msra.mxu0 0.0
    %2704 = vmatprep.subr.mxu0 0.0
    %2705 = vmatpush1.msra.mxu0 0.0
    %2706 = vmatprep.subr.mxu0 0.0
    %2707 = vmatpush1.msra.mxu0 0.0
    %2708 = vmatprep.subr.mxu0 0.0
    %2709 = vmatpush1.msra.mxu0 0.0
    %2710 = vmatprep.subr.mxu0 0.0
    %2711 = vmatpush1.msra.mxu0 0.0
    %2712 = vmatprep.subr.mxu0 0.0
    %2713 = vmatpush1.msra.mxu0 0.0
    %2714 = vmatprep.subr.mxu0 0.0
    %2715 = vmatpush1.msra.mxu0 0.0
    %2716 = vmatprep.subr.mxu0 0.0
    %2717 = vmatpush1.msra.mxu0 0.0
    %2718 = vmatprep.subr.mxu0 0.0
    %2719 = vmatpush1.msra.mxu0 0.0
    %2720 = vmatprep.subr.mxu0 0.0
    %2721 = vmatpush1.msra.mxu0 0.0
    %2722 = vmatprep.subr.mxu0 0.0
    %2723 = vmatpush1.msra.mxu0 0.0
    %2724 = vmatprep.subr.mxu0 0.0
    %2725 = vmatpush1.msra.mxu0 0.0
    %2726 = vmatprep.subr.mxu0 0.0
    %2727 = vmatpush1.msra.mxu0 0.0
    %2728 = vmatprep.mubr.f32.mxu0 0.0
    %2729 = vmatmul.mubr.f32.gmra.mrb[0].mxu0 %v2662
    %v2730 = vpop.f32.mrb[0].mxu0
    %v2731 = vadd.f32 0.0, %v2730
    %v2732 = vpop.f32.mrb[0].mxu0
    %2733 = vdwg.mxu0
    %2734 = vrot.lane.b32.xlu0 %v200, 64
    %v2735 = vpop.permute.xlu0 %2734
    %v2738 = vsel %vm203, %v1593, 0
    %2740 = vmatprep.subr.mxu0 0.0
    %2741 = vmatpush1.msra.mxu0 %v2735
    %2742 = vmatprep.subr.mxu0 0.0
    %2743 = vmatpush1.msra.mxu0 0.0
    %2744 = vmatprep.subr.mxu0 0.0
    %2745 = vmatpush1.msra.mxu0 0.0
    %2746 = vmatprep.subr.mxu0 0.0
    %2747 = vmatpush1.msra.mxu0 0.0
    %2748 = vmatprep.subr.mxu0 0.0
    %2749 = vmatpush1.msra.mxu0 0.0
    %2750 = vmatprep.subr.mxu0 0.0
    %2751 = vmatpush1.msra.mxu0 0.0
    %2752 = vmatprep.subr.mxu0 0.0
    %2753 = vmatpush1.msra.mxu0 0.0
    %2754 = vmatprep.subr.mxu0 0.0
    %2755 = vmatpush1.msra.mxu0 0.0
    %2756 = vmatprep.subr.mxu0 0.0
    %2757 = vmatpush1.msra.mxu0 0.0
    %2758 = vmatprep.subr.mxu0 0.0
    %2759 = vmatpush1.msra.mxu0 0.0
    %2760 = vmatprep.subr.mxu0 0.0
    %2761 = vmatpush1.msra.mxu0 0.0
    %2762 = vmatprep.subr.mxu0 0.0
    %2763 = vmatpush1.msra.mxu0 0.0
    %2764 = vmatprep.subr.mxu0 0.0
    %2765 = vmatpush1.msra.mxu0 0.0
    %2766 = vmatprep.subr.mxu0 0.0
    %2767 = vmatpush1.msra.mxu0 0.0
    %2768 = vmatprep.subr.mxu0 0.0
    %2769 = vmatpush1.msra.mxu0 0.0
    %2770 = vmatprep.subr.mxu0 0.0
    %2771 = vmatpush1.msra.mxu0 0.0
    %2772 = vmatprep.subr.mxu0 0.0
    %2773 = vmatpush1.msra.mxu0 0.0
    %2774 = vmatprep.subr.mxu0 0.0
    %2775 = vmatpush1.msra.mxu0 0.0
    %2776 = vmatprep.subr.mxu0 0.0
    %2777 = vmatpush1.msra.mxu0 0.0
    %2778 = vmatprep.subr.mxu0 0.0
    %2779 = vmatpush1.msra.mxu0 0.0
    %2780 = vmatprep.subr.mxu0 0.0
    %2781 = vmatpush1.msra.mxu0 0.0
    %2782 = vmatprep.subr.mxu0 0.0
    %2783 = vmatpush1.msra.mxu0 0.0
    %2784 = vmatprep.subr.mxu0 0.0
    %2785 = vmatpush1.msra.mxu0 0.0
    %2786 = vmatprep.subr.mxu0 0.0
    %2787 = vmatpush1.msra.mxu0 0.0
    %2788 = vmatprep.subr.mxu0 0.0
    %2789 = vmatpush1.msra.mxu0 0.0
    %2790 = vmatprep.subr.mxu0 0.0
    %2791 = vmatpush1.msra.mxu0 0.0
    %2792 = vmatprep.subr.mxu0 0.0
    %2793 = vmatpush1.msra.mxu0 0.0
    %2794 = vmatprep.subr.mxu0 0.0
    %2795 = vmatpush1.msra.mxu0 0.0
    %2796 = vmatprep.subr.mxu0 0.0
    %2797 = vmatpush1.msra.mxu0 0.0
    %2798 = vmatprep.subr.mxu0 0.0
    %2799 = vmatpush1.msra.mxu0 0.0
    %2800 = vmatprep.subr.mxu0 0.0
    %2801 = vmatpush1.msra.mxu0 0.0
    %2802 = vmatprep.subr.mxu0 0.0
    %2803 = vmatpush1.msra.mxu0 0.0
    %2804 = vmatprep.mubr.f32.mxu0 0.0
    %2805 = vmatmul.mubr.f32.gmra.mrb[0].mxu0 %v2738
    %v2806 = vpop.f32.mrb[0].mxu0
    %v2807 = vadd.f32 0.0, %v2806
    %v2808 = vpop.f32.mrb[0].mxu0
    %2809 = vdwg.mxu0
    %2814 = vrot.lane.b32.xlu0 %v1971, 8
    %v2815 = vpop.permute.xlu0 %2814
    %2816 = vrot.lane.b32.xlu0 %v2047, 8
    %v2817 = vpop.permute.xlu0 %2816
    %2818 = vrot.lane.b32.xlu0 %v2123, 8
    %v2819 = vpop.permute.xlu0 %2818
    %2820 = vrot.lane.b32.xlu0 %v2199, 8
    %v2821 = vpop.permute.xlu0 %2820
    %2830 = vrot.lane.b32.xlu0 %v2275, 16
    %v2831 = vpop.permute.xlu0 %2830
    %2832 = vrot.lane.b32.xlu0 %v2351, 16
    %v2833 = vpop.permute.xlu0 %2832
    %2834 = vrot.lane.b32.xlu0 %v2427, 16
    %v2835 = vpop.permute.xlu0 %2834
    %2836 = vrot.lane.b32.xlu0 %v2503, 16
    %v2837 = vpop.permute.xlu0 %2836
    %2846 = vrot.lane.b32.xlu0 %v2579, 24
    %v2847 = vpop.permute.xlu0 %2846
    %2848 = vrot.lane.b32.xlu0 %v2655, 24
    %v2849 = vpop.permute.xlu0 %2848
    %2850 = vrot.lane.b32.xlu0 %v2731, 24
    %v2851 = vpop.permute.xlu0 %2850
    %2852 = vrot.lane.b32.xlu0 %v2807, 24
    %v2853 = vpop.permute.xlu0 %2852
    %v2858 = vsel %vm203, %v1667, %v2815
    %v2859 = vsel %vm203, %v1743, %v2817
    %v2860 = vsel %vm203, %v1819, %v2819
    %v2861 = vsel %vm203, %v1895, %v2821
    %vm2862 = vcmask 130048
    %v2863 = vsel %vm2862, %v2858, %v2831
    %v2864 = vsel %vm2862, %v2859, %v2833
    %v2865 = vsel %vm2862, %v2860, %v2835
    %v2866 = vsel %vm2862, %v2861, %v2837
    %vm2867 = vcmask 195584
    %v2868 = vsel %vm2867, %v2863, %v2847
    %v2869 = vsel %vm2867, %v2864, %v2849
    %v2870 = vsel %vm2867, %v2865, %v2851
    %v2871 = vsel %vm2867, %v2866, %v2853
    %v2872 = vld [vmem:[#allocation7] sm:$0xff]
    %v2873 = vld [vmem:[#allocation7 + $0x8] sm:$0xff]
    %v2874 = vld [vmem:[#allocation7 + $0x10] sm:$0xff]
    %v2875 = vld [vmem:[#allocation7 + $0x18] sm:$0xff]
    %v2876 = vlaneseq
    %v2877 = vshrl.u32 %v2876, 7
    %v2878 = vsub.s32 0, %v2877
    %v2879 = vrot.slane %v64, %v2878
    %v2881 = vsel %vm75, %v2868, 0
    %v2884 = vsel %vm75, %v2869, 0
    %v2887 = vsel %vm75, %v2870, 0
    %v2890 = vsel %vm75, %v2871, 0
    %2892 = vmatprep.subr.mxu0 0.0
    %2893 = vmatpush1.msra.mxu0 %v2872
    %2894 = vmatprep.subr.mxu0 0.0
    %2895 = vmatpush1.msra.mxu0 %v2873
    %2896 = vmatprep.subr.mxu0 0.0
    %2897 = vmatpush1.msra.mxu0 %v2874
    %2898 = vmatprep.subr.mxu0 0.0
    %2899 = vmatpush1.msra.mxu0 %v2875
    %2900 = vmatprep.subr.mxu0 0.0
    %2901 = vmatpush1.msra.mxu0 0.0
    %2902 = vmatprep.subr.mxu0 0.0
    %2903 = vmatpush1.msra.mxu0 0.0
    %2904 = vmatprep.subr.mxu0 0.0
    %2905 = vmatpush1.msra.mxu0 0.0
    %2906 = vmatprep.subr.mxu0 0.0
    %2907 = vmatpush1.msra.mxu0 0.0
    %2908 = vmatprep.subr.mxu0 0.0
    %2909 = vmatpush1.msra.mxu0 0.0
    %2910 = vmatprep.subr.mxu0 0.0
    %2911 = vmatpush1.msra.mxu0 0.0
    %2912 = vmatprep.subr.mxu0 0.0
    %2913 = vmatpush1.msra.mxu0 0.0
    %2914 = vmatprep.subr.mxu0 0.0
    %2915 = vmatpush1.msra.mxu0 0.0
    %2916 = vmatprep.subr.mxu0 0.0
    %2917 = vmatpush1.msra.mxu0 0.0
    %2918 = vmatprep.subr.mxu0 0.0
    %2919 = vmatpush1.msra.mxu0 0.0
    %2920 = vmatprep.subr.mxu0 0.0
    %2921 = vmatpush1.msra.mxu0 0.0
    %2922 = vmatprep.subr.mxu0 0.0
    %2923 = vmatpush1.msra.mxu0 0.0
    %2924 = vmatprep.subr.mxu0 0.0
    %2925 = vmatpush1.msra.mxu0 0.0
    %2926 = vmatprep.subr.mxu0 0.0
    %2927 = vmatpush1.msra.mxu0 0.0
    %2928 = vmatprep.subr.mxu0 0.0
    %2929 = vmatpush1.msra.mxu0 0.0
    %2930 = vmatprep.subr.mxu0 0.0
    %2931 = vmatpush1.msra.mxu0 0.0
    %2932 = vmatprep.subr.mxu0 0.0
    %2933 = vmatpush1.msra.mxu0 0.0
    %2934 = vmatprep.subr.mxu0 0.0
    %2935 = vmatpush1.msra.mxu0 0.0
    %2936 = vmatprep.subr.mxu0 0.0
    %2937 = vmatpush1.msra.mxu0 0.0
    %2938 = vmatprep.subr.mxu0 0.0
    %2939 = vmatpush1.msra.mxu0 0.0
    %2940 = vmatprep.subr.mxu0 0.0
    %2941 = vmatpush1.msra.mxu0 0.0
    %2942 = vmatprep.subr.mxu0 0.0
    %2943 = vmatpush1.msra.mxu0 0.0
    %2944 = vmatprep.subr.mxu0 0.0
    %2945 = vmatpush1.msra.mxu0 0.0
    %2946 = vmatprep.subr.mxu0 0.0
    %2947 = vmatpush1.msra.mxu0 0.0
    %2948 = vmatprep.subr.mxu0 0.0
    %2949 = vmatpush1.msra.mxu0 0.0
    %2950 = vmatprep.subr.mxu0 0.0
    %2951 = vmatpush1.msra.mxu0 0.0
    %2952 = vmatprep.subr.mxu0 0.0
    %2953 = vmatpush1.msra.mxu0 0.0
    %2954 = vmatprep.subr.mxu0 0.0
    %2955 = vmatpush1.msra.mxu0 0.0
    %2956 = vmatprep.mubr.f32.mxu0 0.0
    %2957 = vmatmul.mubr.f32.gmra.mrb[0].mxu0 %v2881
    %v2958 = vpop.f32.mrb[0].mxu0
    %v2959 = vadd.f32 %v2879, %v2958
    %v2960 = vpop.f32.mrb[0].mxu0
    %2961 = vmatprep.mubr.f32.mxu0 0.0
    %2962 = vmatmul.mubr.f32.gmra.mrb[0].mxu0 %v2884
    %v2963 = vpop.f32.mrb[0].mxu0
    %v2964 = vadd.f32 %v2879, %v2963
    %v2965 = vpop.f32.mrb[0].mxu0
    %2966 = vmatprep.mubr.f32.mxu0 0.0
    %2967 = vmatmul.mubr.f32.gmra.mrb[0].mxu0 %v2887
    %v2968 = vpop.f32.mrb[0].mxu0
    %v2969 = vadd.f32 %v2879, %v2968
    %v2970 = vpop.f32.mrb[0].mxu0
    %2971 = vmatprep.mubr.f32.mxu0 0.0
    %2972 = vmatmul.mubr.f32.gmra.mrb[0].mxu0 %v2890
    %v2973 = vpop.f32.mrb[0].mxu0
    %v2974 = vadd.f32 %v2879, %v2973
    %v2975 = vpop.f32.mrb[0].mxu0
    %2976 = vdwg.mxu0
    %v2977 = vadd.f32 %v2959, %v59
    %v2978 = vadd.f32 %v2964, %v60
    %v2979 = vadd.f32 %v2969, %v61
    %v2980 = vadd.f32 %v2974, %v62
    %v2981 = vsel %vm75, %v2977, 0.0
    %2982 = vadd.xlane.f32.xlu0 %v2981
    %v2983 = vpop.xlane.xlu0 %2982
    %v2984 = vsel %vm75, %v2978, 0.0
    %2985 = vadd.xlane.f32.xlu0 %v2984
    %v2986 = vpop.xlane.xlu0 %2985
    %v2987 = vsel %vm75, %v2979, 0.0
    %2988 = vadd.xlane.f32.xlu0 %v2987
    %v2989 = vpop.xlane.xlu0 %2988
    %v2990 = vsel %vm75, %v2980, 0.0
    %2991 = vadd.xlane.f32.xlu0 %v2990
    %v2992 = vpop.xlane.xlu0 %2991
    %v2993 = vrcp.pop 32.0
    %v2994 = vmul.f32 %v2983, %v2993
    %v2995 = vmul.f32 %v2986, %v2993
    %v2996 = vmul.f32 %v2989, %v2993
    %v2997 = vmul.f32 %v2992, %v2993
    %v2998 = vsub.f32 %v2977, %v2994
    %v2999 = vsub.f32 %v2978, %v2995
    %v3000 = vsub.f32 %v2979, %v2996
    %v3001 = vsub.f32 %v2980, %v2997
    %v3002 = vmul.f32 %v2998, %v2998
    %v3003 = vmul.f32 %v2999, %v2999
    %v3004 = vmul.f32 %v3000, %v3000
    %v3005 = vmul.f32 %v3001, %v3001
    %v3006 = vsel %vm75, %v3002, 0.0
    %3007 = vadd.xlane.f32.xlu0 %v3006
    %v3008 = vpop.xlane.xlu0 %3007
    %v3009 = vsel %vm75, %v3003, 0.0
    %3010 = vadd.xlane.f32.xlu0 %v3009
    %v3011 = vpop.xlane.xlu0 %3010
    %v3012 = vsel %vm75, %v3004, 0.0
    %3013 = vadd.xlane.f32.xlu0 %v3012
    %v3014 = vpop.xlane.xlu0 %3013
    %v3015 = vsel %vm75, %v3005, 0.0
    %3016 = vadd.xlane.f32.xlu0 %v3015
    %v3017 = vpop.xlane.xlu0 %3016
    %v3018 = vmul.f32 %v3008, %v2993
    %v3019 = vmul.f32 %v3011, %v2993
    %v3020 = vmul.f32 %v3014, %v2993
    %v3021 = vmul.f32 %v3017, %v2993
    %v3022 = vadd.f32 %v3018, 1e-05
    %v3023 = vadd.f32 %v3019, 1e-05
    %v3024 = vadd.f32 %v3020, 1e-05
    %v3025 = vadd.f32 %v3021, 1e-05
    %v3026 = vrsqrt.pop %v3022
    %v3027 = vrsqrt.pop %v3023
    %v3028 = vrsqrt.pop %v3024
    %v3029 = vrsqrt.pop %v3025
    %v3030 = vmul.f32 %v2998, %v3026
    %v3031 = vmul.f32 %v2999, %v3027
    %v3032 = vmul.f32 %v3000, %v3028
    %v3033 = vmul.f32 %v3001, %v3029
    %v3034 = vlaneseq
    %v3035 = vshrl.u32 %v3034, 7
    %v3036 = vsub.s32 0, %v3035
    %v3037 = vrot.slane %v65, %v3036
    %v3038 = vmul.f32 %v3030, %v3037
    %v3039 = vmul.f32 %v3031, %v3037
    %v3040 = vmul.f32 %v3032, %v3037
    %v3041 = vmul.f32 %v3033, %v3037
    %v3042 = vlaneseq
    %v3043 = vshrl.u32 %v3042, 7
    %v3044 = vsub.s32 0, %v3043
    %v3045 = vrot.slane %v66, %v3044
    %v3046 = vadd.f32 %v3038, %v3045
    %v3047 = vadd.f32 %v3039, %v3045
    %v3048 = vadd.f32 %v3040, %v3045
    %v3049 = vadd.f32 %v3041, %v3045
    %3050 = vst.msk [vmem:[#allocation8] sm:$0xff] %vm75, %v3046
    %3051 = vst.msk [vmem:[#allocation8 + $0x8] sm:$0xff] %vm75, %v3047
    %3052 = vst.msk [vmem:[#allocation8 + $0x10] sm:$0xff] %vm75, %v3048
    %3053 = vst.msk [vmem:[#allocation8 + $0x18] sm:$0xff] %vm75, %v3049
    // Predicated region
    $region30: #{tpu_custom_call.1} parent=1 // pred_check
      _
    $region31: #{tpu_custom_call.1} parent=1 // pred_check_branch
      %3055 = sbr.rel (0) target = $region33
    $region32: #{tpu_custom_call.1} parent=1 // pred_region
      %s3057 = ssub.s32 512, 512
      %3058 = vsyncadd [#allocation4], %s3057
      %s3059 = sshll.u32 [#allocation8], 4
      %s3060 = int_to_ptr.vmem [resolvable:$true] %s3059
      %3065 = dma.vmem_to_hbm [thread:$0]  %s3060, 512, %s4, [#allocation4], 128, 128, 8
    $region33: #{tpu_custom_call.1} parent=1 // pred_fallthru
      _
    // Predicated region
    $region34: #{tpu_custom_call.1} parent=1 // pred_check
      _
    $region35: #{tpu_custom_call.1} parent=1 // pred_check_branch
      %3067 = sbr.rel (0) target = $region37
    $region36: #{tpu_custom_call.1} parent=1 // pred_region
      %3068 = dma.done [#allocation4], 512
    $region37: #{tpu_custom_call.1} parent=1 // pred_fallthru
      _
    %3069 = vsyncpa [#allocation3], 1
    %3070 = vsyncpa [#allocation6], 1
    %3071 = vsyncpa [#allocation4], 1

</llo_original>
